<compile_context>
chip_gen: v6e
topology: v6e:2x2x1
jax: 0.10.0
libtpu: 0.0.40
codegen_flags: <defaults>
</compile_context>

<pallas_src>
import math

import numpy as np

import jax
import jax.numpy as jnp
from jax import lax
from jax.experimental import pallas as pl
from jax.experimental.pallas import tpu as pltpu


_TAPS = tuple((dy, dx) for dy in (-1, 0, 1) for dx in (-1, 0, 1))   # tap t = ky*3 + kx


# -----------------------------------------------------------------------------
# Fused Pallas kernel for the whole residual block
# -----------------------------------------------------------------------------
def _make_block_kernel(W, cin, planes):
    C1 = -(-planes // 2)            # init_channels (== new_channels, ratio=2)
    C2 = planes - C1                # rows of the cheap half surviving the [:planes] cut
    # Column offsets (per output-channel row) inside the packed weight slab:
    #   [ prim1 (9*cin) | dw1 (9) | prim2 (9*planes) | dw2 (9) ]
    OFF_P1 = 0
    OFF_D1 = OFF_P1 + 9 * cin
    OFF_P2 = OFF_D1 + 9
    OFF_D2 = OFF_P2 + 9 * planes

    def kernel(x_ref, m_ref, w_ref, v_ref, out_ref):
        L = x_ref.shape[-1]                      # images_per_block * H * W (lane axis)
        x = x_ref[...]                           # (cin, L): conv1 input + residual
        w = w_ref[...]                           # (C1, n_cols): scale-folded weights
        v = v_ref[...]                           # (planes, 8): biases + bn scale/bias

        def tap(slab, t):
            """slab shifted by tap t; zero padding implied by the precomputed mask."""
            dy, dx = _TAPS[t]
            if dy == 0 and dx == 0:
                return slab
            s = dy * W + dx                      # shifted[:, p] = slab[:, p + s]
            r = pltpu.roll(slab, shift=(-s) % L, axis=1)   # XLU rotate, no slices
            return r * m_ref[t:t + 1, :]         # (1, L) mask broadcasts over channels

        def dense_acc(slab, ci0, n_in, w_off, acc):
            # acc[co, p] += sum_{t, k} w[co, w_off + t*n_in + ci0 + k] * slab[k, p + s_t]
            # (VPU broadcast MACs; no im2col concat, no MXU, one rolled slab live.)
            for t in range(9):
                r = tap(slab, t)
                for k in range(slab.shape[0]):
                    c = w_off + t * n_in + ci0 + k
                    term = r[k:k + 1, :] * w[:, c:c + 1]          # (1,L)*(C1,1)->(C1,L)
                    acc = term if acc is None else acc + term
            return acc

        def dw_conv(slab, w_off):
            # depthwise: out[c, p] = sum_t w[c, w_off + t] * slab[c, p + s_t]
            acc = None
            for t in range(9):
                term = tap(slab, t) * w[:, w_off + t:w_off + t + 1]
                acc = term if acc is None else acc + term
            return acc

        # ---- GhostModule 1 (BN scales folded into w; +bias, ReLU) -------------------
        x1 = jnp.maximum(dense_acc(x, 0, cin, OFF_P1, None) + v[0:C1, 0:1], 0.0)
        x2 = jnp.maximum(dw_conv(x1, OFF_D1) + v[0:C1, 1:2], 0.0)

        # ---- outer bn1 + ReLU, applied per half (no channel concat) -----------------
        o1a = jnp.maximum(x1 * v[0:C1, 4:5] + v[0:C1, 5:6], 0.0)
        o1b = jnp.maximum(x2[0:C2, :] * v[C1:planes, 4:5] + v[C1:planes, 5:6], 0.0)

        # ---- GhostModule 2: primary conv consumes the two halves directly -----------
        acc = dense_acc(o1a, 0, planes, OFF_P2, None)
        acc = dense_acc(o1b, C1, planes, OFF_P2, acc)
        y1 = jnp.maximum(acc + v[0:C1, 2:3], 0.0)
        y2 = jnp.maximum(dw_conv(y1, OFF_D2) + v[0:C1, 3:4], 0.0)

        # ---- bn2 + identity shortcut + ReLU, stored per half (no concat) ------------
        out_ref[0:C1, :] = jnp.maximum(
            y1 * v[0:C1, 6:7] + v[0:C1, 7:8] + x[0:C1, :], 0.0)
        out_ref[C1:planes, :] = jnp.maximum(
            y2[0:C2, :] * v[C1:planes, 6:7] + v[C1:planes, 7:8] + x[C1:planes, :], 0.0)

    return kernel


# -----------------------------------------------------------------------------
# Host-side helpers
# -----------------------------------------------------------------------------
def _make_tap_masks(H, W, images_per_block):
    """(9, images_per_block*H*W) validity masks (periodic in H*W => also kill the
    cross-image wrap of the circular rolls)."""
    L = images_per_block * H * W
    lane = np.arange(L)
    col = lane % W
    row = (lane // W) % H
    masks = np.ones((9, L), np.float32)
    for t, (dy, dx) in enumerate(_TAPS):
        m = np.ones(L, bool)
        if dy == -1:
            m &= row >= 1
        if dy == 1:
            m &= row <= H - 2
        if dx == -1:
            m &= col >= 1
        if dx == 1:
            m &= col <= W - 2
        masks[t] = m.astype(np.float32)
    return jnp.asarray(masks)


def _tensorcores_per_device():
    # v5e / v6e: 1 TensorCore per chip -> whole batch in one grid step.
    # v7x: 2 TensorCores -> two "parallel" grid steps, half the batch each.
    try:
        kind = jax.devices()[0].device_kind.lower()
    except Exception:
        return 1
    return 2 if "v7" in kind else 1


# -----------------------------------------------------------------------------
# Wrapper
# -----------------------------------------------------------------------------
def ghost_res_block_forward(x_nchw, P, *, num_blocks=None):
    """ghost_res_block.forward with stride=1 and in_planes == planes (identity shortcut)."""
    N, Cin, H, W = x_nchw.shape
    planes = P["planes"]
    # TODO(synk): option-A strided / zero-padded shortcut for stride != 1 or
    #             in_planes != planes (this instantiation uses the identity shortcut,
    #             exactly as the PyTorch module does for these arguments).
    assert Cin == planes, "only the identity-shortcut instantiation is implemented"
    HW = H * W

    if num_blocks is None:
        num_blocks = _tensorcores_per_device()
    if N % num_blocks != 0:
        num_blocks = 1
    nb = N // num_blocks
    L = nb * HW

    # Lane-batched layout: each block sees (Cin, nb*HW); layout plumbing only.
    x = x_nchw.astype(jnp.float32)
    x_lb = x.reshape(num_blocks, nb, Cin, HW).transpose(0, 2, 1, 3).reshape(num_blocks, Cin, L)
    masks = _make_tap_masks(H, W, nb)

    out = pl.pallas_call(
        _make_block_kernel(W, Cin, planes),
        grid=(num_blocks,),
        in_specs=[
            pl.BlockSpec((None, Cin, L), lambda i: (i, 0, 0)),     # per-block images
            pl.BlockSpec((9, L), lambda i: (0, 0)),                # resident masks
            pl.BlockSpec(P["w_pack"].shape, lambda i: (0, 0)),     # packed weights
            pl.BlockSpec(P["v_pack"].shape, lambda i: (0, 0)),     # packed bias/BN
        ],
        out_specs=pl.BlockSpec((None, planes, L), lambda i: (i, 0, 0)),
        out_shape=jax.ShapeDtypeStruct((num_blocks, planes, L), jnp.float32),
        compiler_params=pltpu.CompilerParams(dimension_semantics=("parallel",)),
    )(x_lb, masks, P["w_pack"], P["v_pack"])

    out = out.reshape(num_blocks, planes, nb, HW).transpose(0, 2, 1, 3)
    return out.reshape(N, planes, H, W)


# -----------------------------------------------------------------------------
# Deterministic parameter construction (inference-mode BN folded to scale/bias;
# ghost-internal BN scales additionally folded into the conv weights)
# -----------------------------------------------------------------------------
def _fold_bn(key, c, eps=1e-5):
    k1, k2, k3, k4 = jax.random.split(key, 4)
    gamma = 1.0 + 0.1 * jax.random.normal(k1, (c,), jnp.float32)
    beta = 0.1 * jax.random.normal(k2, (c,), jnp.float32)
    mean = 0.1 * jax.random.normal(k3, (c,), jnp.float32)
    var = 1.0 + 0.1 * jax.random.uniform(k4, (c,), jnp.float32)
    scale = gamma / jnp.sqrt(var + eps)
    bias = beta - mean * scale
    return scale, bias


def make_ghost_params(key, inp, oup):
    C1 = int(math.ceil(oup / 2))            # init_channels; new_channels == C1 (ratio=2)
    ks = jax.random.split(key, 4)
    w_prim = 0.3 * jax.random.normal(ks[0], (3, 3, inp, C1), jnp.float32)   # HWIO
    w_dw = 0.3 * jax.random.normal(ks[1], (3, 3, C1), jnp.float32)          # (kh, kw, C1)
    ps, pb = _fold_bn(ks[2], C1)
    ds, db = _fold_bn(ks[3], C1)
    # Kernel-side columns, BN scale folded in (exact: scale precedes the ReLU):
    #   wp_cols[co, (kh*3+kw)*inp + ci] = ps[co] * w_prim[kh, kw, ci, co]
    #   wd_cols[c,  kh*3+kw]            = ds[c]  * w_dw[kh, kw, c]
    wp_cols = jnp.transpose(w_prim, (3, 0, 1, 2)).reshape(C1, 9 * inp) * ps[:, None]
    wd_cols = jnp.transpose(w_dw, (2, 0, 1)).reshape(C1, 9) * ds[:, None]
    return dict(w_prim=w_prim, w_dw=w_dw, prim_scale=ps, prim_bias=pb,
                dw_scale=ds, dw_bias=db, wp_cols=wp_cols, wd_cols=wd_cols)


def make_block_params(key, in_planes, planes):
    ks = jax.random.split(key, 4)
    g1 = make_ghost_params(ks[0], in_planes, planes)
    g2 = make_ghost_params(ks[1], planes, planes)
    bn1s, bn1b = _fold_bn(ks[2], planes)
    bn2s, bn2b = _fold_bn(ks[3], planes)

    # Packed weight slab (C1 rows): [ prim1 | dw1 | prim2 | dw2 ]
    w_pack = jnp.concatenate(
        [g1["wp_cols"], g1["wd_cols"], g2["wp_cols"], g2["wd_cols"]], axis=1)

    def _pad(v):  # pad C1-length bias vectors to `planes` rows (pad rows unused)
        return jnp.zeros((planes,), jnp.float32).at[:v.shape[0]].set(v)

    # Packed bias/BN slab (planes, 8): cols = pb1, db1, pb2, db2, bn1s, bn1b, bn2s, bn2b
    v_pack = jnp.stack(
        [_pad(g1["prim_bias"]), _pad(g1["dw_bias"]),
         _pad(g2["prim_bias"]), _pad(g2["dw_bias"]),
         bn1s, bn1b, bn2s, bn2b], axis=1)

    return dict(planes=planes, g1=g1, g2=g2,
                bn1_scale=bn1s, bn1_bias=bn1b, bn2_scale=bn2s, bn2_bias=bn2b,
                w_pack=w_pack, v_pack=v_pack)


# -----------------------------------------------------------------------------
# Pure-JAX reference (mirrors the PyTorch forward semantics)
# -----------------------------------------------------------------------------
def _ref_ghost(x_nhwc, gp, oup):
    C1 = gp["w_prim"].shape[-1]
    x1 = lax.conv_general_dilated(
        x_nhwc, gp["w_prim"], (1, 1), "SAME",
        dimension_numbers=("NHWC", "HWIO", "NHWC"), precision=lax.Precision.HIGHEST)
    x1 = jnp.maximum(x1 * gp["prim_scale"] + gp["prim_bias"], 0.0)
    wdw = gp["w_dw"][:, :, None, :]   # (3,3,1,C1), depthwise
    x2 = lax.conv_general_dilated(
        x1, wdw, (1, 1), "SAME",
        dimension_numbers=("NHWC", "HWIO", "NHWC"), feature_group_count=C1,
        precision=lax.Precision.HIGHEST)
    x2 = jnp.maximum(x2 * gp["dw_scale"] + gp["dw_bias"], 0.0)
    return jnp.concatenate([x1, x2], axis=-1)[..., :oup]


def ref_block(x_nchw, P):
    planes = P["planes"]
    x = jnp.transpose(x_nchw, (0, 2, 3, 1)).astype(jnp.float32)
    g1 = _ref_ghost(x, P["g1"], planes)
    o = jnp.maximum(g1 * P["bn1_scale"] + P["bn1_bias"], 0.0)
    g2 = _ref_ghost(o, P["g2"], planes)
    o2 = jnp.maximum(g2 * P["bn2_scale"] + P["bn2_bias"] + x, 0.0)
    return jnp.transpose(o2, (0, 3, 1, 2))


# -----------------------------------------------------------------------------
# Main
# -----------------------------------------------------------------------------
if __name__ == "__main__":
    key = jax.random.PRNGKey(0)
    kx, kp = jax.random.split(key)

    N, Cin, H, W = 2, 4, 16, 16
    planes = 4                       # stride=1, in_planes == planes -> identity shortcut

    x = jax.random.normal(kx, (N, Cin, H, W), dtype=jnp.float32)
    params = make_block_params(kp, Cin, planes)

    fwd = jax.jit(lambda a: ghost_res_block_forward(a, params))
    out = jax.block_until_ready(fwd(x))

    ref = ref_block(x, params)
    assert out.shape == (N, planes, H, W), out.shape
    err = float(jnp.max(jnp.abs(out - ref)))
    assert err < 2e-3, f"mismatch vs reference: max abs err = {err}"

    print("KERNEL_OK")
</pallas_src>

<mosaic_0001>
module attributes {stable_mosaic.version = 11 : i64} {
  func.func @kernel(%arg0: i32, %arg1: memref<1x4x512xf32, #tpu.memory_space<vmem>>, %arg2: memref<9x512xf32, #tpu.memory_space<vmem>>, %arg3: memref<2x90xf32, #tpu.memory_space<vmem>>, %arg4: memref<4x8xf32, #tpu.memory_space<vmem>>, %arg5: memref<1x4x512xf32, #tpu.memory_space<vmem>>) attributes {dimension_semantics = [#tpu.dimension_semantics<parallel>], iteration_bounds = array<i64: 1>, scalar_prefetch = 0 : i64, scratch_operands = 0 : i64, tpu.core_type = #tpu.core_type<tc>, window_params = [{transform_indices = @transform_0, window_bounds = array<i64: 1, 4, 512>}, {pipeline_mode = #tpu.pipeline_mode<synchronous>, transform_indices = @transform_1, window_bounds = array<i64: 9, 512>}, {pipeline_mode = #tpu.pipeline_mode<synchronous>, transform_indices = @transform_2, window_bounds = array<i64: 2, 90>}, {pipeline_mode = #tpu.pipeline_mode<synchronous>, transform_indices = @transform_3, window_bounds = array<i64: 4, 8>}, {transform_indices = @transform_4, window_bounds = array<i64: 1, 4, 512>}]} {
    %c0 = arith.constant 0 : index
    %c0_0 = arith.constant 0 : index
    %c0_1 = arith.constant 0 : index
    %0 = vector.load %arg1[%c0, %c0_0, %c0_1] : memref<1x4x512xf32, #tpu.memory_space<vmem>>, vector<1x4x512xf32>
    %1 = vector.shape_cast %0 : vector<1x4x512xf32> to vector<4x512xf32>
    %c0_2 = arith.constant 0 : index
    %c0_3 = arith.constant 0 : index
    %2 = vector.load %arg3[%c0_2, %c0_3] : memref<2x90xf32, #tpu.memory_space<vmem>>, vector<2x90xf32>
    %c0_4 = arith.constant 0 : index
    %c0_5 = arith.constant 0 : index
    %3 = vector.load %arg4[%c0_4, %c0_5] : memref<4x8xf32, #tpu.memory_space<vmem>>, vector<4x8xf32>
    %c17_i32 = arith.constant 17 : i32
    %4 = tpu.dynamic_rotate %1 by %c17_i32 dim 1 : vector<4x512xf32>, i32 -> vector<4x512xf32>
    %c0_6 = arith.constant 0 : index
    %c0_7 = arith.constant 0 : index
    %5 = vector.load %arg2[%c0_6, %c0_7] : memref<9x512xf32, #tpu.memory_space<vmem>>, vector<1x512xf32>
    %6 = vector.broadcast %5 : vector<1x512xf32> to vector<4x512xf32>
    %7 = arith.mulf %4, %6 : vector<4x512xf32>
    %8 = vector.extract_strided_slice %7 {offsets = [0, 0], sizes = [1, 512], strides = [1, 1]} : vector<4x512xf32> to vector<1x512xf32>
    %9 = vector.extract_strided_slice %2 {offsets = [0, 0], sizes = [2, 1], strides = [1, 1]} : vector<2x90xf32> to vector<2x1xf32>
    %10 = vector.broadcast %8 : vector<1x512xf32> to vector<2x512xf32>
    %11 = vector.broadcast %9 : vector<2x1xf32> to vector<2x512xf32>
    %12 = arith.mulf %10, %11 : vector<2x512xf32>
    %13 = vector.extract_strided_slice %7 {offsets = [1, 0], sizes = [1, 512], strides = [1, 1]} : vector<4x512xf32> to vector<1x512xf32>
    %14 = vector.extract_strided_slice %2 {offsets = [0, 1], sizes = [2, 1], strides = [1, 1]} : vector<2x90xf32> to vector<2x1xf32>
    %15 = vector.broadcast %13 : vector<1x512xf32> to vector<2x512xf32>
    %16 = vector.broadcast %14 : vector<2x1xf32> to vector<2x512xf32>
    %17 = arith.mulf %15, %16 : vector<2x512xf32>
    %18 = arith.addf %12, %17 : vector<2x512xf32>
    %19 = vector.extract_strided_slice %7 {offsets = [2, 0], sizes = [1, 512], strides = [1, 1]} : vector<4x512xf32> to vector<1x512xf32>
    %20 = vector.extract_strided_slice %2 {offsets = [0, 2], sizes = [2, 1], strides = [1, 1]} : vector<2x90xf32> to vector<2x1xf32>
    %21 = vector.broadcast %19 : vector<1x512xf32> to vector<2x512xf32>
    %22 = vector.broadcast %20 : vector<2x1xf32> to vector<2x512xf32>
    %23 = arith.mulf %21, %22 : vector<2x512xf32>
    %24 = arith.addf %18, %23 : vector<2x512xf32>
    %25 = vector.extract_strided_slice %7 {offsets = [3, 0], sizes = [1, 512], strides = [1, 1]} : vector<4x512xf32> to vector<1x512xf32>
    %26 = vector.extract_strided_slice %2 {offsets = [0, 3], sizes = [2, 1], strides = [1, 1]} : vector<2x90xf32> to vector<2x1xf32>
    %27 = vector.broadcast %25 : vector<1x512xf32> to vector<2x512xf32>
    %28 = vector.broadcast %26 : vector<2x1xf32> to vector<2x512xf32>
    %29 = arith.mulf %27, %28 : vector<2x512xf32>
    %30 = arith.addf %24, %29 : vector<2x512xf32>
    %c16_i32 = arith.constant 16 : i32
    %31 = tpu.dynamic_rotate %1 by %c16_i32 dim 1 : vector<4x512xf32>, i32 -> vector<4x512xf32>
    %c1 = arith.constant 1 : index
    %c0_8 = arith.constant 0 : index
    %32 = vector.load %arg2[%c1, %c0_8] : memref<9x512xf32, #tpu.memory_space<vmem>>, vector<1x512xf32>
    %33 = vector.broadcast %32 : vector<1x512xf32> to vector<4x512xf32>
    %34 = arith.mulf %31, %33 : vector<4x512xf32>
    %35 = vector.extract_strided_slice %34 {offsets = [0, 0], sizes = [1, 512], strides = [1, 1]} : vector<4x512xf32> to vector<1x512xf32>
    %36 = vector.extract_strided_slice %2 {offsets = [0, 4], sizes = [2, 1], strides = [1, 1]} : vector<2x90xf32> to vector<2x1xf32>
    %37 = vector.broadcast %35 : vector<1x512xf32> to vector<2x512xf32>
    %38 = vector.broadcast %36 : vector<2x1xf32> to vector<2x512xf32>
    %39 = arith.mulf %37, %38 : vector<2x512xf32>
    %40 = arith.addf %30, %39 : vector<2x512xf32>
    %41 = vector.extract_strided_slice %34 {offsets = [1, 0], sizes = [1, 512], strides = [1, 1]} : vector<4x512xf32> to vector<1x512xf32>
    %42 = vector.extract_strided_slice %2 {offsets = [0, 5], sizes = [2, 1], strides = [1, 1]} : vector<2x90xf32> to vector<2x1xf32>
    %43 = vector.broadcast %41 : vector<1x512xf32> to vector<2x512xf32>
    %44 = vector.broadcast %42 : vector<2x1xf32> to vector<2x512xf32>
    %45 = arith.mulf %43, %44 : vector<2x512xf32>
    %46 = arith.addf %40, %45 : vector<2x512xf32>
    %47 = vector.extract_strided_slice %34 {offsets = [2, 0], sizes = [1, 512], strides = [1, 1]} : vector<4x512xf32> to vector<1x512xf32>
    %48 = vector.extract_strided_slice %2 {offsets = [0, 6], sizes = [2, 1], strides = [1, 1]} : vector<2x90xf32> to vector<2x1xf32>
    %49 = vector.broadcast %47 : vector<1x512xf32> to vector<2x512xf32>
    %50 = vector.broadcast %48 : vector<2x1xf32> to vector<2x512xf32>
    %51 = arith.mulf %49, %50 : vector<2x512xf32>
    %52 = arith.addf %46, %51 : vector<2x512xf32>
    %53 = vector.extract_strided_slice %34 {offsets = [3, 0], sizes = [1, 512], strides = [1, 1]} : vector<4x512xf32> to vector<1x512xf32>
    %54 = vector.extract_strided_slice %2 {offsets = [0, 7], sizes = [2, 1], strides = [1, 1]} : vector<2x90xf32> to vector<2x1xf32>
    %55 = vector.broadcast %53 : vector<1x512xf32> to vector<2x512xf32>
    %56 = vector.broadcast %54 : vector<2x1xf32> to vector<2x512xf32>
    %57 = arith.mulf %55, %56 : vector<2x512xf32>
    %58 = arith.addf %52, %57 : vector<2x512xf32>
    %c15_i32 = arith.constant 15 : i32
    %59 = tpu.dynamic_rotate %1 by %c15_i32 dim 1 : vector<4x512xf32>, i32 -> vector<4x512xf32>
    %c2 = arith.constant 2 : index
    %c0_9 = arith.constant 0 : index
    %60 = vector.load %arg2[%c2, %c0_9] : memref<9x512xf32, #tpu.memory_space<vmem>>, vector<1x512xf32>
    %61 = vector.broadcast %60 : vector<1x512xf32> to vector<4x512xf32>
    %62 = arith.mulf %59, %61 : vector<4x512xf32>
    %63 = vector.extract_strided_slice %62 {offsets = [0, 0], sizes = [1, 512], strides = [1, 1]} : vector<4x512xf32> to vector<1x512xf32>
    %64 = vector.extract_strided_slice %2 {offsets = [0, 8], sizes = [2, 1], strides = [1, 1]} : vector<2x90xf32> to vector<2x1xf32>
    %65 = vector.broadcast %63 : vector<1x512xf32> to vector<2x512xf32>
    %66 = vector.broadcast %64 : vector<2x1xf32> to vector<2x512xf32>
    %67 = arith.mulf %65, %66 : vector<2x512xf32>
    %68 = arith.addf %58, %67 : vector<2x512xf32>
    %69 = vector.extract_strided_slice %62 {offsets = [1, 0], sizes = [1, 512], strides = [1, 1]} : vector<4x512xf32> to vector<1x512xf32>
    %70 = vector.extract_strided_slice %2 {offsets = [0, 9], sizes = [2, 1], strides = [1, 1]} : vector<2x90xf32> to vector<2x1xf32>
    %71 = vector.broadcast %69 : vector<1x512xf32> to vector<2x512xf32>
    %72 = vector.broadcast %70 : vector<2x1xf32> to vector<2x512xf32>
    %73 = arith.mulf %71, %72 : vector<2x512xf32>
    %74 = arith.addf %68, %73 : vector<2x512xf32>
    %75 = vector.extract_strided_slice %62 {offsets = [2, 0], sizes = [1, 512], strides = [1, 1]} : vector<4x512xf32> to vector<1x512xf32>
    %76 = vector.extract_strided_slice %2 {offsets = [0, 10], sizes = [2, 1], strides = [1, 1]} : vector<2x90xf32> to vector<2x1xf32>
    %77 = vector.broadcast %75 : vector<1x512xf32> to vector<2x512xf32>
    %78 = vector.broadcast %76 : vector<2x1xf32> to vector<2x512xf32>
    %79 = arith.mulf %77, %78 : vector<2x512xf32>
    %80 = arith.addf %74, %79 : vector<2x512xf32>
    %81 = vector.extract_strided_slice %62 {offsets = [3, 0], sizes = [1, 512], strides = [1, 1]} : vector<4x512xf32> to vector<1x512xf32>
    %82 = vector.extract_strided_slice %2 {offsets = [0, 11], sizes = [2, 1], strides = [1, 1]} : vector<2x90xf32> to vector<2x1xf32>
    %83 = vector.broadcast %81 : vector<1x512xf32> to vector<2x512xf32>
    %84 = vector.broadcast %82 : vector<2x1xf32> to vector<2x512xf32>
    %85 = arith.mulf %83, %84 : vector<2x512xf32>
    %86 = arith.addf %80, %85 : vector<2x512xf32>
    %c1_i32 = arith.constant 1 : i32
    %87 = tpu.dynamic_rotate %1 by %c1_i32 dim 1 : vector<4x512xf32>, i32 -> vector<4x512xf32>
    %c3 = arith.constant 3 : index
    %c0_10 = arith.constant 0 : index
    %88 = vector.load %arg2[%c3, %c0_10] : memref<9x512xf32, #tpu.memory_space<vmem>>, vector<1x512xf32>
    %89 = vector.broadcast %88 : vector<1x512xf32> to vector<4x512xf32>
    %90 = arith.mulf %87, %89 : vector<4x512xf32>
    %91 = vector.extract_strided_slice %90 {offsets = [0, 0], sizes = [1, 512], strides = [1, 1]} : vector<4x512xf32> to vector<1x512xf32>
    %92 = vector.extract_strided_slice %2 {offsets = [0, 12], sizes = [2, 1], strides = [1, 1]} : vector<2x90xf32> to vector<2x1xf32>
    %93 = vector.broadcast %91 : vector<1x512xf32> to vector<2x512xf32>
    %94 = vector.broadcast %92 : vector<2x1xf32> to vector<2x512xf32>
    %95 = arith.mulf %93, %94 : vector<2x512xf32>
    %96 = arith.addf %86, %95 : vector<2x512xf32>
    %97 = vector.extract_strided_slice %90 {offsets = [1, 0], sizes = [1, 512], strides = [1, 1]} : vector<4x512xf32> to vector<1x512xf32>
    %98 = vector.extract_strided_slice %2 {offsets = [0, 13], sizes = [2, 1], strides = [1, 1]} : vector<2x90xf32> to vector<2x1xf32>
    %99 = vector.broadcast %97 : vector<1x512xf32> to vector<2x512xf32>
    %100 = vector.broadcast %98 : vector<2x1xf32> to vector<2x512xf32>
    %101 = arith.mulf %99, %100 : vector<2x512xf32>
    %102 = arith.addf %96, %101 : vector<2x512xf32>
    %103 = vector.extract_strided_slice %90 {offsets = [2, 0], sizes = [1, 512], strides = [1, 1]} : vector<4x512xf32> to vector<1x512xf32>
    %104 = vector.extract_strided_slice %2 {offsets = [0, 14], sizes = [2, 1], strides = [1, 1]} : vector<2x90xf32> to vector<2x1xf32>
    %105 = vector.broadcast %103 : vector<1x512xf32> to vector<2x512xf32>
    %106 = vector.broadcast %104 : vector<2x1xf32> to vector<2x512xf32>
    %107 = arith.mulf %105, %106 : vector<2x512xf32>
    %108 = arith.addf %102, %107 : vector<2x512xf32>
    %109 = vector.extract_strided_slice %90 {offsets = [3, 0], sizes = [1, 512], strides = [1, 1]} : vector<4x512xf32> to vector<1x512xf32>
    %110 = vector.extract_strided_slice %2 {offsets = [0, 15], sizes = [2, 1], strides = [1, 1]} : vector<2x90xf32> to vector<2x1xf32>
    %111 = vector.broadcast %109 : vector<1x512xf32> to vector<2x512xf32>
    %112 = vector.broadcast %110 : vector<2x1xf32> to vector<2x512xf32>
    %113 = arith.mulf %111, %112 : vector<2x512xf32>
    %114 = arith.addf %108, %113 : vector<2x512xf32>
    %115 = vector.extract_strided_slice %1 {offsets = [0, 0], sizes = [1, 512], strides = [1, 1]} : vector<4x512xf32> to vector<1x512xf32>
    %116 = vector.extract_strided_slice %2 {offsets = [0, 16], sizes = [2, 1], strides = [1, 1]} : vector<2x90xf32> to vector<2x1xf32>
    %117 = vector.broadcast %115 : vector<1x512xf32> to vector<2x512xf32>
    %118 = vector.broadcast %116 : vector<2x1xf32> to vector<2x512xf32>
    %119 = arith.mulf %117, %118 : vector<2x512xf32>
    %120 = arith.addf %114, %119 : vector<2x512xf32>
    %121 = vector.extract_strided_slice %1 {offsets = [1, 0], sizes = [1, 512], strides = [1, 1]} : vector<4x512xf32> to vector<1x512xf32>
    %122 = vector.extract_strided_slice %2 {offsets = [0, 17], sizes = [2, 1], strides = [1, 1]} : vector<2x90xf32> to vector<2x1xf32>
    %123 = vector.broadcast %121 : vector<1x512xf32> to vector<2x512xf32>
    %124 = vector.broadcast %122 : vector<2x1xf32> to vector<2x512xf32>
    %125 = arith.mulf %123, %124 : vector<2x512xf32>
    %126 = arith.addf %120, %125 : vector<2x512xf32>
    %127 = vector.extract_strided_slice %1 {offsets = [2, 0], sizes = [1, 512], strides = [1, 1]} : vector<4x512xf32> to vector<1x512xf32>
    %128 = vector.extract_strided_slice %2 {offsets = [0, 18], sizes = [2, 1], strides = [1, 1]} : vector<2x90xf32> to vector<2x1xf32>
    %129 = vector.broadcast %127 : vector<1x512xf32> to vector<2x512xf32>
    %130 = vector.broadcast %128 : vector<2x1xf32> to vector<2x512xf32>
    %131 = arith.mulf %129, %130 : vector<2x512xf32>
    %132 = arith.addf %126, %131 : vector<2x512xf32>
    %133 = vector.extract_strided_slice %1 {offsets = [3, 0], sizes = [1, 512], strides = [1, 1]} : vector<4x512xf32> to vector<1x512xf32>
    %134 = vector.extract_strided_slice %2 {offsets = [0, 19], sizes = [2, 1], strides = [1, 1]} : vector<2x90xf32> to vector<2x1xf32>
    %135 = vector.broadcast %133 : vector<1x512xf32> to vector<2x512xf32>
    %136 = vector.broadcast %134 : vector<2x1xf32> to vector<2x512xf32>
    %137 = arith.mulf %135, %136 : vector<2x512xf32>
    %138 = arith.addf %132, %137 : vector<2x512xf32>
    %c511_i32 = arith.constant 511 : i32
    %139 = tpu.dynamic_rotate %1 by %c511_i32 dim 1 : vector<4x512xf32>, i32 -> vector<4x512xf32>
    %c5 = arith.constant 5 : index
    %c0_11 = arith.constant 0 : index
    %140 = vector.load %arg2[%c5, %c0_11] : memref<9x512xf32, #tpu.memory_space<vmem>>, vector<1x512xf32>
    %141 = vector.broadcast %140 : vector<1x512xf32> to vector<4x512xf32>
    %142 = arith.mulf %139, %141 : vector<4x512xf32>
    %143 = vector.extract_strided_slice %142 {offsets = [0, 0], sizes = [1, 512], strides = [1, 1]} : vector<4x512xf32> to vector<1x512xf32>
    %144 = vector.extract_strided_slice %2 {offsets = [0, 20], sizes = [2, 1], strides = [1, 1]} : vector<2x90xf32> to vector<2x1xf32>
    %145 = vector.broadcast %143 : vector<1x512xf32> to vector<2x512xf32>
    %146 = vector.broadcast %144 : vector<2x1xf32> to vector<2x512xf32>
    %147 = arith.mulf %145, %146 : vector<2x512xf32>
    %148 = arith.addf %138, %147 : vector<2x512xf32>
    %149 = vector.extract_strided_slice %142 {offsets = [1, 0], sizes = [1, 512], strides = [1, 1]} : vector<4x512xf32> to vector<1x512xf32>
    %150 = vector.extract_strided_slice %2 {offsets = [0, 21], sizes = [2, 1], strides = [1, 1]} : vector<2x90xf32> to vector<2x1xf32>
    %151 = vector.broadcast %149 : vector<1x512xf32> to vector<2x512xf32>
    %152 = vector.broadcast %150 : vector<2x1xf32> to vector<2x512xf32>
    %153 = arith.mulf %151, %152 : vector<2x512xf32>
    %154 = arith.addf %148, %153 : vector<2x512xf32>
    %155 = vector.extract_strided_slice %142 {offsets = [2, 0], sizes = [1, 512], strides = [1, 1]} : vector<4x512xf32> to vector<1x512xf32>
    %156 = vector.extract_strided_slice %2 {offsets = [0, 22], sizes = [2, 1], strides = [1, 1]} : vector<2x90xf32> to vector<2x1xf32>
    %157 = vector.broadcast %155 : vector<1x512xf32> to vector<2x512xf32>
    %158 = vector.broadcast %156 : vector<2x1xf32> to vector<2x512xf32>
    %159 = arith.mulf %157, %158 : vector<2x512xf32>
    %160 = arith.addf %154, %159 : vector<2x512xf32>
    %161 = vector.extract_strided_slice %142 {offsets = [3, 0], sizes = [1, 512], strides = [1, 1]} : vector<4x512xf32> to vector<1x512xf32>
    %162 = vector.extract_strided_slice %2 {offsets = [0, 23], sizes = [2, 1], strides = [1, 1]} : vector<2x90xf32> to vector<2x1xf32>
    %163 = vector.broadcast %161 : vector<1x512xf32> to vector<2x512xf32>
    %164 = vector.broadcast %162 : vector<2x1xf32> to vector<2x512xf32>
    %165 = arith.mulf %163, %164 : vector<2x512xf32>
    %166 = arith.addf %160, %165 : vector<2x512xf32>
    %c497_i32 = arith.constant 497 : i32
    %167 = tpu.dynamic_rotate %1 by %c497_i32 dim 1 : vector<4x512xf32>, i32 -> vector<4x512xf32>
    %c6 = arith.constant 6 : index
    %c0_12 = arith.constant 0 : index
    %168 = vector.load %arg2[%c6, %c0_12] : memref<9x512xf32, #tpu.memory_space<vmem>>, vector<1x512xf32>
    %169 = vector.broadcast %168 : vector<1x512xf32> to vector<4x512xf32>
    %170 = arith.mulf %167, %169 : vector<4x512xf32>
    %171 = vector.extract_strided_slice %170 {offsets = [0, 0], sizes = [1, 512], strides = [1, 1]} : vector<4x512xf32> to vector<1x512xf32>
    %172 = vector.extract_strided_slice %2 {offsets = [0, 24], sizes = [2, 1], strides = [1, 1]} : vector<2x90xf32> to vector<2x1xf32>
    %173 = vector.broadcast %171 : vector<1x512xf32> to vector<2x512xf32>
    %174 = vector.broadcast %172 : vector<2x1xf32> to vector<2x512xf32>
    %175 = arith.mulf %173, %174 : vector<2x512xf32>
    %176 = arith.addf %166, %175 : vector<2x512xf32>
    %177 = vector.extract_strided_slice %170 {offsets = [1, 0], sizes = [1, 512], strides = [1, 1]} : vector<4x512xf32> to vector<1x512xf32>
    %178 = vector.extract_strided_slice %2 {offsets = [0, 25], sizes = [2, 1], strides = [1, 1]} : vector<2x90xf32> to vector<2x1xf32>
    %179 = vector.broadcast %177 : vector<1x512xf32> to vector<2x512xf32>
    %180 = vector.broadcast %178 : vector<2x1xf32> to vector<2x512xf32>
    %181 = arith.mulf %179, %180 : vector<2x512xf32>
    %182 = arith.addf %176, %181 : vector<2x512xf32>
    %183 = vector.extract_strided_slice %170 {offsets = [2, 0], sizes = [1, 512], strides = [1, 1]} : vector<4x512xf32> to vector<1x512xf32>
    %184 = vector.extract_strided_slice %2 {offsets = [0, 26], sizes = [2, 1], strides = [1, 1]} : vector<2x90xf32> to vector<2x1xf32>
    %185 = vector.broadcast %183 : vector<1x512xf32> to vector<2x512xf32>
    %186 = vector.broadcast %184 : vector<2x1xf32> to vector<2x512xf32>
    %187 = arith.mulf %185, %186 : vector<2x512xf32>
    %188 = arith.addf %182, %187 : vector<2x512xf32>
    %189 = vector.extract_strided_slice %170 {offsets = [3, 0], sizes = [1, 512], strides = [1, 1]} : vector<4x512xf32> to vector<1x512xf32>
    %190 = vector.extract_strided_slice %2 {offsets = [0, 27], sizes = [2, 1], strides = [1, 1]} : vector<2x90xf32> to vector<2x1xf32>
    %191 = vector.broadcast %189 : vector<1x512xf32> to vector<2x512xf32>
    %192 = vector.broadcast %190 : vector<2x1xf32> to vector<2x512xf32>
    %193 = arith.mulf %191, %192 : vector<2x512xf32>
    %194 = arith.addf %188, %193 : vector<2x512xf32>
    %c496_i32 = arith.constant 496 : i32
    %195 = tpu.dynamic_rotate %1 by %c496_i32 dim 1 : vector<4x512xf32>, i32 -> vector<4x512xf32>
    %c7 = arith.constant 7 : index
    %c0_13 = arith.constant 0 : index
    %196 = vector.load %arg2[%c7, %c0_13] : memref<9x512xf32, #tpu.memory_space<vmem>>, vector<1x512xf32>
    %197 = vector.broadcast %196 : vector<1x512xf32> to vector<4x512xf32>
    %198 = arith.mulf %195, %197 : vector<4x512xf32>
    %199 = vector.extract_strided_slice %198 {offsets = [0, 0], sizes = [1, 512], strides = [1, 1]} : vector<4x512xf32> to vector<1x512xf32>
    %200 = vector.extract_strided_slice %2 {offsets = [0, 28], sizes = [2, 1], strides = [1, 1]} : vector<2x90xf32> to vector<2x1xf32>
    %201 = vector.broadcast %199 : vector<1x512xf32> to vector<2x512xf32>
    %202 = vector.broadcast %200 : vector<2x1xf32> to vector<2x512xf32>
    %203 = arith.mulf %201, %202 : vector<2x512xf32>
    %204 = arith.addf %194, %203 : vector<2x512xf32>
    %205 = vector.extract_strided_slice %198 {offsets = [1, 0], sizes = [1, 512], strides = [1, 1]} : vector<4x512xf32> to vector<1x512xf32>
    %206 = vector.extract_strided_slice %2 {offsets = [0, 29], sizes = [2, 1], strides = [1, 1]} : vector<2x90xf32> to vector<2x1xf32>
    %207 = vector.broadcast %205 : vector<1x512xf32> to vector<2x512xf32>
    %208 = vector.broadcast %206 : vector<2x1xf32> to vector<2x512xf32>
    %209 = arith.mulf %207, %208 : vector<2x512xf32>
    %210 = arith.addf %204, %209 : vector<2x512xf32>
    %211 = vector.extract_strided_slice %198 {offsets = [2, 0], sizes = [1, 512], strides = [1, 1]} : vector<4x512xf32> to vector<1x512xf32>
    %212 = vector.extract_strided_slice %2 {offsets = [0, 30], sizes = [2, 1], strides = [1, 1]} : vector<2x90xf32> to vector<2x1xf32>
    %213 = vector.broadcast %211 : vector<1x512xf32> to vector<2x512xf32>
    %214 = vector.broadcast %212 : vector<2x1xf32> to vector<2x512xf32>
    %215 = arith.mulf %213, %214 : vector<2x512xf32>
    %216 = arith.addf %210, %215 : vector<2x512xf32>
    %217 = vector.extract_strided_slice %198 {offsets = [3, 0], sizes = [1, 512], strides = [1, 1]} : vector<4x512xf32> to vector<1x512xf32>
    %218 = vector.extract_strided_slice %2 {offsets = [0, 31], sizes = [2, 1], strides = [1, 1]} : vector<2x90xf32> to vector<2x1xf32>
    %219 = vector.broadcast %217 : vector<1x512xf32> to vector<2x512xf32>
    %220 = vector.broadcast %218 : vector<2x1xf32> to vector<2x512xf32>
    %221 = arith.mulf %219, %220 : vector<2x512xf32>
    %222 = arith.addf %216, %221 : vector<2x512xf32>
    %c495_i32 = arith.constant 495 : i32
    %223 = tpu.dynamic_rotate %1 by %c495_i32 dim 1 : vector<4x512xf32>, i32 -> vector<4x512xf32>
    %c8 = arith.constant 8 : index
    %c0_14 = arith.constant 0 : index
    %224 = vector.load %arg2[%c8, %c0_14] : memref<9x512xf32, #tpu.memory_space<vmem>>, vector<1x512xf32>
    %225 = vector.broadcast %224 : vector<1x512xf32> to vector<4x512xf32>
    %226 = arith.mulf %223, %225 : vector<4x512xf32>
    %227 = vector.extract_strided_slice %226 {offsets = [0, 0], sizes = [1, 512], strides = [1, 1]} : vector<4x512xf32> to vector<1x512xf32>
    %228 = vector.extract_strided_slice %2 {offsets = [0, 32], sizes = [2, 1], strides = [1, 1]} : vector<2x90xf32> to vector<2x1xf32>
    %229 = vector.broadcast %227 : vector<1x512xf32> to vector<2x512xf32>
    %230 = vector.broadcast %228 : vector<2x1xf32> to vector<2x512xf32>
    %231 = arith.mulf %229, %230 : vector<2x512xf32>
    %232 = arith.addf %222, %231 : vector<2x512xf32>
    %233 = vector.extract_strided_slice %226 {offsets = [1, 0], sizes = [1, 512], strides = [1, 1]} : vector<4x512xf32> to vector<1x512xf32>
    %234 = vector.extract_strided_slice %2 {offsets = [0, 33], sizes = [2, 1], strides = [1, 1]} : vector<2x90xf32> to vector<2x1xf32>
    %235 = vector.broadcast %233 : vector<1x512xf32> to vector<2x512xf32>
    %236 = vector.broadcast %234 : vector<2x1xf32> to vector<2x512xf32>
    %237 = arith.mulf %235, %236 : vector<2x512xf32>
    %238 = arith.addf %232, %237 : vector<2x512xf32>
    %239 = vector.extract_strided_slice %226 {offsets = [2, 0], sizes = [1, 512], strides = [1, 1]} : vector<4x512xf32> to vector<1x512xf32>
    %240 = vector.extract_strided_slice %2 {offsets = [0, 34], sizes = [2, 1], strides = [1, 1]} : vector<2x90xf32> to vector<2x1xf32>
    %241 = vector.broadcast %239 : vector<1x512xf32> to vector<2x512xf32>
    %242 = vector.broadcast %240 : vector<2x1xf32> to vector<2x512xf32>
    %243 = arith.mulf %241, %242 : vector<2x512xf32>
    %244 = arith.addf %238, %243 : vector<2x512xf32>
    %245 = vector.extract_strided_slice %226 {offsets = [3, 0], sizes = [1, 512], strides = [1, 1]} : vector<4x512xf32> to vector<1x512xf32>
    %246 = vector.extract_strided_slice %2 {offsets = [0, 35], sizes = [2, 1], strides = [1, 1]} : vector<2x90xf32> to vector<2x1xf32>
    %247 = vector.broadcast %245 : vector<1x512xf32> to vector<2x512xf32>
    %248 = vector.broadcast %246 : vector<2x1xf32> to vector<2x512xf32>
    %249 = arith.mulf %247, %248 : vector<2x512xf32>
    %250 = arith.addf %244, %249 : vector<2x512xf32>
    %251 = vector.extract_strided_slice %3 {offsets = [0, 0], sizes = [2, 1], strides = [1, 1]} : vector<4x8xf32> to vector<2x1xf32>
    %252 = vector.broadcast %251 : vector<2x1xf32> to vector<2x512xf32>
    %253 = arith.addf %250, %252 : vector<2x512xf32>
    %cst = arith.constant 0.000000e+00 : f32
    %254 = vector.broadcast %cst : f32 to vector<2x512xf32>
    %255 = arith.maximumf %253, %254 : vector<2x512xf32>
    %c17_i32_15 = arith.constant 17 : i32
    %256 = tpu.dynamic_rotate %255 by %c17_i32_15 dim 1 : vector<2x512xf32>, i32 -> vector<2x512xf32>
    %c0_16 = arith.constant 0 : index
    %c0_17 = arith.constant 0 : index
    %257 = vector.load %arg2[%c0_16, %c0_17] : memref<9x512xf32, #tpu.memory_space<vmem>>, vector<1x512xf32>
    %258 = vector.broadcast %257 : vector<1x512xf32> to vector<2x512xf32>
    %259 = arith.mulf %256, %258 : vector<2x512xf32>
    %260 = vector.extract_strided_slice %2 {offsets = [0, 36], sizes = [2, 1], strides = [1, 1]} : vector<2x90xf32> to vector<2x1xf32>
    %261 = vector.broadcast %260 : vector<2x1xf32> to vector<2x512xf32>
    %262 = arith.mulf %259, %261 : vector<2x512xf32>
    %c16_i32_18 = arith.constant 16 : i32
    %263 = tpu.dynamic_rotate %255 by %c16_i32_18 dim 1 : vector<2x512xf32>, i32 -> vector<2x512xf32>
    %c1_19 = arith.constant 1 : index
    %c0_20 = arith.constant 0 : index
    %264 = vector.load %arg2[%c1_19, %c0_20] : memref<9x512xf32, #tpu.memory_space<vmem>>, vector<1x512xf32>
    %265 = vector.broadcast %264 : vector<1x512xf32> to vector<2x512xf32>
    %266 = arith.mulf %263, %265 : vector<2x512xf32>
    %267 = vector.extract_strided_slice %2 {offsets = [0, 37], sizes = [2, 1], strides = [1, 1]} : vector<2x90xf32> to vector<2x1xf32>
    %268 = vector.broadcast %267 : vector<2x1xf32> to vector<2x512xf32>
    %269 = arith.mulf %266, %268 : vector<2x512xf32>
    %270 = arith.addf %262, %269 : vector<2x512xf32>
    %c15_i32_21 = arith.constant 15 : i32
    %271 = tpu.dynamic_rotate %255 by %c15_i32_21 dim 1 : vector<2x512xf32>, i32 -> vector<2x512xf32>
    %c2_22 = arith.constant 2 : index
    %c0_23 = arith.constant 0 : index
    %272 = vector.load %arg2[%c2_22, %c0_23] : memref<9x512xf32, #tpu.memory_space<vmem>>, vector<1x512xf32>
    %273 = vector.broadcast %272 : vector<1x512xf32> to vector<2x512xf32>
    %274 = arith.mulf %271, %273 : vector<2x512xf32>
    %275 = vector.extract_strided_slice %2 {offsets = [0, 38], sizes = [2, 1], strides = [1, 1]} : vector<2x90xf32> to vector<2x1xf32>
    %276 = vector.broadcast %275 : vector<2x1xf32> to vector<2x512xf32>
    %277 = arith.mulf %274, %276 : vector<2x512xf32>
    %278 = arith.addf %270, %277 : vector<2x512xf32>
    %c1_i32_24 = arith.constant 1 : i32
    %279 = tpu.dynamic_rotate %255 by %c1_i32_24 dim 1 : vector<2x512xf32>, i32 -> vector<2x512xf32>
    %c3_25 = arith.constant 3 : index
    %c0_26 = arith.constant 0 : index
    %280 = vector.load %arg2[%c3_25, %c0_26] : memref<9x512xf32, #tpu.memory_space<vmem>>, vector<1x512xf32>
    %281 = vector.broadcast %280 : vector<1x512xf32> to vector<2x512xf32>
    %282 = arith.mulf %279, %281 : vector<2x512xf32>
    %283 = vector.extract_strided_slice %2 {offsets = [0, 39], sizes = [2, 1], strides = [1, 1]} : vector<2x90xf32> to vector<2x1xf32>
    %284 = vector.broadcast %283 : vector<2x1xf32> to vector<2x512xf32>
    %285 = arith.mulf %282, %284 : vector<2x512xf32>
    %286 = arith.addf %278, %285 : vector<2x512xf32>
    %287 = vector.extract_strided_slice %2 {offsets = [0, 40], sizes = [2, 1], strides = [1, 1]} : vector<2x90xf32> to vector<2x1xf32>
    %288 = vector.broadcast %287 : vector<2x1xf32> to vector<2x512xf32>
    %289 = arith.mulf %255, %288 : vector<2x512xf32>
    %290 = arith.addf %286, %289 : vector<2x512xf32>
    %c511_i32_27 = arith.constant 511 : i32
    %291 = tpu.dynamic_rotate %255 by %c511_i32_27 dim 1 : vector<2x512xf32>, i32 -> vector<2x512xf32>
    %c5_28 = arith.constant 5 : index
    %c0_29 = arith.constant 0 : index
    %292 = vector.load %arg2[%c5_28, %c0_29] : memref<9x512xf32, #tpu.memory_space<vmem>>, vector<1x512xf32>
    %293 = vector.broadcast %292 : vector<1x512xf32> to vector<2x512xf32>
    %294 = arith.mulf %291, %293 : vector<2x512xf32>
    %295 = vector.extract_strided_slice %2 {offsets = [0, 41], sizes = [2, 1], strides = [1, 1]} : vector<2x90xf32> to vector<2x1xf32>
    %296 = vector.broadcast %295 : vector<2x1xf32> to vector<2x512xf32>
    %297 = arith.mulf %294, %296 : vector<2x512xf32>
    %298 = arith.addf %290, %297 : vector<2x512xf32>
    %c497_i32_30 = arith.constant 497 : i32
    %299 = tpu.dynamic_rotate %255 by %c497_i32_30 dim 1 : vector<2x512xf32>, i32 -> vector<2x512xf32>
    %c6_31 = arith.constant 6 : index
    %c0_32 = arith.constant 0 : index
    %300 = vector.load %arg2[%c6_31, %c0_32] : memref<9x512xf32, #tpu.memory_space<vmem>>, vector<1x512xf32>
    %301 = vector.broadcast %300 : vector<1x512xf32> to vector<2x512xf32>
    %302 = arith.mulf %299, %301 : vector<2x512xf32>
    %303 = vector.extract_strided_slice %2 {offsets = [0, 42], sizes = [2, 1], strides = [1, 1]} : vector<2x90xf32> to vector<2x1xf32>
    %304 = vector.broadcast %303 : vector<2x1xf32> to vector<2x512xf32>
    %305 = arith.mulf %302, %304 : vector<2x512xf32>
    %306 = arith.addf %298, %305 : vector<2x512xf32>
    %c496_i32_33 = arith.constant 496 : i32
    %307 = tpu.dynamic_rotate %255 by %c496_i32_33 dim 1 : vector<2x512xf32>, i32 -> vector<2x512xf32>
    %c7_34 = arith.constant 7 : index
    %c0_35 = arith.constant 0 : index
    %308 = vector.load %arg2[%c7_34, %c0_35] : memref<9x512xf32, #tpu.memory_space<vmem>>, vector<1x512xf32>
    %309 = vector.broadcast %308 : vector<1x512xf32> to vector<2x512xf32>
    %310 = arith.mulf %307, %309 : vector<2x512xf32>
    %311 = vector.extract_strided_slice %2 {offsets = [0, 43], sizes = [2, 1], strides = [1, 1]} : vector<2x90xf32> to vector<2x1xf32>
    %312 = vector.broadcast %311 : vector<2x1xf32> to vector<2x512xf32>
    %313 = arith.mulf %310, %312 : vector<2x512xf32>
    %314 = arith.addf %306, %313 : vector<2x512xf32>
    %c495_i32_36 = arith.constant 495 : i32
    %315 = tpu.dynamic_rotate %255 by %c495_i32_36 dim 1 : vector<2x512xf32>, i32 -> vector<2x512xf32>
    %c8_37 = arith.constant 8 : index
    %c0_38 = arith.constant 0 : index
    %316 = vector.load %arg2[%c8_37, %c0_38] : memref<9x512xf32, #tpu.memory_space<vmem>>, vector<1x512xf32>
    %317 = vector.broadcast %316 : vector<1x512xf32> to vector<2x512xf32>
    %318 = arith.mulf %315, %317 : vector<2x512xf32>
    %319 = vector.extract_strided_slice %2 {offsets = [0, 44], sizes = [2, 1], strides = [1, 1]} : vector<2x90xf32> to vector<2x1xf32>
    %320 = vector.broadcast %319 : vector<2x1xf32> to vector<2x512xf32>
    %321 = arith.mulf %318, %320 : vector<2x512xf32>
    %322 = arith.addf %314, %321 : vector<2x512xf32>
    %323 = vector.extract_strided_slice %3 {offsets = [0, 1], sizes = [2, 1], strides = [1, 1]} : vector<4x8xf32> to vector<2x1xf32>
    %324 = vector.broadcast %323 : vector<2x1xf32> to vector<2x512xf32>
    %325 = arith.addf %322, %324 : vector<2x512xf32>
    %cst_39 = arith.constant 0.000000e+00 : f32
    %326 = vector.broadcast %cst_39 : f32 to vector<2x512xf32>
    %327 = arith.maximumf %325, %326 : vector<2x512xf32>
    %328 = vector.extract_strided_slice %3 {offsets = [0, 4], sizes = [2, 1], strides = [1, 1]} : vector<4x8xf32> to vector<2x1xf32>
    %329 = vector.broadcast %328 : vector<2x1xf32> to vector<2x512xf32>
    %330 = arith.mulf %255, %329 : vector<2x512xf32>
    %331 = vector.extract_strided_slice %3 {offsets = [0, 5], sizes = [2, 1], strides = [1, 1]} : vector<4x8xf32> to vector<2x1xf32>
    %332 = vector.broadcast %331 : vector<2x1xf32> to vector<2x512xf32>
    %333 = arith.addf %330, %332 : vector<2x512xf32>
    %cst_40 = arith.constant 0.000000e+00 : f32
    %334 = vector.broadcast %cst_40 : f32 to vector<2x512xf32>
    %335 = arith.maximumf %333, %334 : vector<2x512xf32>
    %336 = vector.extract_strided_slice %3 {offsets = [2, 4], sizes = [2, 1], strides = [1, 1]} : vector<4x8xf32> to vector<2x1xf32>
    %337 = vector.broadcast %336 : vector<2x1xf32> to vector<2x512xf32>
    %338 = arith.mulf %327, %337 : vector<2x512xf32>
    %339 = vector.extract_strided_slice %3 {offsets = [2, 5], sizes = [2, 1], strides = [1, 1]} : vector<4x8xf32> to vector<2x1xf32>
    %340 = vector.broadcast %339 : vector<2x1xf32> to vector<2x512xf32>
    %341 = arith.addf %338, %340 : vector<2x512xf32>
    %cst_41 = arith.constant 0.000000e+00 : f32
    %342 = vector.broadcast %cst_41 : f32 to vector<2x512xf32>
    %343 = arith.maximumf %341, %342 : vector<2x512xf32>
    %c17_i32_42 = arith.constant 17 : i32
    %344 = tpu.dynamic_rotate %335 by %c17_i32_42 dim 1 : vector<2x512xf32>, i32 -> vector<2x512xf32>
    %c0_43 = arith.constant 0 : index
    %c0_44 = arith.constant 0 : index
    %345 = vector.load %arg2[%c0_43, %c0_44] : memref<9x512xf32, #tpu.memory_space<vmem>>, vector<1x512xf32>
    %346 = vector.broadcast %345 : vector<1x512xf32> to vector<2x512xf32>
    %347 = arith.mulf %344, %346 : vector<2x512xf32>
    %348 = vector.extract_strided_slice %347 {offsets = [0, 0], sizes = [1, 512], strides = [1, 1]} : vector<2x512xf32> to vector<1x512xf32>
    %349 = vector.extract_strided_slice %2 {offsets = [0, 45], sizes = [2, 1], strides = [1, 1]} : vector<2x90xf32> to vector<2x1xf32>
    %350 = vector.broadcast %348 : vector<1x512xf32> to vector<2x512xf32>
    %351 = vector.broadcast %349 : vector<2x1xf32> to vector<2x512xf32>
    %352 = arith.mulf %350, %351 : vector<2x512xf32>
    %353 = vector.extract_strided_slice %347 {offsets = [1, 0], sizes = [1, 512], strides = [1, 1]} : vector<2x512xf32> to vector<1x512xf32>
    %354 = vector.extract_strided_slice %2 {offsets = [0, 46], sizes = [2, 1], strides = [1, 1]} : vector<2x90xf32> to vector<2x1xf32>
    %355 = vector.broadcast %353 : vector<1x512xf32> to vector<2x512xf32>
    %356 = vector.broadcast %354 : vector<2x1xf32> to vector<2x512xf32>
    %357 = arith.mulf %355, %356 : vector<2x512xf32>
    %358 = arith.addf %352, %357 : vector<2x512xf32>
    %c16_i32_45 = arith.constant 16 : i32
    %359 = tpu.dynamic_rotate %335 by %c16_i32_45 dim 1 : vector<2x512xf32>, i32 -> vector<2x512xf32>
    %c1_46 = arith.constant 1 : index
    %c0_47 = arith.constant 0 : index
    %360 = vector.load %arg2[%c1_46, %c0_47] : memref<9x512xf32, #tpu.memory_space<vmem>>, vector<1x512xf32>
    %361 = vector.broadcast %360 : vector<1x512xf32> to vector<2x512xf32>
    %362 = arith.mulf %359, %361 : vector<2x512xf32>
    %363 = vector.extract_strided_slice %362 {offsets = [0, 0], sizes = [1, 512], strides = [1, 1]} : vector<2x512xf32> to vector<1x512xf32>
    %364 = vector.extract_strided_slice %2 {offsets = [0, 49], sizes = [2, 1], strides = [1, 1]} : vector<2x90xf32> to vector<2x1xf32>
    %365 = vector.broadcast %363 : vector<1x512xf32> to vector<2x512xf32>
    %366 = vector.broadcast %364 : vector<2x1xf32> to vector<2x512xf32>
    %367 = arith.mulf %365, %366 : vector<2x512xf32>
    %368 = arith.addf %358, %367 : vector<2x512xf32>
    %369 = vector.extract_strided_slice %362 {offsets = [1, 0], sizes = [1, 512], strides = [1, 1]} : vector<2x512xf32> to vector<1x512xf32>
    %370 = vector.extract_strided_slice %2 {offsets = [0, 50], sizes = [2, 1], strides = [1, 1]} : vector<2x90xf32> to vector<2x1xf32>
    %371 = vector.broadcast %369 : vector<1x512xf32> to vector<2x512xf32>
    %372 = vector.broadcast %370 : vector<2x1xf32> to vector<2x512xf32>
    %373 = arith.mulf %371, %372 : vector<2x512xf32>
    %374 = arith.addf %368, %373 : vector<2x512xf32>
    %c15_i32_48 = arith.constant 15 : i32
    %375 = tpu.dynamic_rotate %335 by %c15_i32_48 dim 1 : vector<2x512xf32>, i32 -> vector<2x512xf32>
    %c2_49 = arith.constant 2 : index
    %c0_50 = arith.constant 0 : index
    %376 = vector.load %arg2[%c2_49, %c0_50] : memref<9x512xf32, #tpu.memory_space<vmem>>, vector<1x512xf32>
    %377 = vector.broadcast %376 : vector<1x512xf32> to vector<2x512xf32>
    %378 = arith.mulf %375, %377 : vector<2x512xf32>
    %379 = vector.extract_strided_slice %378 {offsets = [0, 0], sizes = [1, 512], strides = [1, 1]} : vector<2x512xf32> to vector<1x512xf32>
    %380 = vector.extract_strided_slice %2 {offsets = [0, 53], sizes = [2, 1], strides = [1, 1]} : vector<2x90xf32> to vector<2x1xf32>
    %381 = vector.broadcast %379 : vector<1x512xf32> to vector<2x512xf32>
    %382 = vector.broadcast %380 : vector<2x1xf32> to vector<2x512xf32>
    %383 = arith.mulf %381, %382 : vector<2x512xf32>
    %384 = arith.addf %374, %383 : vector<2x512xf32>
    %385 = vector.extract_strided_slice %378 {offsets = [1, 0], sizes = [1, 512], strides = [1, 1]} : vector<2x512xf32> to vector<1x512xf32>
    %386 = vector.extract_strided_slice %2 {offsets = [0, 54], sizes = [2, 1], strides = [1, 1]} : vector<2x90xf32> to vector<2x1xf32>
    %387 = vector.broadcast %385 : vector<1x512xf32> to vector<2x512xf32>
    %388 = vector.broadcast %386 : vector<2x1xf32> to vector<2x512xf32>
    %389 = arith.mulf %387, %388 : vector<2x512xf32>
    %390 = arith.addf %384, %389 : vector<2x512xf32>
    %c1_i32_51 = arith.constant 1 : i32
    %391 = tpu.dynamic_rotate %335 by %c1_i32_51 dim 1 : vector<2x512xf32>, i32 -> vector<2x512xf32>
    %c3_52 = arith.constant 3 : index
    %c0_53 = arith.constant 0 : index
    %392 = vector.load %arg2[%c3_52, %c0_53] : memref<9x512xf32, #tpu.memory_space<vmem>>, vector<1x512xf32>
    %393 = vector.broadcast %392 : vector<1x512xf32> to vector<2x512xf32>
    %394 = arith.mulf %391, %393 : vector<2x512xf32>
    %395 = vector.extract_strided_slice %394 {offsets = [0, 0], sizes = [1, 512], strides = [1, 1]} : vector<2x512xf32> to vector<1x512xf32>
    %396 = vector.extract_strided_slice %2 {offsets = [0, 57], sizes = [2, 1], strides = [1, 1]} : vector<2x90xf32> to vector<2x1xf32>
    %397 = vector.broadcast %395 : vector<1x512xf32> to vector<2x512xf32>
    %398 = vector.broadcast %396 : vector<2x1xf32> to vector<2x512xf32>
    %399 = arith.mulf %397, %398 : vector<2x512xf32>
    %400 = arith.addf %390, %399 : vector<2x512xf32>
    %401 = vector.extract_strided_slice %394 {offsets = [1, 0], sizes = [1, 512], strides = [1, 1]} : vector<2x512xf32> to vector<1x512xf32>
    %402 = vector.extract_strided_slice %2 {offsets = [0, 58], sizes = [2, 1], strides = [1, 1]} : vector<2x90xf32> to vector<2x1xf32>
    %403 = vector.broadcast %401 : vector<1x512xf32> to vector<2x512xf32>
    %404 = vector.broadcast %402 : vector<2x1xf32> to vector<2x512xf32>
    %405 = arith.mulf %403, %404 : vector<2x512xf32>
    %406 = arith.addf %400, %405 : vector<2x512xf32>
    %407 = vector.extract_strided_slice %335 {offsets = [0, 0], sizes = [1, 512], strides = [1, 1]} : vector<2x512xf32> to vector<1x512xf32>
    %408 = vector.extract_strided_slice %2 {offsets = [0, 61], sizes = [2, 1], strides = [1, 1]} : vector<2x90xf32> to vector<2x1xf32>
    %409 = vector.broadcast %407 : vector<1x512xf32> to vector<2x512xf32>
    %410 = vector.broadcast %408 : vector<2x1xf32> to vector<2x512xf32>
    %411 = arith.mulf %409, %410 : vector<2x512xf32>
    %412 = arith.addf %406, %411 : vector<2x512xf32>
    %413 = vector.extract_strided_slice %335 {offsets = [1, 0], sizes = [1, 512], strides = [1, 1]} : vector<2x512xf32> to vector<1x512xf32>
    %414 = vector.extract_strided_slice %2 {offsets = [0, 62], sizes = [2, 1], strides = [1, 1]} : vector<2x90xf32> to vector<2x1xf32>
    %415 = vector.broadcast %413 : vector<1x512xf32> to vector<2x512xf32>
    %416 = vector.broadcast %414 : vector<2x1xf32> to vector<2x512xf32>
    %417 = arith.mulf %415, %416 : vector<2x512xf32>
    %418 = arith.addf %412, %417 : vector<2x512xf32>
    %c511_i32_54 = arith.constant 511 : i32
    %419 = tpu.dynamic_rotate %335 by %c511_i32_54 dim 1 : vector<2x512xf32>, i32 -> vector<2x512xf32>
    %c5_55 = arith.constant 5 : index
    %c0_56 = arith.constant 0 : index
    %420 = vector.load %arg2[%c5_55, %c0_56] : memref<9x512xf32, #tpu.memory_space<vmem>>, vector<1x512xf32>
    %421 = vector.broadcast %420 : vector<1x512xf32> to vector<2x512xf32>
    %422 = arith.mulf %419, %421 : vector<2x512xf32>
    %423 = vector.extract_strided_slice %422 {offsets = [0, 0], sizes = [1, 512], strides = [1, 1]} : vector<2x512xf32> to vector<1x512xf32>
    %424 = vector.extract_strided_slice %2 {offsets = [0, 65], sizes = [2, 1], strides = [1, 1]} : vector<2x90xf32> to vector<2x1xf32>
    %425 = vector.broadcast %423 : vector<1x512xf32> to vector<2x512xf32>
    %426 = vector.broadcast %424 : vector<2x1xf32> to vector<2x512xf32>
    %427 = arith.mulf %425, %426 : vector<2x512xf32>
    %428 = arith.addf %418, %427 : vector<2x512xf32>
    %429 = vector.extract_strided_slice %422 {offsets = [1, 0], sizes = [1, 512], strides = [1, 1]} : vector<2x512xf32> to vector<1x512xf32>
    %430 = vector.extract_strided_slice %2 {offsets = [0, 66], sizes = [2, 1], strides = [1, 1]} : vector<2x90xf32> to vector<2x1xf32>
    %431 = vector.broadcast %429 : vector<1x512xf32> to vector<2x512xf32>
    %432 = vector.broadcast %430 : vector<2x1xf32> to vector<2x512xf32>
    %433 = arith.mulf %431, %432 : vector<2x512xf32>
    %434 = arith.addf %428, %433 : vector<2x512xf32>
    %c497_i32_57 = arith.constant 497 : i32
    %435 = tpu.dynamic_rotate %335 by %c497_i32_57 dim 1 : vector<2x512xf32>, i32 -> vector<2x512xf32>
    %c6_58 = arith.constant 6 : index
    %c0_59 = arith.constant 0 : index
    %436 = vector.load %arg2[%c6_58, %c0_59] : memref<9x512xf32, #tpu.memory_space<vmem>>, vector<1x512xf32>
    %437 = vector.broadcast %436 : vector<1x512xf32> to vector<2x512xf32>
    %438 = arith.mulf %435, %437 : vector<2x512xf32>
    %439 = vector.extract_strided_slice %438 {offsets = [0, 0], sizes = [1, 512], strides = [1, 1]} : vector<2x512xf32> to vector<1x512xf32>
    %440 = vector.extract_strided_slice %2 {offsets = [0, 69], sizes = [2, 1], strides = [1, 1]} : vector<2x90xf32> to vector<2x1xf32>
    %441 = vector.broadcast %439 : vector<1x512xf32> to vector<2x512xf32>
    %442 = vector.broadcast %440 : vector<2x1xf32> to vector<2x512xf32>
    %443 = arith.mulf %441, %442 : vector<2x512xf32>
    %444 = arith.addf %434, %443 : vector<2x512xf32>
    %445 = vector.extract_strided_slice %438 {offsets = [1, 0], sizes = [1, 512], strides = [1, 1]} : vector<2x512xf32> to vector<1x512xf32>
    %446 = vector.extract_strided_slice %2 {offsets = [0, 70], sizes = [2, 1], strides = [1, 1]} : vector<2x90xf32> to vector<2x1xf32>
    %447 = vector.broadcast %445 : vector<1x512xf32> to vector<2x512xf32>
    %448 = vector.broadcast %446 : vector<2x1xf32> to vector<2x512xf32>
    %449 = arith.mulf %447, %448 : vector<2x512xf32>
    %450 = arith.addf %444, %449 : vector<2x512xf32>
    %c496_i32_60 = arith.constant 496 : i32
    %451 = tpu.dynamic_rotate %335 by %c496_i32_60 dim 1 : vector<2x512xf32>, i32 -> vector<2x512xf32>
    %c7_61 = arith.constant 7 : index
    %c0_62 = arith.constant 0 : index
    %452 = vector.load %arg2[%c7_61, %c0_62] : memref<9x512xf32, #tpu.memory_space<vmem>>, vector<1x512xf32>
    %453 = vector.broadcast %452 : vector<1x512xf32> to vector<2x512xf32>
    %454 = arith.mulf %451, %453 : vector<2x512xf32>
    %455 = vector.extract_strided_slice %454 {offsets = [0, 0], sizes = [1, 512], strides = [1, 1]} : vector<2x512xf32> to vector<1x512xf32>
    %456 = vector.extract_strided_slice %2 {offsets = [0, 73], sizes = [2, 1], strides = [1, 1]} : vector<2x90xf32> to vector<2x1xf32>
    %457 = vector.broadcast %455 : vector<1x512xf32> to vector<2x512xf32>
    %458 = vector.broadcast %456 : vector<2x1xf32> to vector<2x512xf32>
    %459 = arith.mulf %457, %458 : vector<2x512xf32>
    %460 = arith.addf %450, %459 : vector<2x512xf32>
    %461 = vector.extract_strided_slice %454 {offsets = [1, 0], sizes = [1, 512], strides = [1, 1]} : vector<2x512xf32> to vector<1x512xf32>
    %462 = vector.extract_strided_slice %2 {offsets = [0, 74], sizes = [2, 1], strides = [1, 1]} : vector<2x90xf32> to vector<2x1xf32>
    %463 = vector.broadcast %461 : vector<1x512xf32> to vector<2x512xf32>
    %464 = vector.broadcast %462 : vector<2x1xf32> to vector<2x512xf32>
    %465 = arith.mulf %463, %464 : vector<2x512xf32>
    %466 = arith.addf %460, %465 : vector<2x512xf32>
    %c495_i32_63 = arith.constant 495 : i32
    %467 = tpu.dynamic_rotate %335 by %c495_i32_63 dim 1 : vector<2x512xf32>, i32 -> vector<2x512xf32>
    %c8_64 = arith.constant 8 : index
    %c0_65 = arith.constant 0 : index
    %468 = vector.load %arg2[%c8_64, %c0_65] : memref<9x512xf32, #tpu.memory_space<vmem>>, vector<1x512xf32>
    %469 = vector.broadcast %468 : vector<1x512xf32> to vector<2x512xf32>
    %470 = arith.mulf %467, %469 : vector<2x512xf32>
    %471 = vector.extract_strided_slice %470 {offsets = [0, 0], sizes = [1, 512], strides = [1, 1]} : vector<2x512xf32> to vector<1x512xf32>
    %472 = vector.extract_strided_slice %2 {offsets = [0, 77], sizes = [2, 1], strides = [1, 1]} : vector<2x90xf32> to vector<2x1xf32>
    %473 = vector.broadcast %471 : vector<1x512xf32> to vector<2x512xf32>
    %474 = vector.broadcast %472 : vector<2x1xf32> to vector<2x512xf32>
    %475 = arith.mulf %473, %474 : vector<2x512xf32>
    %476 = arith.addf %466, %475 : vector<2x512xf32>
    %477 = vector.extract_strided_slice %470 {offsets = [1, 0], sizes = [1, 512], strides = [1, 1]} : vector<2x512xf32> to vector<1x512xf32>
    %478 = vector.extract_strided_slice %2 {offsets = [0, 78], sizes = [2, 1], strides = [1, 1]} : vector<2x90xf32> to vector<2x1xf32>
    %479 = vector.broadcast %477 : vector<1x512xf32> to vector<2x512xf32>
    %480 = vector.broadcast %478 : vector<2x1xf32> to vector<2x512xf32>
    %481 = arith.mulf %479, %480 : vector<2x512xf32>
    %482 = arith.addf %476, %481 : vector<2x512xf32>
    %c17_i32_66 = arith.constant 17 : i32
    %483 = tpu.dynamic_rotate %343 by %c17_i32_66 dim 1 : vector<2x512xf32>, i32 -> vector<2x512xf32>
    %c0_67 = arith.constant 0 : index
    %c0_68 = arith.constant 0 : index
    %484 = vector.load %arg2[%c0_67, %c0_68] : memref<9x512xf32, #tpu.memory_space<vmem>>, vector<1x512xf32>
    %485 = vector.broadcast %484 : vector<1x512xf32> to vector<2x512xf32>
    %486 = arith.mulf %483, %485 : vector<2x512xf32>
    %487 = vector.extract_strided_slice %486 {offsets = [0, 0], sizes = [1, 512], strides = [1, 1]} : vector<2x512xf32> to vector<1x512xf32>
    %488 = vector.extract_strided_slice %2 {offsets = [0, 47], sizes = [2, 1], strides = [1, 1]} : vector<2x90xf32> to vector<2x1xf32>
    %489 = vector.broadcast %487 : vector<1x512xf32> to vector<2x512xf32>
    %490 = vector.broadcast %488 : vector<2x1xf32> to vector<2x512xf32>
    %491 = arith.mulf %489, %490 : vector<2x512xf32>
    %492 = arith.addf %482, %491 : vector<2x512xf32>
    %493 = vector.extract_strided_slice %486 {offsets = [1, 0], sizes = [1, 512], strides = [1, 1]} : vector<2x512xf32> to vector<1x512xf32>
    %494 = vector.extract_strided_slice %2 {offsets = [0, 48], sizes = [2, 1], strides = [1, 1]} : vector<2x90xf32> to vector<2x1xf32>
    %495 = vector.broadcast %493 : vector<1x512xf32> to vector<2x512xf32>
    %496 = vector.broadcast %494 : vector<2x1xf32> to vector<2x512xf32>
    %497 = arith.mulf %495, %496 : vector<2x512xf32>
    %498 = arith.addf %492, %497 : vector<2x512xf32>
    %c16_i32_69 = arith.constant 16 : i32
    %499 = tpu.dynamic_rotate %343 by %c16_i32_69 dim 1 : vector<2x512xf32>, i32 -> vector<2x512xf32>
    %c1_70 = arith.constant 1 : index
    %c0_71 = arith.constant 0 : index
    %500 = vector.load %arg2[%c1_70, %c0_71] : memref<9x512xf32, #tpu.memory_space<vmem>>, vector<1x512xf32>
    %501 = vector.broadcast %500 : vector<1x512xf32> to vector<2x512xf32>
    %502 = arith.mulf %499, %501 : vector<2x512xf32>
    %503 = vector.extract_strided_slice %502 {offsets = [0, 0], sizes = [1, 512], strides = [1, 1]} : vector<2x512xf32> to vector<1x512xf32>
    %504 = vector.extract_strided_slice %2 {offsets = [0, 51], sizes = [2, 1], strides = [1, 1]} : vector<2x90xf32> to vector<2x1xf32>
    %505 = vector.broadcast %503 : vector<1x512xf32> to vector<2x512xf32>
    %506 = vector.broadcast %504 : vector<2x1xf32> to vector<2x512xf32>
    %507 = arith.mulf %505, %506 : vector<2x512xf32>
    %508 = arith.addf %498, %507 : vector<2x512xf32>
    %509 = vector.extract_strided_slice %502 {offsets = [1, 0], sizes = [1, 512], strides = [1, 1]} : vector<2x512xf32> to vector<1x512xf32>
    %510 = vector.extract_strided_slice %2 {offsets = [0, 52], sizes = [2, 1], strides = [1, 1]} : vector<2x90xf32> to vector<2x1xf32>
    %511 = vector.broadcast %509 : vector<1x512xf32> to vector<2x512xf32>
    %512 = vector.broadcast %510 : vector<2x1xf32> to vector<2x512xf32>
    %513 = arith.mulf %511, %512 : vector<2x512xf32>
    %514 = arith.addf %508, %513 : vector<2x512xf32>
    %c15_i32_72 = arith.constant 15 : i32
    %515 = tpu.dynamic_rotate %343 by %c15_i32_72 dim 1 : vector<2x512xf32>, i32 -> vector<2x512xf32>
    %c2_73 = arith.constant 2 : index
    %c0_74 = arith.constant 0 : index
    %516 = vector.load %arg2[%c2_73, %c0_74] : memref<9x512xf32, #tpu.memory_space<vmem>>, vector<1x512xf32>
    %517 = vector.broadcast %516 : vector<1x512xf32> to vector<2x512xf32>
    %518 = arith.mulf %515, %517 : vector<2x512xf32>
    %519 = vector.extract_strided_slice %518 {offsets = [0, 0], sizes = [1, 512], strides = [1, 1]} : vector<2x512xf32> to vector<1x512xf32>
    %520 = vector.extract_strided_slice %2 {offsets = [0, 55], sizes = [2, 1], strides = [1, 1]} : vector<2x90xf32> to vector<2x1xf32>
    %521 = vector.broadcast %519 : vector<1x512xf32> to vector<2x512xf32>
    %522 = vector.broadcast %520 : vector<2x1xf32> to vector<2x512xf32>
    %523 = arith.mulf %521, %522 : vector<2x512xf32>
    %524 = arith.addf %514, %523 : vector<2x512xf32>
    %525 = vector.extract_strided_slice %518 {offsets = [1, 0], sizes = [1, 512], strides = [1, 1]} : vector<2x512xf32> to vector<1x512xf32>
    %526 = vector.extract_strided_slice %2 {offsets = [0, 56], sizes = [2, 1], strides = [1, 1]} : vector<2x90xf32> to vector<2x1xf32>
    %527 = vector.broadcast %525 : vector<1x512xf32> to vector<2x512xf32>
    %528 = vector.broadcast %526 : vector<2x1xf32> to vector<2x512xf32>
    %529 = arith.mulf %527, %528 : vector<2x512xf32>
    %530 = arith.addf %524, %529 : vector<2x512xf32>
    %c1_i32_75 = arith.constant 1 : i32
    %531 = tpu.dynamic_rotate %343 by %c1_i32_75 dim 1 : vector<2x512xf32>, i32 -> vector<2x512xf32>
    %c3_76 = arith.constant 3 : index
    %c0_77 = arith.constant 0 : index
    %532 = vector.load %arg2[%c3_76, %c0_77] : memref<9x512xf32, #tpu.memory_space<vmem>>, vector<1x512xf32>
    %533 = vector.broadcast %532 : vector<1x512xf32> to vector<2x512xf32>
    %534 = arith.mulf %531, %533 : vector<2x512xf32>
    %535 = vector.extract_strided_slice %534 {offsets = [0, 0], sizes = [1, 512], strides = [1, 1]} : vector<2x512xf32> to vector<1x512xf32>
    %536 = vector.extract_strided_slice %2 {offsets = [0, 59], sizes = [2, 1], strides = [1, 1]} : vector<2x90xf32> to vector<2x1xf32>
    %537 = vector.broadcast %535 : vector<1x512xf32> to vector<2x512xf32>
    %538 = vector.broadcast %536 : vector<2x1xf32> to vector<2x512xf32>
    %539 = arith.mulf %537, %538 : vector<2x512xf32>
    %540 = arith.addf %530, %539 : vector<2x512xf32>
    %541 = vector.extract_strided_slice %534 {offsets = [1, 0], sizes = [1, 512], strides = [1, 1]} : vector<2x512xf32> to vector<1x512xf32>
    %542 = vector.extract_strided_slice %2 {offsets = [0, 60], sizes = [2, 1], strides = [1, 1]} : vector<2x90xf32> to vector<2x1xf32>
    %543 = vector.broadcast %541 : vector<1x512xf32> to vector<2x512xf32>
    %544 = vector.broadcast %542 : vector<2x1xf32> to vector<2x512xf32>
    %545 = arith.mulf %543, %544 : vector<2x512xf32>
    %546 = arith.addf %540, %545 : vector<2x512xf32>
    %547 = vector.extract_strided_slice %343 {offsets = [0, 0], sizes = [1, 512], strides = [1, 1]} : vector<2x512xf32> to vector<1x512xf32>
    %548 = vector.extract_strided_slice %2 {offsets = [0, 63], sizes = [2, 1], strides = [1, 1]} : vector<2x90xf32> to vector<2x1xf32>
    %549 = vector.broadcast %547 : vector<1x512xf32> to vector<2x512xf32>
    %550 = vector.broadcast %548 : vector<2x1xf32> to vector<2x512xf32>
    %551 = arith.mulf %549, %550 : vector<2x512xf32>
    %552 = arith.addf %546, %551 : vector<2x512xf32>
    %553 = vector.extract_strided_slice %343 {offsets = [1, 0], sizes = [1, 512], strides = [1, 1]} : vector<2x512xf32> to vector<1x512xf32>
    %554 = vector.extract_strided_slice %2 {offsets = [0, 64], sizes = [2, 1], strides = [1, 1]} : vector<2x90xf32> to vector<2x1xf32>
    %555 = vector.broadcast %553 : vector<1x512xf32> to vector<2x512xf32>
    %556 = vector.broadcast %554 : vector<2x1xf32> to vector<2x512xf32>
    %557 = arith.mulf %555, %556 : vector<2x512xf32>
    %558 = arith.addf %552, %557 : vector<2x512xf32>
    %c511_i32_78 = arith.constant 511 : i32
    %559 = tpu.dynamic_rotate %343 by %c511_i32_78 dim 1 : vector<2x512xf32>, i32 -> vector<2x512xf32>
    %c5_79 = arith.constant 5 : index
    %c0_80 = arith.constant 0 : index
    %560 = vector.load %arg2[%c5_79, %c0_80] : memref<9x512xf32, #tpu.memory_space<vmem>>, vector<1x512xf32>
    %561 = vector.broadcast %560 : vector<1x512xf32> to vector<2x512xf32>
    %562 = arith.mulf %559, %561 : vector<2x512xf32>
    %563 = vector.extract_strided_slice %562 {offsets = [0, 0], sizes = [1, 512], strides = [1, 1]} : vector<2x512xf32> to vector<1x512xf32>
    %564 = vector.extract_strided_slice %2 {offsets = [0, 67], sizes = [2, 1], strides = [1, 1]} : vector<2x90xf32> to vector<2x1xf32>
    %565 = vector.broadcast %563 : vector<1x512xf32> to vector<2x512xf32>
    %566 = vector.broadcast %564 : vector<2x1xf32> to vector<2x512xf32>
    %567 = arith.mulf %565, %566 : vector<2x512xf32>
    %568 = arith.addf %558, %567 : vector<2x512xf32>
    %569 = vector.extract_strided_slice %562 {offsets = [1, 0], sizes = [1, 512], strides = [1, 1]} : vector<2x512xf32> to vector<1x512xf32>
    %570 = vector.extract_strided_slice %2 {offsets = [0, 68], sizes = [2, 1], strides = [1, 1]} : vector<2x90xf32> to vector<2x1xf32>
    %571 = vector.broadcast %569 : vector<1x512xf32> to vector<2x512xf32>
    %572 = vector.broadcast %570 : vector<2x1xf32> to vector<2x512xf32>
    %573 = arith.mulf %571, %572 : vector<2x512xf32>
    %574 = arith.addf %568, %573 : vector<2x512xf32>
    %c497_i32_81 = arith.constant 497 : i32
    %575 = tpu.dynamic_rotate %343 by %c497_i32_81 dim 1 : vector<2x512xf32>, i32 -> vector<2x512xf32>
    %c6_82 = arith.constant 6 : index
    %c0_83 = arith.constant 0 : index
    %576 = vector.load %arg2[%c6_82, %c0_83] : memref<9x512xf32, #tpu.memory_space<vmem>>, vector<1x512xf32>
    %577 = vector.broadcast %576 : vector<1x512xf32> to vector<2x512xf32>
    %578 = arith.mulf %575, %577 : vector<2x512xf32>
    %579 = vector.extract_strided_slice %578 {offsets = [0, 0], sizes = [1, 512], strides = [1, 1]} : vector<2x512xf32> to vector<1x512xf32>
    %580 = vector.extract_strided_slice %2 {offsets = [0, 71], sizes = [2, 1], strides = [1, 1]} : vector<2x90xf32> to vector<2x1xf32>
    %581 = vector.broadcast %579 : vector<1x512xf32> to vector<2x512xf32>
    %582 = vector.broadcast %580 : vector<2x1xf32> to vector<2x512xf32>
    %583 = arith.mulf %581, %582 : vector<2x512xf32>
    %584 = arith.addf %574, %583 : vector<2x512xf32>
    %585 = vector.extract_strided_slice %578 {offsets = [1, 0], sizes = [1, 512], strides = [1, 1]} : vector<2x512xf32> to vector<1x512xf32>
    %586 = vector.extract_strided_slice %2 {offsets = [0, 72], sizes = [2, 1], strides = [1, 1]} : vector<2x90xf32> to vector<2x1xf32>
    %587 = vector.broadcast %585 : vector<1x512xf32> to vector<2x512xf32>
    %588 = vector.broadcast %586 : vector<2x1xf32> to vector<2x512xf32>
    %589 = arith.mulf %587, %588 : vector<2x512xf32>
    %590 = arith.addf %584, %589 : vector<2x512xf32>
    %c496_i32_84 = arith.constant 496 : i32
    %591 = tpu.dynamic_rotate %343 by %c496_i32_84 dim 1 : vector<2x512xf32>, i32 -> vector<2x512xf32>
    %c7_85 = arith.constant 7 : index
    %c0_86 = arith.constant 0 : index
    %592 = vector.load %arg2[%c7_85, %c0_86] : memref<9x512xf32, #tpu.memory_space<vmem>>, vector<1x512xf32>
    %593 = vector.broadcast %592 : vector<1x512xf32> to vector<2x512xf32>
    %594 = arith.mulf %591, %593 : vector<2x512xf32>
    %595 = vector.extract_strided_slice %594 {offsets = [0, 0], sizes = [1, 512], strides = [1, 1]} : vector<2x512xf32> to vector<1x512xf32>
    %596 = vector.extract_strided_slice %2 {offsets = [0, 75], sizes = [2, 1], strides = [1, 1]} : vector<2x90xf32> to vector<2x1xf32>
    %597 = vector.broadcast %595 : vector<1x512xf32> to vector<2x512xf32>
    %598 = vector.broadcast %596 : vector<2x1xf32> to vector<2x512xf32>
    %599 = arith.mulf %597, %598 : vector<2x512xf32>
    %600 = arith.addf %590, %599 : vector<2x512xf32>
    %601 = vector.extract_strided_slice %594 {offsets = [1, 0], sizes = [1, 512], strides = [1, 1]} : vector<2x512xf32> to vector<1x512xf32>
    %602 = vector.extract_strided_slice %2 {offsets = [0, 76], sizes = [2, 1], strides = [1, 1]} : vector<2x90xf32> to vector<2x1xf32>
    %603 = vector.broadcast %601 : vector<1x512xf32> to vector<2x512xf32>
    %604 = vector.broadcast %602 : vector<2x1xf32> to vector<2x512xf32>
    %605 = arith.mulf %603, %604 : vector<2x512xf32>
    %606 = arith.addf %600, %605 : vector<2x512xf32>
    %c495_i32_87 = arith.constant 495 : i32
    %607 = tpu.dynamic_rotate %343 by %c495_i32_87 dim 1 : vector<2x512xf32>, i32 -> vector<2x512xf32>
    %c8_88 = arith.constant 8 : index
    %c0_89 = arith.constant 0 : index
    %608 = vector.load %arg2[%c8_88, %c0_89] : memref<9x512xf32, #tpu.memory_space<vmem>>, vector<1x512xf32>
    %609 = vector.broadcast %608 : vector<1x512xf32> to vector<2x512xf32>
    %610 = arith.mulf %607, %609 : vector<2x512xf32>
    %611 = vector.extract_strided_slice %610 {offsets = [0, 0], sizes = [1, 512], strides = [1, 1]} : vector<2x512xf32> to vector<1x512xf32>
    %612 = vector.extract_strided_slice %2 {offsets = [0, 79], sizes = [2, 1], strides = [1, 1]} : vector<2x90xf32> to vector<2x1xf32>
    %613 = vector.broadcast %611 : vector<1x512xf32> to vector<2x512xf32>
    %614 = vector.broadcast %612 : vector<2x1xf32> to vector<2x512xf32>
    %615 = arith.mulf %613, %614 : vector<2x512xf32>
    %616 = arith.addf %606, %615 : vector<2x512xf32>
    %617 = vector.extract_strided_slice %610 {offsets = [1, 0], sizes = [1, 512], strides = [1, 1]} : vector<2x512xf32> to vector<1x512xf32>
    %618 = vector.extract_strided_slice %2 {offsets = [0, 80], sizes = [2, 1], strides = [1, 1]} : vector<2x90xf32> to vector<2x1xf32>
    %619 = vector.broadcast %617 : vector<1x512xf32> to vector<2x512xf32>
    %620 = vector.broadcast %618 : vector<2x1xf32> to vector<2x512xf32>
    %621 = arith.mulf %619, %620 : vector<2x512xf32>
    %622 = arith.addf %616, %621 : vector<2x512xf32>
    %623 = vector.extract_strided_slice %3 {offsets = [0, 2], sizes = [2, 1], strides = [1, 1]} : vector<4x8xf32> to vector<2x1xf32>
    %624 = vector.broadcast %623 : vector<2x1xf32> to vector<2x512xf32>
    %625 = arith.addf %622, %624 : vector<2x512xf32>
    %cst_90 = arith.constant 0.000000e+00 : f32
    %626 = vector.broadcast %cst_90 : f32 to vector<2x512xf32>
    %627 = arith.maximumf %625, %626 : vector<2x512xf32>
    %c17_i32_91 = arith.constant 17 : i32
    %628 = tpu.dynamic_rotate %627 by %c17_i32_91 dim 1 : vector<2x512xf32>, i32 -> vector<2x512xf32>
    %c0_92 = arith.constant 0 : index
    %c0_93 = arith.constant 0 : index
    %629 = vector.load %arg2[%c0_92, %c0_93] : memref<9x512xf32, #tpu.memory_space<vmem>>, vector<1x512xf32>
    %630 = vector.broadcast %629 : vector<1x512xf32> to vector<2x512xf32>
    %631 = arith.mulf %628, %630 : vector<2x512xf32>
    %632 = vector.extract_strided_slice %2 {offsets = [0, 81], sizes = [2, 1], strides = [1, 1]} : vector<2x90xf32> to vector<2x1xf32>
    %633 = vector.broadcast %632 : vector<2x1xf32> to vector<2x512xf32>
    %634 = arith.mulf %631, %633 : vector<2x512xf32>
    %c16_i32_94 = arith.constant 16 : i32
    %635 = tpu.dynamic_rotate %627 by %c16_i32_94 dim 1 : vector<2x512xf32>, i32 -> vector<2x512xf32>
    %c1_95 = arith.constant 1 : index
    %c0_96 = arith.constant 0 : index
    %636 = vector.load %arg2[%c1_95, %c0_96] : memref<9x512xf32, #tpu.memory_space<vmem>>, vector<1x512xf32>
    %637 = vector.broadcast %636 : vector<1x512xf32> to vector<2x512xf32>
    %638 = arith.mulf %635, %637 : vector<2x512xf32>
    %639 = vector.extract_strided_slice %2 {offsets = [0, 82], sizes = [2, 1], strides = [1, 1]} : vector<2x90xf32> to vector<2x1xf32>
    %640 = vector.broadcast %639 : vector<2x1xf32> to vector<2x512xf32>
    %641 = arith.mulf %638, %640 : vector<2x512xf32>
    %642 = arith.addf %634, %641 : vector<2x512xf32>
    %c15_i32_97 = arith.constant 15 : i32
    %643 = tpu.dynamic_rotate %627 by %c15_i32_97 dim 1 : vector<2x512xf32>, i32 -> vector<2x512xf32>
    %c2_98 = arith.constant 2 : index
    %c0_99 = arith.constant 0 : index
    %644 = vector.load %arg2[%c2_98, %c0_99] : memref<9x512xf32, #tpu.memory_space<vmem>>, vector<1x512xf32>
    %645 = vector.broadcast %644 : vector<1x512xf32> to vector<2x512xf32>
    %646 = arith.mulf %643, %645 : vector<2x512xf32>
    %647 = vector.extract_strided_slice %2 {offsets = [0, 83], sizes = [2, 1], strides = [1, 1]} : vector<2x90xf32> to vector<2x1xf32>
    %648 = vector.broadcast %647 : vector<2x1xf32> to vector<2x512xf32>
    %649 = arith.mulf %646, %648 : vector<2x512xf32>
    %650 = arith.addf %642, %649 : vector<2x512xf32>
    %c1_i32_100 = arith.constant 1 : i32
    %651 = tpu.dynamic_rotate %627 by %c1_i32_100 dim 1 : vector<2x512xf32>, i32 -> vector<2x512xf32>
    %c3_101 = arith.constant 3 : index
    %c0_102 = arith.constant 0 : index
    %652 = vector.load %arg2[%c3_101, %c0_102] : memref<9x512xf32, #tpu.memory_space<vmem>>, vector<1x512xf32>
    %653 = vector.broadcast %652 : vector<1x512xf32> to vector<2x512xf32>
    %654 = arith.mulf %651, %653 : vector<2x512xf32>
    %655 = vector.extract_strided_slice %2 {offsets = [0, 84], sizes = [2, 1], strides = [1, 1]} : vector<2x90xf32> to vector<2x1xf32>
    %656 = vector.broadcast %655 : vector<2x1xf32> to vector<2x512xf32>
    %657 = arith.mulf %654, %656 : vector<2x512xf32>
    %658 = arith.addf %650, %657 : vector<2x512xf32>
    %659 = vector.extract_strided_slice %2 {offsets = [0, 85], sizes = [2, 1], strides = [1, 1]} : vector<2x90xf32> to vector<2x1xf32>
    %660 = vector.broadcast %659 : vector<2x1xf32> to vector<2x512xf32>
    %661 = arith.mulf %627, %660 : vector<2x512xf32>
    %662 = arith.addf %658, %661 : vector<2x512xf32>
    %c511_i32_103 = arith.constant 511 : i32
    %663 = tpu.dynamic_rotate %627 by %c511_i32_103 dim 1 : vector<2x512xf32>, i32 -> vector<2x512xf32>
    %c5_104 = arith.constant 5 : index
    %c0_105 = arith.constant 0 : index
    %664 = vector.load %arg2[%c5_104, %c0_105] : memref<9x512xf32, #tpu.memory_space<vmem>>, vector<1x512xf32>
    %665 = vector.broadcast %664 : vector<1x512xf32> to vector<2x512xf32>
    %666 = arith.mulf %663, %665 : vector<2x512xf32>
    %667 = vector.extract_strided_slice %2 {offsets = [0, 86], sizes = [2, 1], strides = [1, 1]} : vector<2x90xf32> to vector<2x1xf32>
    %668 = vector.broadcast %667 : vector<2x1xf32> to vector<2x512xf32>
    %669 = arith.mulf %666, %668 : vector<2x512xf32>
    %670 = arith.addf %662, %669 : vector<2x512xf32>
    %c497_i32_106 = arith.constant 497 : i32
    %671 = tpu.dynamic_rotate %627 by %c497_i32_106 dim 1 : vector<2x512xf32>, i32 -> vector<2x512xf32>
    %c6_107 = arith.constant 6 : index
    %c0_108 = arith.constant 0 : index
    %672 = vector.load %arg2[%c6_107, %c0_108] : memref<9x512xf32, #tpu.memory_space<vmem>>, vector<1x512xf32>
    %673 = vector.broadcast %672 : vector<1x512xf32> to vector<2x512xf32>
    %674 = arith.mulf %671, %673 : vector<2x512xf32>
    %675 = vector.extract_strided_slice %2 {offsets = [0, 87], sizes = [2, 1], strides = [1, 1]} : vector<2x90xf32> to vector<2x1xf32>
    %676 = vector.broadcast %675 : vector<2x1xf32> to vector<2x512xf32>
    %677 = arith.mulf %674, %676 : vector<2x512xf32>
    %678 = arith.addf %670, %677 : vector<2x512xf32>
    %c496_i32_109 = arith.constant 496 : i32
    %679 = tpu.dynamic_rotate %627 by %c496_i32_109 dim 1 : vector<2x512xf32>, i32 -> vector<2x512xf32>
    %c7_110 = arith.constant 7 : index
    %c0_111 = arith.constant 0 : index
    %680 = vector.load %arg2[%c7_110, %c0_111] : memref<9x512xf32, #tpu.memory_space<vmem>>, vector<1x512xf32>
    %681 = vector.broadcast %680 : vector<1x512xf32> to vector<2x512xf32>
    %682 = arith.mulf %679, %681 : vector<2x512xf32>
    %683 = vector.extract_strided_slice %2 {offsets = [0, 88], sizes = [2, 1], strides = [1, 1]} : vector<2x90xf32> to vector<2x1xf32>
    %684 = vector.broadcast %683 : vector<2x1xf32> to vector<2x512xf32>
    %685 = arith.mulf %682, %684 : vector<2x512xf32>
    %686 = arith.addf %678, %685 : vector<2x512xf32>
    %c495_i32_112 = arith.constant 495 : i32
    %687 = tpu.dynamic_rotate %627 by %c495_i32_112 dim 1 : vector<2x512xf32>, i32 -> vector<2x512xf32>
    %c8_113 = arith.constant 8 : index
    %c0_114 = arith.constant 0 : index
    %688 = vector.load %arg2[%c8_113, %c0_114] : memref<9x512xf32, #tpu.memory_space<vmem>>, vector<1x512xf32>
    %689 = vector.broadcast %688 : vector<1x512xf32> to vector<2x512xf32>
    %690 = arith.mulf %687, %689 : vector<2x512xf32>
    %691 = vector.extract_strided_slice %2 {offsets = [0, 89], sizes = [2, 1], strides = [1, 1]} : vector<2x90xf32> to vector<2x1xf32>
    %692 = vector.broadcast %691 : vector<2x1xf32> to vector<2x512xf32>
    %693 = arith.mulf %690, %692 : vector<2x512xf32>
    %694 = arith.addf %686, %693 : vector<2x512xf32>
    %695 = vector.extract_strided_slice %3 {offsets = [0, 3], sizes = [2, 1], strides = [1, 1]} : vector<4x8xf32> to vector<2x1xf32>
    %696 = vector.broadcast %695 : vector<2x1xf32> to vector<2x512xf32>
    %697 = arith.addf %694, %696 : vector<2x512xf32>
    %cst_115 = arith.constant 0.000000e+00 : f32
    %698 = vector.broadcast %cst_115 : f32 to vector<2x512xf32>
    %699 = arith.maximumf %697, %698 : vector<2x512xf32>
    %700 = vector.extract_strided_slice %3 {offsets = [0, 6], sizes = [2, 1], strides = [1, 1]} : vector<4x8xf32> to vector<2x1xf32>
    %701 = vector.broadcast %700 : vector<2x1xf32> to vector<2x512xf32>
    %702 = arith.mulf %627, %701 : vector<2x512xf32>
    %703 = vector.extract_strided_slice %3 {offsets = [0, 7], sizes = [2, 1], strides = [1, 1]} : vector<4x8xf32> to vector<2x1xf32>
    %704 = vector.broadcast %703 : vector<2x1xf32> to vector<2x512xf32>
    %705 = arith.addf %702, %704 : vector<2x512xf32>
    %706 = vector.extract_strided_slice %1 {offsets = [0, 0], sizes = [2, 512], strides = [1, 1]} : vector<4x512xf32> to vector<2x512xf32>
    %707 = arith.addf %705, %706 : vector<2x512xf32>
    %cst_116 = arith.constant 0.000000e+00 : f32
    %708 = vector.broadcast %cst_116 : f32 to vector<2x512xf32>
    %709 = arith.maximumf %707, %708 : vector<2x512xf32>
    %c0_117 = arith.constant 0 : index
    %c0_118 = arith.constant 0 : index
    %c0_119 = arith.constant 0 : index
    %710 = vector.load %arg5[%c0_117, %c0_118, %c0_119] : memref<1x4x512xf32, #tpu.memory_space<vmem>>, vector<1x2x512xf32>
    %711 = vector.shape_cast %710 : vector<1x2x512xf32> to vector<2x512xf32>
    %712 = vector.shape_cast %709 : vector<2x512xf32> to vector<1x2x512xf32>
    tpu.vector_store %arg5[%c0_117, %c0_118, %c0_119], %712 {strides = array<i32>} : memref<1x4x512xf32, #tpu.memory_space<vmem>>, vector<1x2x512xf32>,
    %713 = vector.extract_strided_slice %3 {offsets = [2, 6], sizes = [2, 1], strides = [1, 1]} : vector<4x8xf32> to vector<2x1xf32>
    %714 = vector.broadcast %713 : vector<2x1xf32> to vector<2x512xf32>
    %715 = arith.mulf %699, %714 : vector<2x512xf32>
    %716 = vector.extract_strided_slice %3 {offsets = [2, 7], sizes = [2, 1], strides = [1, 1]} : vector<4x8xf32> to vector<2x1xf32>
    %717 = vector.broadcast %716 : vector<2x1xf32> to vector<2x512xf32>
    %718 = arith.addf %715, %717 : vector<2x512xf32>
    %719 = vector.extract_strided_slice %1 {offsets = [2, 0], sizes = [2, 512], strides = [1, 1]} : vector<4x512xf32> to vector<2x512xf32>
    %720 = arith.addf %718, %719 : vector<2x512xf32>
    %cst_120 = arith.constant 0.000000e+00 : f32
    %721 = vector.broadcast %cst_120 : f32 to vector<2x512xf32>
    %722 = arith.maximumf %720, %721 : vector<2x512xf32>
    %c0_121 = arith.constant 0 : index
    %c2_122 = arith.constant 2 : index
    %c0_123 = arith.constant 0 : index
    %723 = vector.load %arg5[%c0_121, %c2_122, %c0_123] : memref<1x4x512xf32, #tpu.memory_space<vmem>>, vector<1x2x512xf32>
    %724 = vector.shape_cast %723 : vector<1x2x512xf32> to vector<2x512xf32>
    %725 = vector.shape_cast %722 : vector<2x512xf32> to vector<1x2x512xf32>
    tpu.vector_store %arg5[%c0_121, %c2_122, %c0_123], %725 {strides = array<i32>} : memref<1x4x512xf32, #tpu.memory_space<vmem>>, vector<1x2x512xf32>,
    return
  }
  func.func @transform_0(%arg0: i32) -> (i32, i32, i32) {
    %c0_i32 = arith.constant 0 : i32
    %c0_i32_0 = arith.constant 0 : i32
    %c0_i32_1 = arith.constant 0 : i32
    return %arg0, %c0_i32, %c0_i32_0 : i32, i32, i32
  }
  func.func @transform_1(%arg0: i32) -> (i32, i32) {
    %c0_i32 = arith.constant 0 : i32
    %c0_i32_0 = arith.constant 0 : i32
    %c0_i32_1 = arith.constant 0 : i32
    return %c0_i32, %c0_i32_0 : i32, i32
  }
  func.func @transform_2(%arg0: i32) -> (i32, i32) {
    %c0_i32 = arith.constant 0 : i32
    %c0_i32_0 = arith.constant 0 : i32
    %c0_i32_1 = arith.constant 0 : i32
    return %c0_i32, %c0_i32_0 : i32, i32
  }
  func.func @transform_3(%arg0: i32) -> (i32, i32) {
    %c0_i32 = arith.constant 0 : i32
    %c0_i32_0 = arith.constant 0 : i32
    %c0_i32_1 = arith.constant 0 : i32
    return %c0_i32, %c0_i32_0 : i32, i32
  }
  func.func @transform_4(%arg0: i32) -> (i32, i32, i32) {
    %c0_i32 = arith.constant 0 : i32
    %c0_i32_0 = arith.constant 0 : i32
    %c0_i32_1 = arith.constant 0 : i32
    return %arg0, %c0_i32, %c0_i32_0 : i32, i32, i32
  }
}

</mosaic_0001>

<llo_original>
// kernel: _lambda_.1
$region0: #{_lambda_.1}
  #allocation0 [shape = 'u32[]', space=smem, size = 0x4, offset = 0x4, fixed_abs, tag = 'smem constant byte address 0x4 - core index']
  #allocation1 [shape = 'u32[144,128]{1,0:T(1,128)}', space=vmem, size = 0x12000, scoped, tag = 'internal scratch']
  %s0 = inlined_call_operand.vmem [shape: f32[1,4,512], index: 0, kind: input, shape index: {}]
  %s1 = inlined_call_operand.vmem [shape: f32[9,512], index: 1, kind: input, shape index: {}]
  %s2 = inlined_call_operand.vmem [shape: f32[2,90], index: 2, kind: input, shape index: {}]
  %s3 = inlined_call_operand.vmem [shape: f32[4,8], index: 3, kind: input, shape index: {}]
  %s4 = inlined_call_operand.vmem [shape: f32[1,4,512], index: 4, kind: output, shape index: {}]
  %s5 = sld [smem:[#allocation0]]
  $region26: #{_lambda_.1} parent=0
    _
  %s7 = ssub.s32 1, %s5
  %s8 = scalar_select 0, %s7, %s5
  // Predicated region
  $region2: #{_lambda_.1} parent=0 // pred_check
    _
  $region3: #{_lambda_.1} parent=0 // pred_check_branch
    %10 = sbr.rel (0) target = $region5
  $region4: #{_lambda_.1} parent=0 // pred_region
    _
  $region5: #{_lambda_.1} parent=0 // pred_fallthru
    _
  // Predicated region
  $region6: #{_lambda_.1} parent=0 // pred_check
    _
  $region7: #{_lambda_.1} parent=0 // pred_check_branch
    %12 = sbr.rel (0) target = $region9
  $region8: #{_lambda_.1} parent=0 // pred_region
    _
  $region9: #{_lambda_.1} parent=0 // pred_fallthru
    _
  // Predicated region
  $region10: #{_lambda_.1} parent=0 // pred_check
    _
  $region11: #{_lambda_.1} parent=0 // pred_check_branch
    %14 = sbr.rel (0) target = $region13
  $region12: #{_lambda_.1} parent=0 // pred_region
    _
  $region13: #{_lambda_.1} parent=0 // pred_fallthru
    _
  // Predicated region
  $region14: #{_lambda_.1} parent=0 // pred_check
    _
  $region15: #{_lambda_.1} parent=0 // pred_check_branch
    %16 = sbr.rel (0) target = $region17
  $region16: #{_lambda_.1} parent=0 // pred_region
    _
  $region17: #{_lambda_.1} parent=0 // pred_fallthru
    _
  %v17 = vld [vmem:[%s0] sm:$0xff]
  %v18 = vld [vmem:[%s0 + $0x8] sm:$0xff]
  %v19 = vld [vmem:[%s2] sm:$0x3]
  %v20 = vld [vmem:[%s3] sm:$0xf]
  %v23 = vcombine.high %v17, %v17
  %v24 = vcombine.high %v18, %v18
  %27 = vrot.lane.b32.xlu0 %v17, 17
  %v28 = vpop.permute.xlu0 %27
  %29 = vrot.lane.b32.xlu0 %v23, 17
  %v30 = vpop.permute.xlu0 %29
  %31 = vrot.lane.b32.xlu0 %v18, 17
  %v32 = vpop.permute.xlu0 %31
  %33 = vrot.lane.b32.xlu0 %v24, 17
  %v34 = vpop.permute.xlu0 %33
  %v35 = vlaneseq
  %v36 = vand.u32 %v35, 127
  %vm37 = vcmp.lt.s32.totalorder %v36, 17
  %v38 = vsel %vm37, %v32, %v34
  %v39 = vsel %vm37, %v30, %v32
  %v40 = vsel %vm37, %v28, %v30
  %v41 = vsel %vm37, %v34, %v28
  %v42 = vld [vmem:[%s1] ss:$8 sm:$0xf]
  %v44 = vlaneseq
  %v45 = vshrl.u32 %v44, 7
  %v46 = vsub.s32 0, %v45
  %v47 = vrot.slane %v42, %v46
  %v48 = vlaneseq
  %v49 = vshrl.u32 %v48, 7
  %v50 = vsub.s32 1, %v49
  %v51 = vrot.slane %v42, %v50
  %v52 = vlaneseq
  %v53 = vshrl.u32 %v52, 7
  %v54 = vsub.s32 2, %v53
  %v55 = vrot.slane %v42, %v54
  %v56 = vlaneseq
  %v57 = vshrl.u32 %v56, 7
  %v58 = vsub.s32 3, %v57
  %v59 = vrot.slane %v42, %v58
  %v64 = vmul.f32 %v41, %v47
  %v65 = vmul.f32 %v40, %v51
  %v66 = vmul.f32 %v39, %v55
  %v67 = vmul.f32 %v38, %v59
  %v68 = vlaneseq
  %v69 = vshrl.u32 %v68, 7
  %v70 = vsub.s32 0, %v69
  %v71 = vrot.slane %v64, %v70
  %v72 = vlaneseq
  %v73 = vshrl.u32 %v72, 7
  %v74 = vsub.s32 0, %v73
  %v75 = vrot.slane %v65, %v74
  %v76 = vlaneseq
  %v77 = vshrl.u32 %v76, 7
  %v78 = vsub.s32 0, %v77
  %v79 = vrot.slane %v66, %v78
  %v80 = vlaneseq
  %v81 = vshrl.u32 %v80, 7
  %v82 = vsub.s32 0, %v81
  %v83 = vrot.slane %v67, %v82
  %85 = vset.pattern.permute.xlu0 0
  %86 = vperm.xlu0 %85, %v19
  %v87 = vpop.permute.xlu0 %86
  %v89 = vmul.f32 %v71, %v87
  %v90 = vmul.f32 %v75, %v87
  %v91 = vmul.f32 %v79, %v87
  %v92 = vmul.f32 %v83, %v87
  %v93 = vlaneseq
  %v94 = vshrl.u32 %v93, 7
  %v95 = vsub.s32 1, %v94
  %v96 = vrot.slane %v64, %v95
  %v97 = vlaneseq
  %v98 = vshrl.u32 %v97, 7
  %v99 = vsub.s32 1, %v98
  %v100 = vrot.slane %v65, %v99
  %v101 = vlaneseq
  %v102 = vshrl.u32 %v101, 7
  %v103 = vsub.s32 1, %v102
  %v104 = vrot.slane %v66, %v103
  %v105 = vlaneseq
  %v106 = vshrl.u32 %v105, 7
  %v107 = vsub.s32 1, %v106
  %v108 = vrot.slane %v67, %v107
  %109 = vset.pattern.permute.xlu0 1
  %110 = vperm.xlu0 %109, %v19
  %v111 = vpop.permute.xlu0 %110
  %v113 = vmul.f32 %v96, %v111
  %v114 = vmul.f32 %v100, %v111
  %v115 = vmul.f32 %v104, %v111
  %v116 = vmul.f32 %v108, %v111
  %v117 = vadd.f32 %v89, %v113
  %v118 = vadd.f32 %v90, %v114
  %v119 = vadd.f32 %v91, %v115
  %v120 = vadd.f32 %v92, %v116
  %v121 = vlaneseq
  %v122 = vshrl.u32 %v121, 7
  %v123 = vsub.s32 2, %v122
  %v124 = vrot.slane %v64, %v123
  %v125 = vlaneseq
  %v126 = vshrl.u32 %v125, 7
  %v127 = vsub.s32 2, %v126
  %v128 = vrot.slane %v65, %v127
  %v129 = vlaneseq
  %v130 = vshrl.u32 %v129, 7
  %v131 = vsub.s32 2, %v130
  %v132 = vrot.slane %v66, %v131
  %v133 = vlaneseq
  %v134 = vshrl.u32 %v133, 7
  %v135 = vsub.s32 2, %v134
  %v136 = vrot.slane %v67, %v135
  %137 = vset.pattern.permute.xlu0 2
  %138 = vperm.xlu0 %137, %v19
  %v139 = vpop.permute.xlu0 %138
  %v141 = vmul.f32 %v124, %v139
  %v142 = vmul.f32 %v128, %v139
  %v143 = vmul.f32 %v132, %v139
  %v144 = vmul.f32 %v136, %v139
  %v145 = vadd.f32 %v117, %v141
  %v146 = vadd.f32 %v118, %v142
  %v147 = vadd.f32 %v119, %v143
  %v148 = vadd.f32 %v120, %v144
  %v149 = vlaneseq
  %v150 = vshrl.u32 %v149, 7
  %v151 = vsub.s32 3, %v150
  %v152 = vrot.slane %v64, %v151
  %v153 = vlaneseq
  %v154 = vshrl.u32 %v153, 7
  %v155 = vsub.s32 3, %v154
  %v156 = vrot.slane %v65, %v155
  %v157 = vlaneseq
  %v158 = vshrl.u32 %v157, 7
  %v159 = vsub.s32 3, %v158
  %v160 = vrot.slane %v66, %v159
  %v161 = vlaneseq
  %v162 = vshrl.u32 %v161, 7
  %v163 = vsub.s32 3, %v162
  %v164 = vrot.slane %v67, %v163
  %165 = vset.pattern.permute.xlu0 3
  %166 = vperm.xlu0 %165, %v19
  %v167 = vpop.permute.xlu0 %166
  %v169 = vmul.f32 %v152, %v167
  %v170 = vmul.f32 %v156, %v167
  %v171 = vmul.f32 %v160, %v167
  %v172 = vmul.f32 %v164, %v167
  %v173 = vadd.f32 %v145, %v169
  %v174 = vadd.f32 %v146, %v170
  %v175 = vadd.f32 %v147, %v171
  %v176 = vadd.f32 %v148, %v172
  %177 = vrot.lane.b32.xlu0 %v17, 16
  %v178 = vpop.permute.xlu0 %177
  %179 = vrot.lane.b32.xlu0 %v23, 16
  %v180 = vpop.permute.xlu0 %179
  %181 = vrot.lane.b32.xlu0 %v18, 16
  %v182 = vpop.permute.xlu0 %181
  %183 = vrot.lane.b32.xlu0 %v24, 16
  %v184 = vpop.permute.xlu0 %183
  %vm185 = vcmp.lt.s32.totalorder %v36, 16
  %v186 = vsel %vm185, %v182, %v184
  %v187 = vsel %vm185, %v180, %v182
  %v188 = vsel %vm185, %v178, %v180
  %v189 = vsel %vm185, %v184, %v178
  %s190 = scalar_lea.vmem %s1, 1
  %v191 = vld [vmem:[%s190] ss:$8 sm:$0xf]
  %v193 = vlaneseq
  %v194 = vshrl.u32 %v193, 7
  %v195 = vsub.s32 0, %v194
  %v196 = vrot.slane %v191, %v195
  %v197 = vlaneseq
  %v198 = vshrl.u32 %v197, 7
  %v199 = vsub.s32 1, %v198
  %v200 = vrot.slane %v191, %v199
  %v201 = vlaneseq
  %v202 = vshrl.u32 %v201, 7
  %v203 = vsub.s32 2, %v202
  %v204 = vrot.slane %v191, %v203
  %v205 = vlaneseq
  %v206 = vshrl.u32 %v205, 7
  %v207 = vsub.s32 3, %v206
  %v208 = vrot.slane %v191, %v207
  %v213 = vmul.f32 %v189, %v196
  %v214 = vmul.f32 %v188, %v200
  %v215 = vmul.f32 %v187, %v204
  %v216 = vmul.f32 %v186, %v208
  %v217 = vlaneseq
  %v218 = vshrl.u32 %v217, 7
  %v219 = vsub.s32 0, %v218
  %v220 = vrot.slane %v213, %v219
  %v221 = vlaneseq
  %v222 = vshrl.u32 %v221, 7
  %v223 = vsub.s32 0, %v222
  %v224 = vrot.slane %v214, %v223
  %v225 = vlaneseq
  %v226 = vshrl.u32 %v225, 7
  %v227 = vsub.s32 0, %v226
  %v228 = vrot.slane %v215, %v227
  %v229 = vlaneseq
  %v230 = vshrl.u32 %v229, 7
  %v231 = vsub.s32 0, %v230
  %v232 = vrot.slane %v216, %v231
  %233 = vset.pattern.permute.xlu0 4
  %234 = vperm.xlu0 %233, %v19
  %v235 = vpop.permute.xlu0 %234
  %v237 = vmul.f32 %v220, %v235
  %v238 = vmul.f32 %v224, %v235
  %v239 = vmul.f32 %v228, %v235
  %v240 = vmul.f32 %v232, %v235
  %v241 = vadd.f32 %v173, %v237
  %v242 = vadd.f32 %v174, %v238
  %v243 = vadd.f32 %v175, %v239
  %v244 = vadd.f32 %v176, %v240
  %v245 = vlaneseq
  %v246 = vshrl.u32 %v245, 7
  %v247 = vsub.s32 1, %v246
  %v248 = vrot.slane %v213, %v247
  %v249 = vlaneseq
  %v250 = vshrl.u32 %v249, 7
  %v251 = vsub.s32 1, %v250
  %v252 = vrot.slane %v214, %v251
  %v253 = vlaneseq
  %v254 = vshrl.u32 %v253, 7
  %v255 = vsub.s32 1, %v254
  %v256 = vrot.slane %v215, %v255
  %v257 = vlaneseq
  %v258 = vshrl.u32 %v257, 7
  %v259 = vsub.s32 1, %v258
  %v260 = vrot.slane %v216, %v259
  %261 = vset.pattern.permute.xlu0 5
  %262 = vperm.xlu0 %261, %v19
  %v263 = vpop.permute.xlu0 %262
  %v265 = vmul.f32 %v248, %v263
  %v266 = vmul.f32 %v252, %v263
  %v267 = vmul.f32 %v256, %v263
  %v268 = vmul.f32 %v260, %v263
  %v269 = vadd.f32 %v241, %v265
  %v270 = vadd.f32 %v242, %v266
  %v271 = vadd.f32 %v243, %v267
  %v272 = vadd.f32 %v244, %v268
  %v273 = vlaneseq
  %v274 = vshrl.u32 %v273, 7
  %v275 = vsub.s32 2, %v274
  %v276 = vrot.slane %v213, %v275
  %v277 = vlaneseq
  %v278 = vshrl.u32 %v277, 7
  %v279 = vsub.s32 2, %v278
  %v280 = vrot.slane %v214, %v279
  %v281 = vlaneseq
  %v282 = vshrl.u32 %v281, 7
  %v283 = vsub.s32 2, %v282
  %v284 = vrot.slane %v215, %v283
  %v285 = vlaneseq
  %v286 = vshrl.u32 %v285, 7
  %v287 = vsub.s32 2, %v286
  %v288 = vrot.slane %v216, %v287
  %289 = vset.pattern.permute.xlu0 6
  %290 = vperm.xlu0 %289, %v19
  %v291 = vpop.permute.xlu0 %290
  %v293 = vmul.f32 %v276, %v291
  %v294 = vmul.f32 %v280, %v291
  %v295 = vmul.f32 %v284, %v291
  %v296 = vmul.f32 %v288, %v291
  %v297 = vadd.f32 %v269, %v293
  %v298 = vadd.f32 %v270, %v294
  %v299 = vadd.f32 %v271, %v295
  %v300 = vadd.f32 %v272, %v296
  %v301 = vlaneseq
  %v302 = vshrl.u32 %v301, 7
  %v303 = vsub.s32 3, %v302
  %v304 = vrot.slane %v213, %v303
  %v305 = vlaneseq
  %v306 = vshrl.u32 %v305, 7
  %v307 = vsub.s32 3, %v306
  %v308 = vrot.slane %v214, %v307
  %v309 = vlaneseq
  %v310 = vshrl.u32 %v309, 7
  %v311 = vsub.s32 3, %v310
  %v312 = vrot.slane %v215, %v311
  %v313 = vlaneseq
  %v314 = vshrl.u32 %v313, 7
  %v315 = vsub.s32 3, %v314
  %v316 = vrot.slane %v216, %v315
  %317 = vset.pattern.permute.xlu0 7
  %318 = vperm.xlu0 %317, %v19
  %v319 = vpop.permute.xlu0 %318
  %v321 = vmul.f32 %v304, %v319
  %v322 = vmul.f32 %v308, %v319
  %v323 = vmul.f32 %v312, %v319
  %v324 = vmul.f32 %v316, %v319
  %v325 = vadd.f32 %v297, %v321
  %v326 = vadd.f32 %v298, %v322
  %v327 = vadd.f32 %v299, %v323
  %v328 = vadd.f32 %v300, %v324
  %329 = vrot.lane.b32.xlu0 %v17, 15
  %v330 = vpop.permute.xlu0 %329
  %331 = vrot.lane.b32.xlu0 %v23, 15
  %v332 = vpop.permute.xlu0 %331
  %333 = vrot.lane.b32.xlu0 %v18, 15
  %v334 = vpop.permute.xlu0 %333
  %335 = vrot.lane.b32.xlu0 %v24, 15
  %v336 = vpop.permute.xlu0 %335
  %vm337 = vcmp.lt.s32.totalorder %v36, 15
  %v338 = vsel %vm337, %v334, %v336
  %v339 = vsel %vm337, %v332, %v334
  %v340 = vsel %vm337, %v330, %v332
  %v341 = vsel %vm337, %v336, %v330
  %s342 = scalar_lea.vmem %s1, 2
  %v343 = vld [vmem:[%s342] ss:$8 sm:$0xf]
  %v345 = vlaneseq
  %v346 = vshrl.u32 %v345, 7
  %v347 = vsub.s32 0, %v346
  %v348 = vrot.slane %v343, %v347
  %v349 = vlaneseq
  %v350 = vshrl.u32 %v349, 7
  %v351 = vsub.s32 1, %v350
  %v352 = vrot.slane %v343, %v351
  %v353 = vlaneseq
  %v354 = vshrl.u32 %v353, 7
  %v355 = vsub.s32 2, %v354
  %v356 = vrot.slane %v343, %v355
  %v357 = vlaneseq
  %v358 = vshrl.u32 %v357, 7
  %v359 = vsub.s32 3, %v358
  %v360 = vrot.slane %v343, %v359
  %v365 = vmul.f32 %v341, %v348
  %v366 = vmul.f32 %v340, %v352
  %v367 = vmul.f32 %v339, %v356
  %v368 = vmul.f32 %v338, %v360
  %v369 = vlaneseq
  %v370 = vshrl.u32 %v369, 7
  %v371 = vsub.s32 0, %v370
  %v372 = vrot.slane %v365, %v371
  %v373 = vlaneseq
  %v374 = vshrl.u32 %v373, 7
  %v375 = vsub.s32 0, %v374
  %v376 = vrot.slane %v366, %v375
  %v377 = vlaneseq
  %v378 = vshrl.u32 %v377, 7
  %v379 = vsub.s32 0, %v378
  %v380 = vrot.slane %v367, %v379
  %v381 = vlaneseq
  %v382 = vshrl.u32 %v381, 7
  %v383 = vsub.s32 0, %v382
  %v384 = vrot.slane %v368, %v383
  %385 = vset.pattern.permute.xlu0 8
  %386 = vperm.xlu0 %385, %v19
  %v387 = vpop.permute.xlu0 %386
  %v389 = vmul.f32 %v372, %v387
  %v390 = vmul.f32 %v376, %v387
  %v391 = vmul.f32 %v380, %v387
  %v392 = vmul.f32 %v384, %v387
  %v393 = vadd.f32 %v325, %v389
  %v394 = vadd.f32 %v326, %v390
  %v395 = vadd.f32 %v327, %v391
  %v396 = vadd.f32 %v328, %v392
  %v397 = vlaneseq
  %v398 = vshrl.u32 %v397, 7
  %v399 = vsub.s32 1, %v398
  %v400 = vrot.slane %v365, %v399
  %v401 = vlaneseq
  %v402 = vshrl.u32 %v401, 7
  %v403 = vsub.s32 1, %v402
  %v404 = vrot.slane %v366, %v403
  %v405 = vlaneseq
  %v406 = vshrl.u32 %v405, 7
  %v407 = vsub.s32 1, %v406
  %v408 = vrot.slane %v367, %v407
  %v409 = vlaneseq
  %v410 = vshrl.u32 %v409, 7
  %v411 = vsub.s32 1, %v410
  %v412 = vrot.slane %v368, %v411
  %413 = vset.pattern.permute.xlu0 9
  %414 = vperm.xlu0 %413, %v19
  %v415 = vpop.permute.xlu0 %414
  %v417 = vmul.f32 %v400, %v415
  %v418 = vmul.f32 %v404, %v415
  %v419 = vmul.f32 %v408, %v415
  %v420 = vmul.f32 %v412, %v415
  %v421 = vadd.f32 %v393, %v417
  %v422 = vadd.f32 %v394, %v418
  %v423 = vadd.f32 %v395, %v419
  %v424 = vadd.f32 %v396, %v420
  %v425 = vlaneseq
  %v426 = vshrl.u32 %v425, 7
  %v427 = vsub.s32 2, %v426
  %v428 = vrot.slane %v365, %v427
  %v429 = vlaneseq
  %v430 = vshrl.u32 %v429, 7
  %v431 = vsub.s32 2, %v430
  %v432 = vrot.slane %v366, %v431
  %v433 = vlaneseq
  %v434 = vshrl.u32 %v433, 7
  %v435 = vsub.s32 2, %v434
  %v436 = vrot.slane %v367, %v435
  %v437 = vlaneseq
  %v438 = vshrl.u32 %v437, 7
  %v439 = vsub.s32 2, %v438
  %v440 = vrot.slane %v368, %v439
  %441 = vset.pattern.permute.xlu0 10
  %442 = vperm.xlu0 %441, %v19
  %v443 = vpop.permute.xlu0 %442
  %v445 = vmul.f32 %v428, %v443
  %v446 = vmul.f32 %v432, %v443
  %v447 = vmul.f32 %v436, %v443
  %v448 = vmul.f32 %v440, %v443
  %v449 = vadd.f32 %v421, %v445
  %v450 = vadd.f32 %v422, %v446
  %v451 = vadd.f32 %v423, %v447
  %v452 = vadd.f32 %v424, %v448
  %v453 = vlaneseq
  %v454 = vshrl.u32 %v453, 7
  %v455 = vsub.s32 3, %v454
  %v456 = vrot.slane %v365, %v455
  %v457 = vlaneseq
  %v458 = vshrl.u32 %v457, 7
  %v459 = vsub.s32 3, %v458
  %v460 = vrot.slane %v366, %v459
  %v461 = vlaneseq
  %v462 = vshrl.u32 %v461, 7
  %v463 = vsub.s32 3, %v462
  %v464 = vrot.slane %v367, %v463
  %v465 = vlaneseq
  %v466 = vshrl.u32 %v465, 7
  %v467 = vsub.s32 3, %v466
  %v468 = vrot.slane %v368, %v467
  %469 = vset.pattern.permute.xlu0 11
  %470 = vperm.xlu0 %469, %v19
  %v471 = vpop.permute.xlu0 %470
  %v473 = vmul.f32 %v456, %v471
  %v474 = vmul.f32 %v460, %v471
  %v475 = vmul.f32 %v464, %v471
  %v476 = vmul.f32 %v468, %v471
  %v477 = vadd.f32 %v449, %v473
  %v478 = vadd.f32 %v450, %v474
  %v479 = vadd.f32 %v451, %v475
  %v480 = vadd.f32 %v452, %v476
  %481 = vrot.lane.b32.xlu0 %v17, 1
  %v482 = vpop.permute.xlu0 %481
  %483 = vrot.lane.b32.xlu0 %v23, 1
  %v484 = vpop.permute.xlu0 %483
  %485 = vrot.lane.b32.xlu0 %v18, 1
  %v486 = vpop.permute.xlu0 %485
  %487 = vrot.lane.b32.xlu0 %v24, 1
  %v488 = vpop.permute.xlu0 %487
  %vm489 = vcmp.lt.s32.totalorder %v36, 1
  %v490 = vsel %vm489, %v486, %v488
  %v491 = vsel %vm489, %v484, %v486
  %v492 = vsel %vm489, %v482, %v484
  %v493 = vsel %vm489, %v488, %v482
  %s494 = scalar_lea.vmem %s1, 3
  %v495 = vld [vmem:[%s494] ss:$8 sm:$0xf]
  %v497 = vlaneseq
  %v498 = vshrl.u32 %v497, 7
  %v499 = vsub.s32 0, %v498
  %v500 = vrot.slane %v495, %v499
  %v501 = vlaneseq
  %v502 = vshrl.u32 %v501, 7
  %v503 = vsub.s32 1, %v502
  %v504 = vrot.slane %v495, %v503
  %v505 = vlaneseq
  %v506 = vshrl.u32 %v505, 7
  %v507 = vsub.s32 2, %v506
  %v508 = vrot.slane %v495, %v507
  %v509 = vlaneseq
  %v510 = vshrl.u32 %v509, 7
  %v511 = vsub.s32 3, %v510
  %v512 = vrot.slane %v495, %v511
  %v517 = vmul.f32 %v493, %v500
  %v518 = vmul.f32 %v492, %v504
  %v519 = vmul.f32 %v491, %v508
  %v520 = vmul.f32 %v490, %v512
  %v521 = vlaneseq
  %v522 = vshrl.u32 %v521, 7
  %v523 = vsub.s32 0, %v522
  %v524 = vrot.slane %v517, %v523
  %v525 = vlaneseq
  %v526 = vshrl.u32 %v525, 7
  %v527 = vsub.s32 0, %v526
  %v528 = vrot.slane %v518, %v527
  %v529 = vlaneseq
  %v530 = vshrl.u32 %v529, 7
  %v531 = vsub.s32 0, %v530
  %v532 = vrot.slane %v519, %v531
  %v533 = vlaneseq
  %v534 = vshrl.u32 %v533, 7
  %v535 = vsub.s32 0, %v534
  %v536 = vrot.slane %v520, %v535
  %537 = vset.pattern.permute.xlu0 12
  %538 = vperm.xlu0 %537, %v19
  %v539 = vpop.permute.xlu0 %538
  %v541 = vmul.f32 %v524, %v539
  %v542 = vmul.f32 %v528, %v539
  %v543 = vmul.f32 %v532, %v539
  %v544 = vmul.f32 %v536, %v539
  %v545 = vadd.f32 %v477, %v541
  %v546 = vadd.f32 %v478, %v542
  %v547 = vadd.f32 %v479, %v543
  %v548 = vadd.f32 %v480, %v544
  %v549 = vlaneseq
  %v550 = vshrl.u32 %v549, 7
  %v551 = vsub.s32 1, %v550
  %v552 = vrot.slane %v517, %v551
  %v553 = vlaneseq
  %v554 = vshrl.u32 %v553, 7
  %v555 = vsub.s32 1, %v554
  %v556 = vrot.slane %v518, %v555
  %v557 = vlaneseq
  %v558 = vshrl.u32 %v557, 7
  %v559 = vsub.s32 1, %v558
  %v560 = vrot.slane %v519, %v559
  %v561 = vlaneseq
  %v562 = vshrl.u32 %v561, 7
  %v563 = vsub.s32 1, %v562
  %v564 = vrot.slane %v520, %v563
  %565 = vset.pattern.permute.xlu0 13
  %566 = vperm.xlu0 %565, %v19
  %v567 = vpop.permute.xlu0 %566
  %v569 = vmul.f32 %v552, %v567
  %v570 = vmul.f32 %v556, %v567
  %v571 = vmul.f32 %v560, %v567
  %v572 = vmul.f32 %v564, %v567
  %v573 = vadd.f32 %v545, %v569
  %v574 = vadd.f32 %v546, %v570
  %v575 = vadd.f32 %v547, %v571
  %v576 = vadd.f32 %v548, %v572
  %v577 = vlaneseq
  %v578 = vshrl.u32 %v577, 7
  %v579 = vsub.s32 2, %v578
  %v580 = vrot.slane %v517, %v579
  %v581 = vlaneseq
  %v582 = vshrl.u32 %v581, 7
  %v583 = vsub.s32 2, %v582
  %v584 = vrot.slane %v518, %v583
  %v585 = vlaneseq
  %v586 = vshrl.u32 %v585, 7
  %v587 = vsub.s32 2, %v586
  %v588 = vrot.slane %v519, %v587
  %v589 = vlaneseq
  %v590 = vshrl.u32 %v589, 7
  %v591 = vsub.s32 2, %v590
  %v592 = vrot.slane %v520, %v591
  %593 = vset.pattern.permute.xlu0 14
  %594 = vperm.xlu0 %593, %v19
  %v595 = vpop.permute.xlu0 %594
  %v597 = vmul.f32 %v580, %v595
  %v598 = vmul.f32 %v584, %v595
  %v599 = vmul.f32 %v588, %v595
  %v600 = vmul.f32 %v592, %v595
  %v601 = vadd.f32 %v573, %v597
  %v602 = vadd.f32 %v574, %v598
  %v603 = vadd.f32 %v575, %v599
  %v604 = vadd.f32 %v576, %v600
  %v605 = vlaneseq
  %v606 = vshrl.u32 %v605, 7
  %v607 = vsub.s32 3, %v606
  %v608 = vrot.slane %v517, %v607
  %v609 = vlaneseq
  %v610 = vshrl.u32 %v609, 7
  %v611 = vsub.s32 3, %v610
  %v612 = vrot.slane %v518, %v611
  %v613 = vlaneseq
  %v614 = vshrl.u32 %v613, 7
  %v615 = vsub.s32 3, %v614
  %v616 = vrot.slane %v519, %v615
  %v617 = vlaneseq
  %v618 = vshrl.u32 %v617, 7
  %v619 = vsub.s32 3, %v618
  %v620 = vrot.slane %v520, %v619
  %621 = vset.pattern.permute.xlu0 15
  %622 = vperm.xlu0 %621, %v19
  %v623 = vpop.permute.xlu0 %622
  %v625 = vmul.f32 %v608, %v623
  %v626 = vmul.f32 %v612, %v623
  %v627 = vmul.f32 %v616, %v623
  %v628 = vmul.f32 %v620, %v623
  %v629 = vadd.f32 %v601, %v625
  %v630 = vadd.f32 %v602, %v626
  %v631 = vadd.f32 %v603, %v627
  %v632 = vadd.f32 %v604, %v628
  %v633 = vlaneseq
  %v634 = vshrl.u32 %v633, 7
  %v635 = vsub.s32 0, %v634
  %v636 = vrot.slane %v17, %v635
  %v637 = vlaneseq
  %v638 = vshrl.u32 %v637, 7
  %v639 = vsub.s32 4, %v638
  %v640 = vrot.slane %v17, %v639
  %v641 = vlaneseq
  %v642 = vshrl.u32 %v641, 7
  %v643 = vsub.s32 0, %v642
  %v644 = vrot.slane %v18, %v643
  %v645 = vlaneseq
  %v646 = vshrl.u32 %v645, 7
  %v647 = vsub.s32 4, %v646
  %v648 = vrot.slane %v18, %v647
  %v653 = vlaneseq
  %v654 = vshrl.u32 %v653, 7
  %v655 = vsub.s32 0, %v654
  %v656 = vrot.slane %v636, %v655
  %v657 = vlaneseq
  %v658 = vshrl.u32 %v657, 7
  %v659 = vsub.s32 0, %v658
  %v660 = vrot.slane %v640, %v659
  %v661 = vlaneseq
  %v662 = vshrl.u32 %v661, 7
  %v663 = vsub.s32 0, %v662
  %v664 = vrot.slane %v644, %v663
  %v665 = vlaneseq
  %v666 = vshrl.u32 %v665, 7
  %v667 = vsub.s32 0, %v666
  %v668 = vrot.slane %v648, %v667
  %669 = vset.pattern.permute.xlu0 16
  %670 = vperm.xlu0 %669, %v19
  %v671 = vpop.permute.xlu0 %670
  %v673 = vmul.f32 %v656, %v671
  %v674 = vmul.f32 %v660, %v671
  %v675 = vmul.f32 %v664, %v671
  %v676 = vmul.f32 %v668, %v671
  %v677 = vadd.f32 %v629, %v673
  %v678 = vadd.f32 %v630, %v674
  %v679 = vadd.f32 %v631, %v675
  %v680 = vadd.f32 %v632, %v676
  %v681 = vlaneseq
  %v682 = vshrl.u32 %v681, 7
  %v683 = vsub.s32 1, %v682
  %v684 = vrot.slane %v17, %v683
  %v685 = vlaneseq
  %v686 = vshrl.u32 %v685, 7
  %v687 = vsub.s32 5, %v686
  %v688 = vrot.slane %v17, %v687
  %v689 = vlaneseq
  %v690 = vshrl.u32 %v689, 7
  %v691 = vsub.s32 1, %v690
  %v692 = vrot.slane %v18, %v691
  %v693 = vlaneseq
  %v694 = vshrl.u32 %v693, 7
  %v695 = vsub.s32 5, %v694
  %v696 = vrot.slane %v18, %v695
  %v701 = vlaneseq
  %v702 = vshrl.u32 %v701, 7
  %v703 = vsub.s32 1, %v702
  %v704 = vrot.slane %v684, %v703
  %v705 = vlaneseq
  %v706 = vshrl.u32 %v705, 7
  %v707 = vsub.s32 1, %v706
  %v708 = vrot.slane %v688, %v707
  %v709 = vlaneseq
  %v710 = vshrl.u32 %v709, 7
  %v711 = vsub.s32 1, %v710
  %v712 = vrot.slane %v692, %v711
  %v713 = vlaneseq
  %v714 = vshrl.u32 %v713, 7
  %v715 = vsub.s32 1, %v714
  %v716 = vrot.slane %v696, %v715
  %717 = vset.pattern.permute.xlu0 17
  %718 = vperm.xlu0 %717, %v19
  %v719 = vpop.permute.xlu0 %718
  %v721 = vmul.f32 %v704, %v719
  %v722 = vmul.f32 %v708, %v719
  %v723 = vmul.f32 %v712, %v719
  %v724 = vmul.f32 %v716, %v719
  %v725 = vadd.f32 %v677, %v721
  %v726 = vadd.f32 %v678, %v722
  %v727 = vadd.f32 %v679, %v723
  %v728 = vadd.f32 %v680, %v724
  %v729 = vlaneseq
  %v730 = vshrl.u32 %v729, 7
  %v731 = vsub.s32 2, %v730
  %v732 = vrot.slane %v17, %v731
  %v733 = vlaneseq
  %v734 = vshrl.u32 %v733, 7
  %v735 = vsub.s32 6, %v734
  %v736 = vrot.slane %v17, %v735
  %v737 = vlaneseq
  %v738 = vshrl.u32 %v737, 7
  %v739 = vsub.s32 2, %v738
  %v740 = vrot.slane %v18, %v739
  %v741 = vlaneseq
  %v742 = vshrl.u32 %v741, 7
  %v743 = vsub.s32 6, %v742
  %v744 = vrot.slane %v18, %v743
  %v749 = vlaneseq
  %v750 = vshrl.u32 %v749, 7
  %v751 = vsub.s32 2, %v750
  %v752 = vrot.slane %v732, %v751
  %v753 = vlaneseq
  %v754 = vshrl.u32 %v753, 7
  %v755 = vsub.s32 2, %v754
  %v756 = vrot.slane %v736, %v755
  %v757 = vlaneseq
  %v758 = vshrl.u32 %v757, 7
  %v759 = vsub.s32 2, %v758
  %v760 = vrot.slane %v740, %v759
  %v761 = vlaneseq
  %v762 = vshrl.u32 %v761, 7
  %v763 = vsub.s32 2, %v762
  %v764 = vrot.slane %v744, %v763
  %765 = vset.pattern.permute.xlu0 18
  %766 = vperm.xlu0 %765, %v19
  %v767 = vpop.permute.xlu0 %766
  %v769 = vmul.f32 %v752, %v767
  %v770 = vmul.f32 %v756, %v767
  %v771 = vmul.f32 %v760, %v767
  %v772 = vmul.f32 %v764, %v767
  %v773 = vadd.f32 %v725, %v769
  %v774 = vadd.f32 %v726, %v770
  %v775 = vadd.f32 %v727, %v771
  %v776 = vadd.f32 %v728, %v772
  %v777 = vlaneseq
  %v778 = vshrl.u32 %v777, 7
  %v779 = vsub.s32 3, %v778
  %v780 = vrot.slane %v17, %v779
  %v781 = vlaneseq
  %v782 = vshrl.u32 %v781, 7
  %v783 = vsub.s32 7, %v782
  %v784 = vrot.slane %v17, %v783
  %v785 = vlaneseq
  %v786 = vshrl.u32 %v785, 7
  %v787 = vsub.s32 3, %v786
  %v788 = vrot.slane %v18, %v787
  %v789 = vlaneseq
  %v790 = vshrl.u32 %v789, 7
  %v791 = vsub.s32 7, %v790
  %v792 = vrot.slane %v18, %v791
  %v797 = vlaneseq
  %v798 = vshrl.u32 %v797, 7
  %v799 = vsub.s32 3, %v798
  %v800 = vrot.slane %v780, %v799
  %v801 = vlaneseq
  %v802 = vshrl.u32 %v801, 7
  %v803 = vsub.s32 3, %v802
  %v804 = vrot.slane %v784, %v803
  %v805 = vlaneseq
  %v806 = vshrl.u32 %v805, 7
  %v807 = vsub.s32 3, %v806
  %v808 = vrot.slane %v788, %v807
  %v809 = vlaneseq
  %v810 = vshrl.u32 %v809, 7
  %v811 = vsub.s32 3, %v810
  %v812 = vrot.slane %v792, %v811
  %813 = vset.pattern.permute.xlu0 19
  %814 = vperm.xlu0 %813, %v19
  %v815 = vpop.permute.xlu0 %814
  %v817 = vmul.f32 %v800, %v815
  %v818 = vmul.f32 %v804, %v815
  %v819 = vmul.f32 %v808, %v815
  %v820 = vmul.f32 %v812, %v815
  %v821 = vadd.f32 %v773, %v817
  %v822 = vadd.f32 %v774, %v818
  %v823 = vadd.f32 %v775, %v819
  %v824 = vadd.f32 %v776, %v820
  %825 = vrot.lane.b32.xlu0 %v17, 127
  %v826 = vpop.permute.xlu0 %825
  %827 = vrot.lane.b32.xlu0 %v23, 127
  %v828 = vpop.permute.xlu0 %827
  %829 = vrot.lane.b32.xlu0 %v18, 127
  %v830 = vpop.permute.xlu0 %829
  %831 = vrot.lane.b32.xlu0 %v24, 127
  %v832 = vpop.permute.xlu0 %831
  %vm833 = vcmp.lt.s32.totalorder %v36, 127
  %v834 = vsel %vm833, %v830, %v832
  %v835 = vsel %vm833, %v828, %v830
  %v836 = vsel %vm833, %v826, %v828
  %v837 = vsel %vm833, %v832, %v826
  %s838 = scalar_lea.vmem %s1, 5
  %v839 = vld [vmem:[%s838] ss:$8 sm:$0xf]
  %v841 = vlaneseq
  %v842 = vshrl.u32 %v841, 7
  %v843 = vsub.s32 0, %v842
  %v844 = vrot.slane %v839, %v843
  %v845 = vlaneseq
  %v846 = vshrl.u32 %v845, 7
  %v847 = vsub.s32 1, %v846
  %v848 = vrot.slane %v839, %v847
  %v849 = vlaneseq
  %v850 = vshrl.u32 %v849, 7
  %v851 = vsub.s32 2, %v850
  %v852 = vrot.slane %v839, %v851
  %v853 = vlaneseq
  %v854 = vshrl.u32 %v853, 7
  %v855 = vsub.s32 3, %v854
  %v856 = vrot.slane %v839, %v855
  %v861 = vmul.f32 %v836, %v844
  %v862 = vmul.f32 %v835, %v848
  %v863 = vmul.f32 %v834, %v852
  %v864 = vmul.f32 %v837, %v856
  %v865 = vlaneseq
  %v866 = vshrl.u32 %v865, 7
  %v867 = vsub.s32 0, %v866
  %v868 = vrot.slane %v861, %v867
  %v869 = vlaneseq
  %v870 = vshrl.u32 %v869, 7
  %v871 = vsub.s32 0, %v870
  %v872 = vrot.slane %v862, %v871
  %v873 = vlaneseq
  %v874 = vshrl.u32 %v873, 7
  %v875 = vsub.s32 0, %v874
  %v876 = vrot.slane %v863, %v875
  %v877 = vlaneseq
  %v878 = vshrl.u32 %v877, 7
  %v879 = vsub.s32 0, %v878
  %v880 = vrot.slane %v864, %v879
  %881 = vset.pattern.permute.xlu0 20
  %882 = vperm.xlu0 %881, %v19
  %v883 = vpop.permute.xlu0 %882
  %v885 = vmul.f32 %v868, %v883
  %v886 = vmul.f32 %v872, %v883
  %v887 = vmul.f32 %v876, %v883
  %v888 = vmul.f32 %v880, %v883
  %v889 = vadd.f32 %v821, %v885
  %v890 = vadd.f32 %v822, %v886
  %v891 = vadd.f32 %v823, %v887
  %v892 = vadd.f32 %v824, %v888
  %v893 = vlaneseq
  %v894 = vshrl.u32 %v893, 7
  %v895 = vsub.s32 1, %v894
  %v896 = vrot.slane %v861, %v895
  %v897 = vlaneseq
  %v898 = vshrl.u32 %v897, 7
  %v899 = vsub.s32 1, %v898
  %v900 = vrot.slane %v862, %v899
  %v901 = vlaneseq
  %v902 = vshrl.u32 %v901, 7
  %v903 = vsub.s32 1, %v902
  %v904 = vrot.slane %v863, %v903
  %v905 = vlaneseq
  %v906 = vshrl.u32 %v905, 7
  %v907 = vsub.s32 1, %v906
  %v908 = vrot.slane %v864, %v907
  %909 = vset.pattern.permute.xlu0 21
  %910 = vperm.xlu0 %909, %v19
  %v911 = vpop.permute.xlu0 %910
  %v913 = vmul.f32 %v896, %v911
  %v914 = vmul.f32 %v900, %v911
  %v915 = vmul.f32 %v904, %v911
  %v916 = vmul.f32 %v908, %v911
  %v917 = vadd.f32 %v889, %v913
  %v918 = vadd.f32 %v890, %v914
  %v919 = vadd.f32 %v891, %v915
  %v920 = vadd.f32 %v892, %v916
  %v921 = vlaneseq
  %v922 = vshrl.u32 %v921, 7
  %v923 = vsub.s32 2, %v922
  %v924 = vrot.slane %v861, %v923
  %v925 = vlaneseq
  %v926 = vshrl.u32 %v925, 7
  %v927 = vsub.s32 2, %v926
  %v928 = vrot.slane %v862, %v927
  %v929 = vlaneseq
  %v930 = vshrl.u32 %v929, 7
  %v931 = vsub.s32 2, %v930
  %v932 = vrot.slane %v863, %v931
  %v933 = vlaneseq
  %v934 = vshrl.u32 %v933, 7
  %v935 = vsub.s32 2, %v934
  %v936 = vrot.slane %v864, %v935
  %937 = vset.pattern.permute.xlu0 22
  %938 = vperm.xlu0 %937, %v19
  %v939 = vpop.permute.xlu0 %938
  %v941 = vmul.f32 %v924, %v939
  %v942 = vmul.f32 %v928, %v939
  %v943 = vmul.f32 %v932, %v939
  %v944 = vmul.f32 %v936, %v939
  %v945 = vadd.f32 %v917, %v941
  %v946 = vadd.f32 %v918, %v942
  %v947 = vadd.f32 %v919, %v943
  %v948 = vadd.f32 %v920, %v944
  %v949 = vlaneseq
  %v950 = vshrl.u32 %v949, 7
  %v951 = vsub.s32 3, %v950
  %v952 = vrot.slane %v861, %v951
  %v953 = vlaneseq
  %v954 = vshrl.u32 %v953, 7
  %v955 = vsub.s32 3, %v954
  %v956 = vrot.slane %v862, %v955
  %v957 = vlaneseq
  %v958 = vshrl.u32 %v957, 7
  %v959 = vsub.s32 3, %v958
  %v960 = vrot.slane %v863, %v959
  %v961 = vlaneseq
  %v962 = vshrl.u32 %v961, 7
  %v963 = vsub.s32 3, %v962
  %v964 = vrot.slane %v864, %v963
  %965 = vset.pattern.permute.xlu0 23
  %966 = vperm.xlu0 %965, %v19
  %v967 = vpop.permute.xlu0 %966
  %v969 = vmul.f32 %v952, %v967
  %v970 = vmul.f32 %v956, %v967
  %v971 = vmul.f32 %v960, %v967
  %v972 = vmul.f32 %v964, %v967
  %v973 = vadd.f32 %v945, %v969
  %v974 = vadd.f32 %v946, %v970
  %v975 = vadd.f32 %v947, %v971
  %v976 = vadd.f32 %v948, %v972
  %977 = vrot.lane.b32.xlu0 %v17, 113
  %v978 = vpop.permute.xlu0 %977
  %979 = vrot.lane.b32.xlu0 %v23, 113
  %v980 = vpop.permute.xlu0 %979
  %981 = vrot.lane.b32.xlu0 %v18, 113
  %v982 = vpop.permute.xlu0 %981
  %983 = vrot.lane.b32.xlu0 %v24, 113
  %v984 = vpop.permute.xlu0 %983
  %vm985 = vcmp.lt.s32.totalorder %v36, 113
  %v986 = vsel %vm985, %v982, %v984
  %v987 = vsel %vm985, %v980, %v982
  %v988 = vsel %vm985, %v978, %v980
  %v989 = vsel %vm985, %v984, %v978
  %s990 = scalar_lea.vmem %s1, 6
  %v991 = vld [vmem:[%s990] ss:$8 sm:$0xf]
  %v993 = vlaneseq
  %v994 = vshrl.u32 %v993, 7
  %v995 = vsub.s32 0, %v994
  %v996 = vrot.slane %v991, %v995
  %v997 = vlaneseq
  %v998 = vshrl.u32 %v997, 7
  %v999 = vsub.s32 1, %v998
  %v1000 = vrot.slane %v991, %v999
  %v1001 = vlaneseq
  %v1002 = vshrl.u32 %v1001, 7
  %v1003 = vsub.s32 2, %v1002
  %v1004 = vrot.slane %v991, %v1003
  %v1005 = vlaneseq
  %v1006 = vshrl.u32 %v1005, 7
  %v1007 = vsub.s32 3, %v1006
  %v1008 = vrot.slane %v991, %v1007
  %v1013 = vmul.f32 %v988, %v996
  %v1014 = vmul.f32 %v987, %v1000
  %v1015 = vmul.f32 %v986, %v1004
  %v1016 = vmul.f32 %v989, %v1008
  %v1017 = vlaneseq
  %v1018 = vshrl.u32 %v1017, 7
  %v1019 = vsub.s32 0, %v1018
  %v1020 = vrot.slane %v1013, %v1019
  %v1021 = vlaneseq
  %v1022 = vshrl.u32 %v1021, 7
  %v1023 = vsub.s32 0, %v1022
  %v1024 = vrot.slane %v1014, %v1023
  %v1025 = vlaneseq
  %v1026 = vshrl.u32 %v1025, 7
  %v1027 = vsub.s32 0, %v1026
  %v1028 = vrot.slane %v1015, %v1027
  %v1029 = vlaneseq
  %v1030 = vshrl.u32 %v1029, 7
  %v1031 = vsub.s32 0, %v1030
  %v1032 = vrot.slane %v1016, %v1031
  %1033 = vset.pattern.permute.xlu0 24
  %1034 = vperm.xlu0 %1033, %v19
  %v1035 = vpop.permute.xlu0 %1034
  %v1037 = vmul.f32 %v1020, %v1035
  %v1038 = vmul.f32 %v1024, %v1035
  %v1039 = vmul.f32 %v1028, %v1035
  %v1040 = vmul.f32 %v1032, %v1035
  %v1041 = vadd.f32 %v973, %v1037
  %v1042 = vadd.f32 %v974, %v1038
  %v1043 = vadd.f32 %v975, %v1039
  %v1044 = vadd.f32 %v976, %v1040
  %v1045 = vlaneseq
  %v1046 = vshrl.u32 %v1045, 7
  %v1047 = vsub.s32 1, %v1046
  %v1048 = vrot.slane %v1013, %v1047
  %v1049 = vlaneseq
  %v1050 = vshrl.u32 %v1049, 7
  %v1051 = vsub.s32 1, %v1050
  %v1052 = vrot.slane %v1014, %v1051
  %v1053 = vlaneseq
  %v1054 = vshrl.u32 %v1053, 7
  %v1055 = vsub.s32 1, %v1054
  %v1056 = vrot.slane %v1015, %v1055
  %v1057 = vlaneseq
  %v1058 = vshrl.u32 %v1057, 7
  %v1059 = vsub.s32 1, %v1058
  %v1060 = vrot.slane %v1016, %v1059
  %1061 = vset.pattern.permute.xlu0 25
  %1062 = vperm.xlu0 %1061, %v19
  %v1063 = vpop.permute.xlu0 %1062
  %v1065 = vmul.f32 %v1048, %v1063
  %v1066 = vmul.f32 %v1052, %v1063
  %v1067 = vmul.f32 %v1056, %v1063
  %v1068 = vmul.f32 %v1060, %v1063
  %v1069 = vadd.f32 %v1041, %v1065
  %v1070 = vadd.f32 %v1042, %v1066
  %v1071 = vadd.f32 %v1043, %v1067
  %v1072 = vadd.f32 %v1044, %v1068
  %v1073 = vlaneseq
  %v1074 = vshrl.u32 %v1073, 7
  %v1075 = vsub.s32 2, %v1074
  %v1076 = vrot.slane %v1013, %v1075
  %v1077 = vlaneseq
  %v1078 = vshrl.u32 %v1077, 7
  %v1079 = vsub.s32 2, %v1078
  %v1080 = vrot.slane %v1014, %v1079
  %v1081 = vlaneseq
  %v1082 = vshrl.u32 %v1081, 7
  %v1083 = vsub.s32 2, %v1082
  %v1084 = vrot.slane %v1015, %v1083
  %v1085 = vlaneseq
  %v1086 = vshrl.u32 %v1085, 7
  %v1087 = vsub.s32 2, %v1086
  %v1088 = vrot.slane %v1016, %v1087
  %1089 = vset.pattern.permute.xlu0 26
  %1090 = vperm.xlu0 %1089, %v19
  %v1091 = vpop.permute.xlu0 %1090
  %v1093 = vmul.f32 %v1076, %v1091
  %v1094 = vmul.f32 %v1080, %v1091
  %v1095 = vmul.f32 %v1084, %v1091
  %v1096 = vmul.f32 %v1088, %v1091
  %v1097 = vadd.f32 %v1069, %v1093
  %v1098 = vadd.f32 %v1070, %v1094
  %v1099 = vadd.f32 %v1071, %v1095
  %v1100 = vadd.f32 %v1072, %v1096
  %v1101 = vlaneseq
  %v1102 = vshrl.u32 %v1101, 7
  %v1103 = vsub.s32 3, %v1102
  %v1104 = vrot.slane %v1013, %v1103
  %v1105 = vlaneseq
  %v1106 = vshrl.u32 %v1105, 7
  %v1107 = vsub.s32 3, %v1106
  %v1108 = vrot.slane %v1014, %v1107
  %v1109 = vlaneseq
  %v1110 = vshrl.u32 %v1109, 7
  %v1111 = vsub.s32 3, %v1110
  %v1112 = vrot.slane %v1015, %v1111
  %v1113 = vlaneseq
  %v1114 = vshrl.u32 %v1113, 7
  %v1115 = vsub.s32 3, %v1114
  %v1116 = vrot.slane %v1016, %v1115
  %1117 = vset.pattern.permute.xlu0 27
  %1118 = vperm.xlu0 %1117, %v19
  %v1119 = vpop.permute.xlu0 %1118
  %v1121 = vmul.f32 %v1104, %v1119
  %v1122 = vmul.f32 %v1108, %v1119
  %v1123 = vmul.f32 %v1112, %v1119
  %v1124 = vmul.f32 %v1116, %v1119
  %v1125 = vadd.f32 %v1097, %v1121
  %v1126 = vadd.f32 %v1098, %v1122
  %v1127 = vadd.f32 %v1099, %v1123
  %v1128 = vadd.f32 %v1100, %v1124
  %1129 = vrot.lane.b32.xlu0 %v17, 112
  %v1130 = vpop.permute.xlu0 %1129
  %1131 = vrot.lane.b32.xlu0 %v23, 112
  %v1132 = vpop.permute.xlu0 %1131
  %1133 = vrot.lane.b32.xlu0 %v18, 112
  %v1134 = vpop.permute.xlu0 %1133
  %1135 = vrot.lane.b32.xlu0 %v24, 112
  %v1136 = vpop.permute.xlu0 %1135
  %vm1137 = vcmp.lt.s32.totalorder %v36, 112
  %v1138 = vsel %vm1137, %v1134, %v1136
  %v1139 = vsel %vm1137, %v1132, %v1134
  %v1140 = vsel %vm1137, %v1130, %v1132
  %v1141 = vsel %vm1137, %v1136, %v1130
  %s1142 = scalar_lea.vmem %s1, 7
  %v1143 = vld [vmem:[%s1142] ss:$8 sm:$0xf]
  %v1145 = vlaneseq
  %v1146 = vshrl.u32 %v1145, 7
  %v1147 = vsub.s32 0, %v1146
  %v1148 = vrot.slane %v1143, %v1147
  %v1149 = vlaneseq
  %v1150 = vshrl.u32 %v1149, 7
  %v1151 = vsub.s32 1, %v1150
  %v1152 = vrot.slane %v1143, %v1151
  %v1153 = vlaneseq
  %v1154 = vshrl.u32 %v1153, 7
  %v1155 = vsub.s32 2, %v1154
  %v1156 = vrot.slane %v1143, %v1155
  %v1157 = vlaneseq
  %v1158 = vshrl.u32 %v1157, 7
  %v1159 = vsub.s32 3, %v1158
  %v1160 = vrot.slane %v1143, %v1159
  %v1165 = vmul.f32 %v1140, %v1148
  %v1166 = vmul.f32 %v1139, %v1152
  %v1167 = vmul.f32 %v1138, %v1156
  %v1168 = vmul.f32 %v1141, %v1160
  %v1169 = vlaneseq
  %v1170 = vshrl.u32 %v1169, 7
  %v1171 = vsub.s32 0, %v1170
  %v1172 = vrot.slane %v1165, %v1171
  %v1173 = vlaneseq
  %v1174 = vshrl.u32 %v1173, 7
  %v1175 = vsub.s32 0, %v1174
  %v1176 = vrot.slane %v1166, %v1175
  %v1177 = vlaneseq
  %v1178 = vshrl.u32 %v1177, 7
  %v1179 = vsub.s32 0, %v1178
  %v1180 = vrot.slane %v1167, %v1179
  %v1181 = vlaneseq
  %v1182 = vshrl.u32 %v1181, 7
  %v1183 = vsub.s32 0, %v1182
  %v1184 = vrot.slane %v1168, %v1183
  %1185 = vset.pattern.permute.xlu0 28
  %1186 = vperm.xlu0 %1185, %v19
  %v1187 = vpop.permute.xlu0 %1186
  %v1189 = vmul.f32 %v1172, %v1187
  %v1190 = vmul.f32 %v1176, %v1187
  %v1191 = vmul.f32 %v1180, %v1187
  %v1192 = vmul.f32 %v1184, %v1187
  %v1193 = vadd.f32 %v1125, %v1189
  %v1194 = vadd.f32 %v1126, %v1190
  %v1195 = vadd.f32 %v1127, %v1191
  %v1196 = vadd.f32 %v1128, %v1192
  %v1197 = vlaneseq
  %v1198 = vshrl.u32 %v1197, 7
  %v1199 = vsub.s32 1, %v1198
  %v1200 = vrot.slane %v1165, %v1199
  %v1201 = vlaneseq
  %v1202 = vshrl.u32 %v1201, 7
  %v1203 = vsub.s32 1, %v1202
  %v1204 = vrot.slane %v1166, %v1203
  %v1205 = vlaneseq
  %v1206 = vshrl.u32 %v1205, 7
  %v1207 = vsub.s32 1, %v1206
  %v1208 = vrot.slane %v1167, %v1207
  %v1209 = vlaneseq
  %v1210 = vshrl.u32 %v1209, 7
  %v1211 = vsub.s32 1, %v1210
  %v1212 = vrot.slane %v1168, %v1211
  %1213 = vset.pattern.permute.xlu0 29
  %1214 = vperm.xlu0 %1213, %v19
  %v1215 = vpop.permute.xlu0 %1214
  %v1217 = vmul.f32 %v1200, %v1215
  %v1218 = vmul.f32 %v1204, %v1215
  %v1219 = vmul.f32 %v1208, %v1215
  %v1220 = vmul.f32 %v1212, %v1215
  %v1221 = vadd.f32 %v1193, %v1217
  %v1222 = vadd.f32 %v1194, %v1218
  %v1223 = vadd.f32 %v1195, %v1219
  %v1224 = vadd.f32 %v1196, %v1220
  %v1225 = vlaneseq
  %v1226 = vshrl.u32 %v1225, 7
  %v1227 = vsub.s32 2, %v1226
  %v1228 = vrot.slane %v1165, %v1227
  %v1229 = vlaneseq
  %v1230 = vshrl.u32 %v1229, 7
  %v1231 = vsub.s32 2, %v1230
  %v1232 = vrot.slane %v1166, %v1231
  %v1233 = vlaneseq
  %v1234 = vshrl.u32 %v1233, 7
  %v1235 = vsub.s32 2, %v1234
  %v1236 = vrot.slane %v1167, %v1235
  %v1237 = vlaneseq
  %v1238 = vshrl.u32 %v1237, 7
  %v1239 = vsub.s32 2, %v1238
  %v1240 = vrot.slane %v1168, %v1239
  %1241 = vset.pattern.permute.xlu0 30
  %1242 = vperm.xlu0 %1241, %v19
  %v1243 = vpop.permute.xlu0 %1242
  %v1245 = vmul.f32 %v1228, %v1243
  %v1246 = vmul.f32 %v1232, %v1243
  %v1247 = vmul.f32 %v1236, %v1243
  %v1248 = vmul.f32 %v1240, %v1243
  %v1249 = vadd.f32 %v1221, %v1245
  %v1250 = vadd.f32 %v1222, %v1246
  %v1251 = vadd.f32 %v1223, %v1247
  %v1252 = vadd.f32 %v1224, %v1248
  %v1253 = vlaneseq
  %v1254 = vshrl.u32 %v1253, 7
  %v1255 = vsub.s32 3, %v1254
  %v1256 = vrot.slane %v1165, %v1255
  %v1257 = vlaneseq
  %v1258 = vshrl.u32 %v1257, 7
  %v1259 = vsub.s32 3, %v1258
  %v1260 = vrot.slane %v1166, %v1259
  %v1261 = vlaneseq
  %v1262 = vshrl.u32 %v1261, 7
  %v1263 = vsub.s32 3, %v1262
  %v1264 = vrot.slane %v1167, %v1263
  %v1265 = vlaneseq
  %v1266 = vshrl.u32 %v1265, 7
  %v1267 = vsub.s32 3, %v1266
  %v1268 = vrot.slane %v1168, %v1267
  %1269 = vset.pattern.permute.xlu0 31
  %1270 = vperm.xlu0 %1269, %v19
  %v1271 = vpop.permute.xlu0 %1270
  %v1273 = vmul.f32 %v1256, %v1271
  %v1274 = vmul.f32 %v1260, %v1271
  %v1275 = vmul.f32 %v1264, %v1271
  %v1276 = vmul.f32 %v1268, %v1271
  %v1277 = vadd.f32 %v1249, %v1273
  %v1278 = vadd.f32 %v1250, %v1274
  %v1279 = vadd.f32 %v1251, %v1275
  %v1280 = vadd.f32 %v1252, %v1276
  %1281 = vrot.lane.b32.xlu0 %v17, 111
  %v1282 = vpop.permute.xlu0 %1281
  %1283 = vrot.lane.b32.xlu0 %v23, 111
  %v1284 = vpop.permute.xlu0 %1283
  %1285 = vrot.lane.b32.xlu0 %v18, 111
  %v1286 = vpop.permute.xlu0 %1285
  %1287 = vrot.lane.b32.xlu0 %v24, 111
  %v1288 = vpop.permute.xlu0 %1287
  %vm1289 = vcmp.lt.s32.totalorder %v36, 111
  %v1290 = vsel %vm1289, %v1286, %v1288
  %v1291 = vsel %vm1289, %v1284, %v1286
  %v1292 = vsel %vm1289, %v1282, %v1284
  %v1293 = vsel %vm1289, %v1288, %v1282
  %s1294 = scalar_lea.vmem %s1, 32
  %v1295 = vld [vmem:[%s1294] ss:$8 sm:$0xf]
  %v1297 = vlaneseq
  %v1298 = vshrl.u32 %v1297, 7
  %v1299 = vsub.s32 0, %v1298
  %v1300 = vrot.slane %v1295, %v1299
  %v1301 = vlaneseq
  %v1302 = vshrl.u32 %v1301, 7
  %v1303 = vsub.s32 1, %v1302
  %v1304 = vrot.slane %v1295, %v1303
  %v1305 = vlaneseq
  %v1306 = vshrl.u32 %v1305, 7
  %v1307 = vsub.s32 2, %v1306
  %v1308 = vrot.slane %v1295, %v1307
  %v1309 = vlaneseq
  %v1310 = vshrl.u32 %v1309, 7
  %v1311 = vsub.s32 3, %v1310
  %v1312 = vrot.slane %v1295, %v1311
  %v1317 = vmul.f32 %v1292, %v1300
  %v1318 = vmul.f32 %v1291, %v1304
  %v1319 = vmul.f32 %v1290, %v1308
  %v1320 = vmul.f32 %v1293, %v1312
  %v1321 = vlaneseq
  %v1322 = vshrl.u32 %v1321, 7
  %v1323 = vsub.s32 0, %v1322
  %v1324 = vrot.slane %v1317, %v1323
  %v1325 = vlaneseq
  %v1326 = vshrl.u32 %v1325, 7
  %v1327 = vsub.s32 0, %v1326
  %v1328 = vrot.slane %v1318, %v1327
  %v1329 = vlaneseq
  %v1330 = vshrl.u32 %v1329, 7
  %v1331 = vsub.s32 0, %v1330
  %v1332 = vrot.slane %v1319, %v1331
  %v1333 = vlaneseq
  %v1334 = vshrl.u32 %v1333, 7
  %v1335 = vsub.s32 0, %v1334
  %v1336 = vrot.slane %v1320, %v1335
  %1337 = vset.pattern.permute.xlu0 32
  %1338 = vperm.xlu0 %1337, %v19
  %v1339 = vpop.permute.xlu0 %1338
  %v1341 = vmul.f32 %v1324, %v1339
  %v1342 = vmul.f32 %v1328, %v1339
  %v1343 = vmul.f32 %v1332, %v1339
  %v1344 = vmul.f32 %v1336, %v1339
  %v1345 = vadd.f32 %v1277, %v1341
  %v1346 = vadd.f32 %v1278, %v1342
  %v1347 = vadd.f32 %v1279, %v1343
  %v1348 = vadd.f32 %v1280, %v1344
  %v1349 = vlaneseq
  %v1350 = vshrl.u32 %v1349, 7
  %v1351 = vsub.s32 1, %v1350
  %v1352 = vrot.slane %v1317, %v1351
  %v1353 = vlaneseq
  %v1354 = vshrl.u32 %v1353, 7
  %v1355 = vsub.s32 1, %v1354
  %v1356 = vrot.slane %v1318, %v1355
  %v1357 = vlaneseq
  %v1358 = vshrl.u32 %v1357, 7
  %v1359 = vsub.s32 1, %v1358
  %v1360 = vrot.slane %v1319, %v1359
  %v1361 = vlaneseq
  %v1362 = vshrl.u32 %v1361, 7
  %v1363 = vsub.s32 1, %v1362
  %v1364 = vrot.slane %v1320, %v1363
  %1365 = vset.pattern.permute.xlu0 33
  %1366 = vperm.xlu0 %1365, %v19
  %v1367 = vpop.permute.xlu0 %1366
  %v1369 = vmul.f32 %v1352, %v1367
  %v1370 = vmul.f32 %v1356, %v1367
  %v1371 = vmul.f32 %v1360, %v1367
  %v1372 = vmul.f32 %v1364, %v1367
  %v1373 = vadd.f32 %v1345, %v1369
  %v1374 = vadd.f32 %v1346, %v1370
  %v1375 = vadd.f32 %v1347, %v1371
  %v1376 = vadd.f32 %v1348, %v1372
  %v1377 = vlaneseq
  %v1378 = vshrl.u32 %v1377, 7
  %v1379 = vsub.s32 2, %v1378
  %v1380 = vrot.slane %v1317, %v1379
  %v1381 = vlaneseq
  %v1382 = vshrl.u32 %v1381, 7
  %v1383 = vsub.s32 2, %v1382
  %v1384 = vrot.slane %v1318, %v1383
  %v1385 = vlaneseq
  %v1386 = vshrl.u32 %v1385, 7
  %v1387 = vsub.s32 2, %v1386
  %v1388 = vrot.slane %v1319, %v1387
  %v1389 = vlaneseq
  %v1390 = vshrl.u32 %v1389, 7
  %v1391 = vsub.s32 2, %v1390
  %v1392 = vrot.slane %v1320, %v1391
  %1393 = vset.pattern.permute.xlu0 34
  %1394 = vperm.xlu0 %1393, %v19
  %v1395 = vpop.permute.xlu0 %1394
  %v1397 = vmul.f32 %v1380, %v1395
  %v1398 = vmul.f32 %v1384, %v1395
  %v1399 = vmul.f32 %v1388, %v1395
  %v1400 = vmul.f32 %v1392, %v1395
  %v1401 = vadd.f32 %v1373, %v1397
  %v1402 = vadd.f32 %v1374, %v1398
  %v1403 = vadd.f32 %v1375, %v1399
  %v1404 = vadd.f32 %v1376, %v1400
  %v1405 = vlaneseq
  %v1406 = vshrl.u32 %v1405, 7
  %v1407 = vsub.s32 3, %v1406
  %v1408 = vrot.slane %v1317, %v1407
  %v1409 = vlaneseq
  %v1410 = vshrl.u32 %v1409, 7
  %v1411 = vsub.s32 3, %v1410
  %v1412 = vrot.slane %v1318, %v1411
  %v1413 = vlaneseq
  %v1414 = vshrl.u32 %v1413, 7
  %v1415 = vsub.s32 3, %v1414
  %v1416 = vrot.slane %v1319, %v1415
  %v1417 = vlaneseq
  %v1418 = vshrl.u32 %v1417, 7
  %v1419 = vsub.s32 3, %v1418
  %v1420 = vrot.slane %v1320, %v1419
  %1421 = vset.pattern.permute.xlu0 35
  %1422 = vperm.xlu0 %1421, %v19
  %v1423 = vpop.permute.xlu0 %1422
  %v1425 = vmul.f32 %v1408, %v1423
  %v1426 = vmul.f32 %v1412, %v1423
  %v1427 = vmul.f32 %v1416, %v1423
  %v1428 = vmul.f32 %v1420, %v1423
  %v1429 = vadd.f32 %v1401, %v1425
  %v1430 = vadd.f32 %v1402, %v1426
  %v1431 = vadd.f32 %v1403, %v1427
  %v1432 = vadd.f32 %v1404, %v1428
  %1434 = vset.pattern.permute.xlu0 0
  %1435 = vperm.xlu0 %1434, %v20
  %v1436 = vpop.permute.xlu0 %1435
  %v1438 = vadd.f32 %v1429, %v1436
  %v1439 = vadd.f32 %v1430, %v1436
  %v1440 = vadd.f32 %v1431, %v1436
  %v1441 = vadd.f32 %v1432, %v1436
  %v1442 = vmax.f32 %v1438, 0.0
  %v1443 = vmax.f32 %v1439, 0.0
  %v1444 = vmax.f32 %v1440, 0.0
  %v1445 = vmax.f32 %v1441, 0.0
  %1446 = vrot.lane.b32.xlu0 %v1442, 17
  %v1447 = vpop.permute.xlu0 %1446
  %1448 = vrot.lane.b32.xlu0 %v1443, 17
  %v1449 = vpop.permute.xlu0 %1448
  %1450 = vrot.lane.b32.xlu0 %v1444, 17
  %v1451 = vpop.permute.xlu0 %1450
  %1452 = vrot.lane.b32.xlu0 %v1445, 17
  %v1453 = vpop.permute.xlu0 %1452
  %v1454 = vsel %vm37, %v1451, %v1453
  %v1455 = vsel %vm37, %v1449, %v1451
  %v1456 = vsel %vm37, %v1447, %v1449
  %v1457 = vsel %vm37, %v1453, %v1447
  %v1458 = vmul.f32 %v1457, %v47
  %v1459 = vmul.f32 %v1456, %v51
  %v1460 = vmul.f32 %v1455, %v55
  %v1461 = vmul.f32 %v1454, %v59
  %1462 = vset.pattern.permute.xlu0 36
  %1463 = vperm.xlu0 %1462, %v19
  %v1464 = vpop.permute.xlu0 %1463
  %v1466 = vmul.f32 %v1458, %v1464
  %v1467 = vmul.f32 %v1459, %v1464
  %v1468 = vmul.f32 %v1460, %v1464
  %v1469 = vmul.f32 %v1461, %v1464
  %1470 = vrot.lane.b32.xlu0 %v1442, 16
  %v1471 = vpop.permute.xlu0 %1470
  %1472 = vrot.lane.b32.xlu0 %v1443, 16
  %v1473 = vpop.permute.xlu0 %1472
  %1474 = vrot.lane.b32.xlu0 %v1444, 16
  %v1475 = vpop.permute.xlu0 %1474
  %1476 = vrot.lane.b32.xlu0 %v1445, 16
  %v1477 = vpop.permute.xlu0 %1476
  %v1478 = vsel %vm185, %v1475, %v1477
  %v1479 = vsel %vm185, %v1473, %v1475
  %v1480 = vsel %vm185, %v1471, %v1473
  %v1481 = vsel %vm185, %v1477, %v1471
  %v1482 = vmul.f32 %v1481, %v196
  %v1483 = vmul.f32 %v1480, %v200
  %v1484 = vmul.f32 %v1479, %v204
  %v1485 = vmul.f32 %v1478, %v208
  %1486 = vset.pattern.permute.xlu0 37
  %1487 = vperm.xlu0 %1486, %v19
  %v1488 = vpop.permute.xlu0 %1487
  %v1490 = vmul.f32 %v1482, %v1488
  %v1491 = vmul.f32 %v1483, %v1488
  %v1492 = vmul.f32 %v1484, %v1488
  %v1493 = vmul.f32 %v1485, %v1488
  %v1494 = vadd.f32 %v1466, %v1490
  %v1495 = vadd.f32 %v1467, %v1491
  %v1496 = vadd.f32 %v1468, %v1492
  %v1497 = vadd.f32 %v1469, %v1493
  %1498 = vrot.lane.b32.xlu0 %v1442, 15
  %v1499 = vpop.permute.xlu0 %1498
  %1500 = vrot.lane.b32.xlu0 %v1443, 15
  %v1501 = vpop.permute.xlu0 %1500
  %1502 = vrot.lane.b32.xlu0 %v1444, 15
  %v1503 = vpop.permute.xlu0 %1502
  %1504 = vrot.lane.b32.xlu0 %v1445, 15
  %v1505 = vpop.permute.xlu0 %1504
  %v1506 = vsel %vm337, %v1503, %v1505
  %v1507 = vsel %vm337, %v1501, %v1503
  %v1508 = vsel %vm337, %v1499, %v1501
  %v1509 = vsel %vm337, %v1505, %v1499
  %v1510 = vmul.f32 %v1509, %v348
  %v1511 = vmul.f32 %v1508, %v352
  %v1512 = vmul.f32 %v1507, %v356
  %v1513 = vmul.f32 %v1506, %v360
  %1514 = vset.pattern.permute.xlu0 38
  %1515 = vperm.xlu0 %1514, %v19
  %v1516 = vpop.permute.xlu0 %1515
  %v1518 = vmul.f32 %v1510, %v1516
  %v1519 = vmul.f32 %v1511, %v1516
  %v1520 = vmul.f32 %v1512, %v1516
  %v1521 = vmul.f32 %v1513, %v1516
  %v1522 = vadd.f32 %v1494, %v1518
  %v1523 = vadd.f32 %v1495, %v1519
  %v1524 = vadd.f32 %v1496, %v1520
  %v1525 = vadd.f32 %v1497, %v1521
  %1526 = vrot.lane.b32.xlu0 %v1442, 1
  %v1527 = vpop.permute.xlu0 %1526
  %1528 = vrot.lane.b32.xlu0 %v1443, 1
  %v1529 = vpop.permute.xlu0 %1528
  %1530 = vrot.lane.b32.xlu0 %v1444, 1
  %v1531 = vpop.permute.xlu0 %1530
  %1532 = vrot.lane.b32.xlu0 %v1445, 1
  %v1533 = vpop.permute.xlu0 %1532
  %v1534 = vsel %vm489, %v1531, %v1533
  %v1535 = vsel %vm489, %v1529, %v1531
  %v1536 = vsel %vm489, %v1527, %v1529
  %v1537 = vsel %vm489, %v1533, %v1527
  %v1538 = vmul.f32 %v1537, %v500
  %v1539 = vmul.f32 %v1536, %v504
  %v1540 = vmul.f32 %v1535, %v508
  %v1541 = vmul.f32 %v1534, %v512
  %1542 = vset.pattern.permute.xlu0 39
  %1543 = vperm.xlu0 %1542, %v19
  %v1544 = vpop.permute.xlu0 %1543
  %v1546 = vmul.f32 %v1538, %v1544
  %v1547 = vmul.f32 %v1539, %v1544
  %v1548 = vmul.f32 %v1540, %v1544
  %v1549 = vmul.f32 %v1541, %v1544
  %v1550 = vadd.f32 %v1522, %v1546
  %v1551 = vadd.f32 %v1523, %v1547
  %v1552 = vadd.f32 %v1524, %v1548
  %v1553 = vadd.f32 %v1525, %v1549
  %1554 = vset.pattern.permute.xlu0 40
  %1555 = vperm.xlu0 %1554, %v19
  %v1556 = vpop.permute.xlu0 %1555
  %v1558 = vmul.f32 %v1442, %v1556
  %v1559 = vmul.f32 %v1443, %v1556
  %v1560 = vmul.f32 %v1444, %v1556
  %v1561 = vmul.f32 %v1445, %v1556
  %v1562 = vadd.f32 %v1550, %v1558
  %v1563 = vadd.f32 %v1551, %v1559
  %v1564 = vadd.f32 %v1552, %v1560
  %v1565 = vadd.f32 %v1553, %v1561
  %1566 = vrot.lane.b32.xlu0 %v1442, 127
  %v1567 = vpop.permute.xlu0 %1566
  %1568 = vrot.lane.b32.xlu0 %v1443, 127
  %v1569 = vpop.permute.xlu0 %1568
  %1570 = vrot.lane.b32.xlu0 %v1444, 127
  %v1571 = vpop.permute.xlu0 %1570
  %1572 = vrot.lane.b32.xlu0 %v1445, 127
  %v1573 = vpop.permute.xlu0 %1572
  %v1574 = vsel %vm833, %v1571, %v1573
  %v1575 = vsel %vm833, %v1569, %v1571
  %v1576 = vsel %vm833, %v1567, %v1569
  %v1577 = vsel %vm833, %v1573, %v1567
  %v1578 = vmul.f32 %v1576, %v844
  %v1579 = vmul.f32 %v1575, %v848
  %v1580 = vmul.f32 %v1574, %v852
  %v1581 = vmul.f32 %v1577, %v856
  %1582 = vset.pattern.permute.xlu0 41
  %1583 = vperm.xlu0 %1582, %v19
  %v1584 = vpop.permute.xlu0 %1583
  %v1586 = vmul.f32 %v1578, %v1584
  %v1587 = vmul.f32 %v1579, %v1584
  %v1588 = vmul.f32 %v1580, %v1584
  %v1589 = vmul.f32 %v1581, %v1584
  %v1590 = vadd.f32 %v1562, %v1586
  %v1591 = vadd.f32 %v1563, %v1587
  %v1592 = vadd.f32 %v1564, %v1588
  %v1593 = vadd.f32 %v1565, %v1589
  %1594 = vrot.lane.b32.xlu0 %v1442, 113
  %v1595 = vpop.permute.xlu0 %1594
  %1596 = vrot.lane.b32.xlu0 %v1443, 113
  %v1597 = vpop.permute.xlu0 %1596
  %1598 = vrot.lane.b32.xlu0 %v1444, 113
  %v1599 = vpop.permute.xlu0 %1598
  %1600 = vrot.lane.b32.xlu0 %v1445, 113
  %v1601 = vpop.permute.xlu0 %1600
  %v1602 = vsel %vm985, %v1599, %v1601
  %v1603 = vsel %vm985, %v1597, %v1599
  %v1604 = vsel %vm985, %v1595, %v1597
  %v1605 = vsel %vm985, %v1601, %v1595
  %v1606 = vmul.f32 %v1604, %v996
  %v1607 = vmul.f32 %v1603, %v1000
  %v1608 = vmul.f32 %v1602, %v1004
  %v1609 = vmul.f32 %v1605, %v1008
  %1610 = vset.pattern.permute.xlu0 42
  %1611 = vperm.xlu0 %1610, %v19
  %v1612 = vpop.permute.xlu0 %1611
  %v1614 = vmul.f32 %v1606, %v1612
  %v1615 = vmul.f32 %v1607, %v1612
  %v1616 = vmul.f32 %v1608, %v1612
  %v1617 = vmul.f32 %v1609, %v1612
  %v1618 = vadd.f32 %v1590, %v1614
  %v1619 = vadd.f32 %v1591, %v1615
  %v1620 = vadd.f32 %v1592, %v1616
  %v1621 = vadd.f32 %v1593, %v1617
  %1622 = vrot.lane.b32.xlu0 %v1442, 112
  %v1623 = vpop.permute.xlu0 %1622
  %1624 = vrot.lane.b32.xlu0 %v1443, 112
  %v1625 = vpop.permute.xlu0 %1624
  %1626 = vrot.lane.b32.xlu0 %v1444, 112
  %v1627 = vpop.permute.xlu0 %1626
  %1628 = vrot.lane.b32.xlu0 %v1445, 112
  %v1629 = vpop.permute.xlu0 %1628
  %v1630 = vsel %vm1137, %v1627, %v1629
  %v1631 = vsel %vm1137, %v1625, %v1627
  %v1632 = vsel %vm1137, %v1623, %v1625
  %v1633 = vsel %vm1137, %v1629, %v1623
  %v1634 = vmul.f32 %v1632, %v1148
  %v1635 = vmul.f32 %v1631, %v1152
  %v1636 = vmul.f32 %v1630, %v1156
  %v1637 = vmul.f32 %v1633, %v1160
  %1638 = vset.pattern.permute.xlu0 43
  %1639 = vperm.xlu0 %1638, %v19
  %v1640 = vpop.permute.xlu0 %1639
  %v1642 = vmul.f32 %v1634, %v1640
  %v1643 = vmul.f32 %v1635, %v1640
  %v1644 = vmul.f32 %v1636, %v1640
  %v1645 = vmul.f32 %v1637, %v1640
  %v1646 = vadd.f32 %v1618, %v1642
  %v1647 = vadd.f32 %v1619, %v1643
  %v1648 = vadd.f32 %v1620, %v1644
  %v1649 = vadd.f32 %v1621, %v1645
  %1650 = vrot.lane.b32.xlu0 %v1442, 111
  %v1651 = vpop.permute.xlu0 %1650
  %1652 = vrot.lane.b32.xlu0 %v1443, 111
  %v1653 = vpop.permute.xlu0 %1652
  %1654 = vrot.lane.b32.xlu0 %v1444, 111
  %v1655 = vpop.permute.xlu0 %1654
  %1656 = vrot.lane.b32.xlu0 %v1445, 111
  %v1657 = vpop.permute.xlu0 %1656
  %v1658 = vsel %vm1289, %v1655, %v1657
  %v1659 = vsel %vm1289, %v1653, %v1655
  %v1660 = vsel %vm1289, %v1651, %v1653
  %v1661 = vsel %vm1289, %v1657, %v1651
  %v1662 = vmul.f32 %v1660, %v1300
  %v1663 = vmul.f32 %v1659, %v1304
  %v1664 = vmul.f32 %v1658, %v1308
  %v1665 = vmul.f32 %v1661, %v1312
  %1666 = vset.pattern.permute.xlu0 44
  %1667 = vperm.xlu0 %1666, %v19
  %v1668 = vpop.permute.xlu0 %1667
  %v1670 = vmul.f32 %v1662, %v1668
  %v1671 = vmul.f32 %v1663, %v1668
  %v1672 = vmul.f32 %v1664, %v1668
  %v1673 = vmul.f32 %v1665, %v1668
  %v1674 = vadd.f32 %v1646, %v1670
  %v1675 = vadd.f32 %v1647, %v1671
  %v1676 = vadd.f32 %v1648, %v1672
  %v1677 = vadd.f32 %v1649, %v1673
  %1678 = vset.pattern.permute.xlu0 1
  %1679 = vperm.xlu0 %1678, %v20
  %v1680 = vpop.permute.xlu0 %1679
  %v1682 = vadd.f32 %v1674, %v1680
  %v1683 = vadd.f32 %v1675, %v1680
  %v1684 = vadd.f32 %v1676, %v1680
  %v1685 = vadd.f32 %v1677, %v1680
  %v1686 = vmax.f32 %v1682, 0.0
  %v1687 = vmax.f32 %v1683, 0.0
  %v1688 = vmax.f32 %v1684, 0.0
  %v1689 = vmax.f32 %v1685, 0.0
  %1690 = vset.pattern.permute.xlu0 4
  %1691 = vperm.xlu0 %1690, %v20
  %v1692 = vpop.permute.xlu0 %1691
  %v1694 = vmul.f32 %v1442, %v1692
  %v1695 = vmul.f32 %v1443, %v1692
  %v1696 = vmul.f32 %v1444, %v1692
  %v1697 = vmul.f32 %v1445, %v1692
  %1698 = vset.pattern.permute.xlu0 5
  %1699 = vperm.xlu0 %1698, %v20
  %v1700 = vpop.permute.xlu0 %1699
  %v1702 = vadd.f32 %v1694, %v1700
  %v1703 = vadd.f32 %v1695, %v1700
  %v1704 = vadd.f32 %v1696, %v1700
  %v1705 = vadd.f32 %v1697, %v1700
  %v1706 = vmax.f32 %v1702, 0.0
  %v1707 = vmax.f32 %v1703, 0.0
  %v1708 = vmax.f32 %v1704, 0.0
  %v1709 = vmax.f32 %v1705, 0.0
  %v1710 = vrot.slane %v1692, 2
  %v1712 = vmul.f32 %v1686, %v1710
  %v1713 = vmul.f32 %v1687, %v1710
  %v1714 = vmul.f32 %v1688, %v1710
  %v1715 = vmul.f32 %v1689, %v1710
  %v1716 = vrot.slane %v1700, 2
  %v1718 = vadd.f32 %v1712, %v1716
  %v1719 = vadd.f32 %v1713, %v1716
  %v1720 = vadd.f32 %v1714, %v1716
  %v1721 = vadd.f32 %v1715, %v1716
  %v1722 = vmax.f32 %v1718, 0.0
  %v1723 = vmax.f32 %v1719, 0.0
  %v1724 = vmax.f32 %v1720, 0.0
  %v1725 = vmax.f32 %v1721, 0.0
  %1726 = vrot.lane.b32.xlu0 %v1706, 17
  %v1727 = vpop.permute.xlu0 %1726
  %1728 = vrot.lane.b32.xlu0 %v1707, 17
  %v1729 = vpop.permute.xlu0 %1728
  %1730 = vrot.lane.b32.xlu0 %v1708, 17
  %v1731 = vpop.permute.xlu0 %1730
  %1732 = vrot.lane.b32.xlu0 %v1709, 17
  %v1733 = vpop.permute.xlu0 %1732
  %v1734 = vsel %vm37, %v1731, %v1733
  %v1735 = vsel %vm37, %v1729, %v1731
  %v1736 = vsel %vm37, %v1727, %v1729
  %v1737 = vsel %vm37, %v1733, %v1727
  %v1738 = vmul.f32 %v1737, %v47
  %v1739 = vmul.f32 %v1736, %v51
  %v1740 = vmul.f32 %v1735, %v55
  %v1741 = vmul.f32 %v1734, %v59
  %v1742 = vlaneseq
  %v1743 = vshrl.u32 %v1742, 7
  %v1744 = vsub.s32 0, %v1743
  %v1745 = vrot.slane %v1738, %v1744
  %v1746 = vlaneseq
  %v1747 = vshrl.u32 %v1746, 7
  %v1748 = vsub.s32 0, %v1747
  %v1749 = vrot.slane %v1739, %v1748
  %v1750 = vlaneseq
  %v1751 = vshrl.u32 %v1750, 7
  %v1752 = vsub.s32 0, %v1751
  %v1753 = vrot.slane %v1740, %v1752
  %v1754 = vlaneseq
  %v1755 = vshrl.u32 %v1754, 7
  %v1756 = vsub.s32 0, %v1755
  %v1757 = vrot.slane %v1741, %v1756
  %1758 = vset.pattern.permute.xlu0 45
  %1759 = vperm.xlu0 %1758, %v19
  %v1760 = vpop.permute.xlu0 %1759
  %v1762 = vmul.f32 %v1745, %v1760
  %v1763 = vmul.f32 %v1749, %v1760
  %v1764 = vmul.f32 %v1753, %v1760
  %v1765 = vmul.f32 %v1757, %v1760
  %v1766 = vlaneseq
  %v1767 = vshrl.u32 %v1766, 7
  %v1768 = vsub.s32 1, %v1767
  %v1769 = vrot.slane %v1738, %v1768
  %v1770 = vlaneseq
  %v1771 = vshrl.u32 %v1770, 7
  %v1772 = vsub.s32 1, %v1771
  %v1773 = vrot.slane %v1739, %v1772
  %v1774 = vlaneseq
  %v1775 = vshrl.u32 %v1774, 7
  %v1776 = vsub.s32 1, %v1775
  %v1777 = vrot.slane %v1740, %v1776
  %v1778 = vlaneseq
  %v1779 = vshrl.u32 %v1778, 7
  %v1780 = vsub.s32 1, %v1779
  %v1781 = vrot.slane %v1741, %v1780
  %1782 = vset.pattern.permute.xlu0 46
  %1783 = vperm.xlu0 %1782, %v19
  %v1784 = vpop.permute.xlu0 %1783
  %v1786 = vmul.f32 %v1769, %v1784
  %v1787 = vmul.f32 %v1773, %v1784
  %v1788 = vmul.f32 %v1777, %v1784
  %v1789 = vmul.f32 %v1781, %v1784
  %v1790 = vadd.f32 %v1762, %v1786
  %v1791 = vadd.f32 %v1763, %v1787
  %v1792 = vadd.f32 %v1764, %v1788
  %v1793 = vadd.f32 %v1765, %v1789
  %1794 = vrot.lane.b32.xlu0 %v1706, 16
  %v1795 = vpop.permute.xlu0 %1794
  %1796 = vrot.lane.b32.xlu0 %v1707, 16
  %v1797 = vpop.permute.xlu0 %1796
  %1798 = vrot.lane.b32.xlu0 %v1708, 16
  %v1799 = vpop.permute.xlu0 %1798
  %1800 = vrot.lane.b32.xlu0 %v1709, 16
  %v1801 = vpop.permute.xlu0 %1800
  %v1802 = vsel %vm185, %v1799, %v1801
  %v1803 = vsel %vm185, %v1797, %v1799
  %v1804 = vsel %vm185, %v1795, %v1797
  %v1805 = vsel %vm185, %v1801, %v1795
  %v1806 = vmul.f32 %v1805, %v196
  %v1807 = vmul.f32 %v1804, %v200
  %v1808 = vmul.f32 %v1803, %v204
  %v1809 = vmul.f32 %v1802, %v208
  %v1810 = vlaneseq
  %v1811 = vshrl.u32 %v1810, 7
  %v1812 = vsub.s32 0, %v1811
  %v1813 = vrot.slane %v1806, %v1812
  %v1814 = vlaneseq
  %v1815 = vshrl.u32 %v1814, 7
  %v1816 = vsub.s32 0, %v1815
  %v1817 = vrot.slane %v1807, %v1816
  %v1818 = vlaneseq
  %v1819 = vshrl.u32 %v1818, 7
  %v1820 = vsub.s32 0, %v1819
  %v1821 = vrot.slane %v1808, %v1820
  %v1822 = vlaneseq
  %v1823 = vshrl.u32 %v1822, 7
  %v1824 = vsub.s32 0, %v1823
  %v1825 = vrot.slane %v1809, %v1824
  %1826 = vset.pattern.permute.xlu0 49
  %1827 = vperm.xlu0 %1826, %v19
  %v1828 = vpop.permute.xlu0 %1827
  %v1830 = vmul.f32 %v1813, %v1828
  %v1831 = vmul.f32 %v1817, %v1828
  %v1832 = vmul.f32 %v1821, %v1828
  %v1833 = vmul.f32 %v1825, %v1828
  %v1834 = vadd.f32 %v1790, %v1830
  %v1835 = vadd.f32 %v1791, %v1831
  %v1836 = vadd.f32 %v1792, %v1832
  %v1837 = vadd.f32 %v1793, %v1833
  %v1838 = vlaneseq
  %v1839 = vshrl.u32 %v1838, 7
  %v1840 = vsub.s32 1, %v1839
  %v1841 = vrot.slane %v1806, %v1840
  %v1842 = vlaneseq
  %v1843 = vshrl.u32 %v1842, 7
  %v1844 = vsub.s32 1, %v1843
  %v1845 = vrot.slane %v1807, %v1844
  %v1846 = vlaneseq
  %v1847 = vshrl.u32 %v1846, 7
  %v1848 = vsub.s32 1, %v1847
  %v1849 = vrot.slane %v1808, %v1848
  %v1850 = vlaneseq
  %v1851 = vshrl.u32 %v1850, 7
  %v1852 = vsub.s32 1, %v1851
  %v1853 = vrot.slane %v1809, %v1852
  %1854 = vset.pattern.permute.xlu0 50
  %1855 = vperm.xlu0 %1854, %v19
  %v1856 = vpop.permute.xlu0 %1855
  %v1858 = vmul.f32 %v1841, %v1856
  %v1859 = vmul.f32 %v1845, %v1856
  %v1860 = vmul.f32 %v1849, %v1856
  %v1861 = vmul.f32 %v1853, %v1856
  %v1862 = vadd.f32 %v1834, %v1858
  %v1863 = vadd.f32 %v1835, %v1859
  %v1864 = vadd.f32 %v1836, %v1860
  %v1865 = vadd.f32 %v1837, %v1861
  %1866 = vrot.lane.b32.xlu0 %v1706, 15
  %v1867 = vpop.permute.xlu0 %1866
  %1868 = vrot.lane.b32.xlu0 %v1707, 15
  %v1869 = vpop.permute.xlu0 %1868
  %1870 = vrot.lane.b32.xlu0 %v1708, 15
  %v1871 = vpop.permute.xlu0 %1870
  %1872 = vrot.lane.b32.xlu0 %v1709, 15
  %v1873 = vpop.permute.xlu0 %1872
  %v1874 = vsel %vm337, %v1871, %v1873
  %v1875 = vsel %vm337, %v1869, %v1871
  %v1876 = vsel %vm337, %v1867, %v1869
  %v1877 = vsel %vm337, %v1873, %v1867
  %v1878 = vmul.f32 %v1877, %v348
  %v1879 = vmul.f32 %v1876, %v352
  %v1880 = vmul.f32 %v1875, %v356
  %v1881 = vmul.f32 %v1874, %v360
  %v1882 = vlaneseq
  %v1883 = vshrl.u32 %v1882, 7
  %v1884 = vsub.s32 0, %v1883
  %v1885 = vrot.slane %v1878, %v1884
  %v1886 = vlaneseq
  %v1887 = vshrl.u32 %v1886, 7
  %v1888 = vsub.s32 0, %v1887
  %v1889 = vrot.slane %v1879, %v1888
  %v1890 = vlaneseq
  %v1891 = vshrl.u32 %v1890, 7
  %v1892 = vsub.s32 0, %v1891
  %v1893 = vrot.slane %v1880, %v1892
  %v1894 = vlaneseq
  %v1895 = vshrl.u32 %v1894, 7
  %v1896 = vsub.s32 0, %v1895
  %v1897 = vrot.slane %v1881, %v1896
  %1898 = vset.pattern.permute.xlu0 53
  %1899 = vperm.xlu0 %1898, %v19
  %v1900 = vpop.permute.xlu0 %1899
  %v1902 = vmul.f32 %v1885, %v1900
  %v1903 = vmul.f32 %v1889, %v1900
  %v1904 = vmul.f32 %v1893, %v1900
  %v1905 = vmul.f32 %v1897, %v1900
  %v1906 = vadd.f32 %v1862, %v1902
  %v1907 = vadd.f32 %v1863, %v1903
  %v1908 = vadd.f32 %v1864, %v1904
  %v1909 = vadd.f32 %v1865, %v1905
  %v1910 = vlaneseq
  %v1911 = vshrl.u32 %v1910, 7
  %v1912 = vsub.s32 1, %v1911
  %v1913 = vrot.slane %v1878, %v1912
  %v1914 = vlaneseq
  %v1915 = vshrl.u32 %v1914, 7
  %v1916 = vsub.s32 1, %v1915
  %v1917 = vrot.slane %v1879, %v1916
  %v1918 = vlaneseq
  %v1919 = vshrl.u32 %v1918, 7
  %v1920 = vsub.s32 1, %v1919
  %v1921 = vrot.slane %v1880, %v1920
  %v1922 = vlaneseq
  %v1923 = vshrl.u32 %v1922, 7
  %v1924 = vsub.s32 1, %v1923
  %v1925 = vrot.slane %v1881, %v1924
  %1926 = vset.pattern.permute.xlu0 54
  %1927 = vperm.xlu0 %1926, %v19
  %v1928 = vpop.permute.xlu0 %1927
  %v1930 = vmul.f32 %v1913, %v1928
  %v1931 = vmul.f32 %v1917, %v1928
  %v1932 = vmul.f32 %v1921, %v1928
  %v1933 = vmul.f32 %v1925, %v1928
  %v1934 = vadd.f32 %v1906, %v1930
  %v1935 = vadd.f32 %v1907, %v1931
  %v1936 = vadd.f32 %v1908, %v1932
  %v1937 = vadd.f32 %v1909, %v1933
  %1938 = vrot.lane.b32.xlu0 %v1706, 1
  %v1939 = vpop.permute.xlu0 %1938
  %1940 = vrot.lane.b32.xlu0 %v1707, 1
  %v1941 = vpop.permute.xlu0 %1940
  %1942 = vrot.lane.b32.xlu0 %v1708, 1
  %v1943 = vpop.permute.xlu0 %1942
  %1944 = vrot.lane.b32.xlu0 %v1709, 1
  %v1945 = vpop.permute.xlu0 %1944
  %v1946 = vsel %vm489, %v1943, %v1945
  %v1947 = vsel %vm489, %v1941, %v1943
  %v1948 = vsel %vm489, %v1939, %v1941
  %v1949 = vsel %vm489, %v1945, %v1939
  %v1950 = vmul.f32 %v1949, %v500
  %v1951 = vmul.f32 %v1948, %v504
  %v1952 = vmul.f32 %v1947, %v508
  %v1953 = vmul.f32 %v1946, %v512
  %v1954 = vlaneseq
  %v1955 = vshrl.u32 %v1954, 7
  %v1956 = vsub.s32 0, %v1955
  %v1957 = vrot.slane %v1950, %v1956
  %v1958 = vlaneseq
  %v1959 = vshrl.u32 %v1958, 7
  %v1960 = vsub.s32 0, %v1959
  %v1961 = vrot.slane %v1951, %v1960
  %v1962 = vlaneseq
  %v1963 = vshrl.u32 %v1962, 7
  %v1964 = vsub.s32 0, %v1963
  %v1965 = vrot.slane %v1952, %v1964
  %v1966 = vlaneseq
  %v1967 = vshrl.u32 %v1966, 7
  %v1968 = vsub.s32 0, %v1967
  %v1969 = vrot.slane %v1953, %v1968
  %1970 = vset.pattern.permute.xlu0 57
  %1971 = vperm.xlu0 %1970, %v19
  %v1972 = vpop.permute.xlu0 %1971
  %v1974 = vmul.f32 %v1957, %v1972
  %v1975 = vmul.f32 %v1961, %v1972
  %v1976 = vmul.f32 %v1965, %v1972
  %v1977 = vmul.f32 %v1969, %v1972
  %v1978 = vadd.f32 %v1934, %v1974
  %v1979 = vadd.f32 %v1935, %v1975
  %v1980 = vadd.f32 %v1936, %v1976
  %v1981 = vadd.f32 %v1937, %v1977
  %v1982 = vlaneseq
  %v1983 = vshrl.u32 %v1982, 7
  %v1984 = vsub.s32 1, %v1983
  %v1985 = vrot.slane %v1950, %v1984
  %v1986 = vlaneseq
  %v1987 = vshrl.u32 %v1986, 7
  %v1988 = vsub.s32 1, %v1987
  %v1989 = vrot.slane %v1951, %v1988
  %v1990 = vlaneseq
  %v1991 = vshrl.u32 %v1990, 7
  %v1992 = vsub.s32 1, %v1991
  %v1993 = vrot.slane %v1952, %v1992
  %v1994 = vlaneseq
  %v1995 = vshrl.u32 %v1994, 7
  %v1996 = vsub.s32 1, %v1995
  %v1997 = vrot.slane %v1953, %v1996
  %1998 = vset.pattern.permute.xlu0 58
  %1999 = vperm.xlu0 %1998, %v19
  %v2000 = vpop.permute.xlu0 %1999
  %v2002 = vmul.f32 %v1985, %v2000
  %v2003 = vmul.f32 %v1989, %v2000
  %v2004 = vmul.f32 %v1993, %v2000
  %v2005 = vmul.f32 %v1997, %v2000
  %v2006 = vadd.f32 %v1978, %v2002
  %v2007 = vadd.f32 %v1979, %v2003
  %v2008 = vadd.f32 %v1980, %v2004
  %v2009 = vadd.f32 %v1981, %v2005
  %v2010 = vlaneseq
  %v2011 = vshrl.u32 %v2010, 7
  %v2012 = vsub.s32 0, %v2011
  %v2013 = vrot.slane %v1706, %v2012
  %v2014 = vlaneseq
  %v2015 = vshrl.u32 %v2014, 7
  %v2016 = vsub.s32 0, %v2015
  %v2017 = vrot.slane %v1707, %v2016
  %v2018 = vlaneseq
  %v2019 = vshrl.u32 %v2018, 7
  %v2020 = vsub.s32 0, %v2019
  %v2021 = vrot.slane %v1708, %v2020
  %v2022 = vlaneseq
  %v2023 = vshrl.u32 %v2022, 7
  %v2024 = vsub.s32 0, %v2023
  %v2025 = vrot.slane %v1709, %v2024
  %2026 = vset.pattern.permute.xlu0 61
  %2027 = vperm.xlu0 %2026, %v19
  %v2028 = vpop.permute.xlu0 %2027
  %v2030 = vmul.f32 %v2013, %v2028
  %v2031 = vmul.f32 %v2017, %v2028
  %v2032 = vmul.f32 %v2021, %v2028
  %v2033 = vmul.f32 %v2025, %v2028
  %v2034 = vadd.f32 %v2006, %v2030
  %v2035 = vadd.f32 %v2007, %v2031
  %v2036 = vadd.f32 %v2008, %v2032
  %v2037 = vadd.f32 %v2009, %v2033
  %v2038 = vlaneseq
  %v2039 = vshrl.u32 %v2038, 7
  %v2040 = vsub.s32 1, %v2039
  %v2041 = vrot.slane %v1706, %v2040
  %v2042 = vlaneseq
  %v2043 = vshrl.u32 %v2042, 7
  %v2044 = vsub.s32 1, %v2043
  %v2045 = vrot.slane %v1707, %v2044
  %v2046 = vlaneseq
  %v2047 = vshrl.u32 %v2046, 7
  %v2048 = vsub.s32 1, %v2047
  %v2049 = vrot.slane %v1708, %v2048
  %v2050 = vlaneseq
  %v2051 = vshrl.u32 %v2050, 7
  %v2052 = vsub.s32 1, %v2051
  %v2053 = vrot.slane %v1709, %v2052
  %2054 = vset.pattern.permute.xlu0 62
  %2055 = vperm.xlu0 %2054, %v19
  %v2056 = vpop.permute.xlu0 %2055
  %v2058 = vmul.f32 %v2041, %v2056
  %v2059 = vmul.f32 %v2045, %v2056
  %v2060 = vmul.f32 %v2049, %v2056
  %v2061 = vmul.f32 %v2053, %v2056
  %v2062 = vadd.f32 %v2034, %v2058
  %v2063 = vadd.f32 %v2035, %v2059
  %v2064 = vadd.f32 %v2036, %v2060
  %v2065 = vadd.f32 %v2037, %v2061
  %2066 = vrot.lane.b32.xlu0 %v1706, 127
  %v2067 = vpop.permute.xlu0 %2066
  %2068 = vrot.lane.b32.xlu0 %v1707, 127
  %v2069 = vpop.permute.xlu0 %2068
  %2070 = vrot.lane.b32.xlu0 %v1708, 127
  %v2071 = vpop.permute.xlu0 %2070
  %2072 = vrot.lane.b32.xlu0 %v1709, 127
  %v2073 = vpop.permute.xlu0 %2072
  %v2074 = vsel %vm833, %v2071, %v2073
  %v2075 = vsel %vm833, %v2069, %v2071
  %v2076 = vsel %vm833, %v2067, %v2069
  %v2077 = vsel %vm833, %v2073, %v2067
  %v2078 = vmul.f32 %v2076, %v844
  %v2079 = vmul.f32 %v2075, %v848
  %v2080 = vmul.f32 %v2074, %v852
  %v2081 = vmul.f32 %v2077, %v856
  %v2082 = vlaneseq
  %v2083 = vshrl.u32 %v2082, 7
  %v2084 = vsub.s32 0, %v2083
  %v2085 = vrot.slane %v2078, %v2084
  %v2086 = vlaneseq
  %v2087 = vshrl.u32 %v2086, 7
  %v2088 = vsub.s32 0, %v2087
  %v2089 = vrot.slane %v2079, %v2088
  %v2090 = vlaneseq
  %v2091 = vshrl.u32 %v2090, 7
  %v2092 = vsub.s32 0, %v2091
  %v2093 = vrot.slane %v2080, %v2092
  %v2094 = vlaneseq
  %v2095 = vshrl.u32 %v2094, 7
  %v2096 = vsub.s32 0, %v2095
  %v2097 = vrot.slane %v2081, %v2096
  %2098 = vset.pattern.permute.xlu0 65
  %2099 = vperm.xlu0 %2098, %v19
  %v2100 = vpop.permute.xlu0 %2099
  %v2102 = vmul.f32 %v2085, %v2100
  %v2103 = vmul.f32 %v2089, %v2100
  %v2104 = vmul.f32 %v2093, %v2100
  %v2105 = vmul.f32 %v2097, %v2100
  %v2106 = vadd.f32 %v2062, %v2102
  %v2107 = vadd.f32 %v2063, %v2103
  %v2108 = vadd.f32 %v2064, %v2104
  %v2109 = vadd.f32 %v2065, %v2105
  %v2110 = vlaneseq
  %v2111 = vshrl.u32 %v2110, 7
  %v2112 = vsub.s32 1, %v2111
  %v2113 = vrot.slane %v2078, %v2112
  %v2114 = vlaneseq
  %v2115 = vshrl.u32 %v2114, 7
  %v2116 = vsub.s32 1, %v2115
  %v2117 = vrot.slane %v2079, %v2116
  %v2118 = vlaneseq
  %v2119 = vshrl.u32 %v2118, 7
  %v2120 = vsub.s32 1, %v2119
  %v2121 = vrot.slane %v2080, %v2120
  %v2122 = vlaneseq
  %v2123 = vshrl.u32 %v2122, 7
  %v2124 = vsub.s32 1, %v2123
  %v2125 = vrot.slane %v2081, %v2124
  %2126 = vset.pattern.permute.xlu0 66
  %2127 = vperm.xlu0 %2126, %v19
  %v2128 = vpop.permute.xlu0 %2127
  %v2130 = vmul.f32 %v2113, %v2128
  %v2131 = vmul.f32 %v2117, %v2128
  %v2132 = vmul.f32 %v2121, %v2128
  %v2133 = vmul.f32 %v2125, %v2128
  %v2134 = vadd.f32 %v2106, %v2130
  %v2135 = vadd.f32 %v2107, %v2131
  %v2136 = vadd.f32 %v2108, %v2132
  %v2137 = vadd.f32 %v2109, %v2133
  %2138 = vrot.lane.b32.xlu0 %v1706, 113
  %v2139 = vpop.permute.xlu0 %2138
  %2140 = vrot.lane.b32.xlu0 %v1707, 113
  %v2141 = vpop.permute.xlu0 %2140
  %2142 = vrot.lane.b32.xlu0 %v1708, 113
  %v2143 = vpop.permute.xlu0 %2142
  %2144 = vrot.lane.b32.xlu0 %v1709, 113
  %v2145 = vpop.permute.xlu0 %2144
  %v2146 = vsel %vm985, %v2143, %v2145
  %v2147 = vsel %vm985, %v2141, %v2143
  %v2148 = vsel %vm985, %v2139, %v2141
  %v2149 = vsel %vm985, %v2145, %v2139
  %v2150 = vmul.f32 %v2148, %v996
  %v2151 = vmul.f32 %v2147, %v1000
  %v2152 = vmul.f32 %v2146, %v1004
  %v2153 = vmul.f32 %v2149, %v1008
  %v2154 = vlaneseq
  %v2155 = vshrl.u32 %v2154, 7
  %v2156 = vsub.s32 0, %v2155
  %v2157 = vrot.slane %v2150, %v2156
  %v2158 = vlaneseq
  %v2159 = vshrl.u32 %v2158, 7
  %v2160 = vsub.s32 0, %v2159
  %v2161 = vrot.slane %v2151, %v2160
  %v2162 = vlaneseq
  %v2163 = vshrl.u32 %v2162, 7
  %v2164 = vsub.s32 0, %v2163
  %v2165 = vrot.slane %v2152, %v2164
  %v2166 = vlaneseq
  %v2167 = vshrl.u32 %v2166, 7
  %v2168 = vsub.s32 0, %v2167
  %v2169 = vrot.slane %v2153, %v2168
  %2170 = vset.pattern.permute.xlu0 69
  %2171 = vperm.xlu0 %2170, %v19
  %v2172 = vpop.permute.xlu0 %2171
  %v2174 = vmul.f32 %v2157, %v2172
  %v2175 = vmul.f32 %v2161, %v2172
  %v2176 = vmul.f32 %v2165, %v2172
  %v2177 = vmul.f32 %v2169, %v2172
  %v2178 = vadd.f32 %v2134, %v2174
  %v2179 = vadd.f32 %v2135, %v2175
  %v2180 = vadd.f32 %v2136, %v2176
  %v2181 = vadd.f32 %v2137, %v2177
  %v2182 = vlaneseq
  %v2183 = vshrl.u32 %v2182, 7
  %v2184 = vsub.s32 1, %v2183
  %v2185 = vrot.slane %v2150, %v2184
  %v2186 = vlaneseq
  %v2187 = vshrl.u32 %v2186, 7
  %v2188 = vsub.s32 1, %v2187
  %v2189 = vrot.slane %v2151, %v2188
  %v2190 = vlaneseq
  %v2191 = vshrl.u32 %v2190, 7
  %v2192 = vsub.s32 1, %v2191
  %v2193 = vrot.slane %v2152, %v2192
  %v2194 = vlaneseq
  %v2195 = vshrl.u32 %v2194, 7
  %v2196 = vsub.s32 1, %v2195
  %v2197 = vrot.slane %v2153, %v2196
  %2198 = vset.pattern.permute.xlu0 70
  %2199 = vperm.xlu0 %2198, %v19
  %v2200 = vpop.permute.xlu0 %2199
  %v2202 = vmul.f32 %v2185, %v2200
  %v2203 = vmul.f32 %v2189, %v2200
  %v2204 = vmul.f32 %v2193, %v2200
  %v2205 = vmul.f32 %v2197, %v2200
  %v2206 = vadd.f32 %v2178, %v2202
  %v2207 = vadd.f32 %v2179, %v2203
  %v2208 = vadd.f32 %v2180, %v2204
  %v2209 = vadd.f32 %v2181, %v2205
  %2210 = vrot.lane.b32.xlu0 %v1706, 112
  %v2211 = vpop.permute.xlu0 %2210
  %2212 = vrot.lane.b32.xlu0 %v1707, 112
  %v2213 = vpop.permute.xlu0 %2212
  %2214 = vrot.lane.b32.xlu0 %v1708, 112
  %v2215 = vpop.permute.xlu0 %2214
  %2216 = vrot.lane.b32.xlu0 %v1709, 112
  %v2217 = vpop.permute.xlu0 %2216
  %v2218 = vsel %vm1137, %v2215, %v2217
  %v2219 = vsel %vm1137, %v2213, %v2215
  %v2220 = vsel %vm1137, %v2211, %v2213
  %v2221 = vsel %vm1137, %v2217, %v2211
  %v2222 = vmul.f32 %v2220, %v1148
  %v2223 = vmul.f32 %v2219, %v1152
  %v2224 = vmul.f32 %v2218, %v1156
  %v2225 = vmul.f32 %v2221, %v1160
  %v2226 = vlaneseq
  %v2227 = vshrl.u32 %v2226, 7
  %v2228 = vsub.s32 0, %v2227
  %v2229 = vrot.slane %v2222, %v2228
  %v2230 = vlaneseq
  %v2231 = vshrl.u32 %v2230, 7
  %v2232 = vsub.s32 0, %v2231
  %v2233 = vrot.slane %v2223, %v2232
  %v2234 = vlaneseq
  %v2235 = vshrl.u32 %v2234, 7
  %v2236 = vsub.s32 0, %v2235
  %v2237 = vrot.slane %v2224, %v2236
  %v2238 = vlaneseq
  %v2239 = vshrl.u32 %v2238, 7
  %v2240 = vsub.s32 0, %v2239
  %v2241 = vrot.slane %v2225, %v2240
  %2242 = vset.pattern.permute.xlu0 73
  %2243 = vperm.xlu0 %2242, %v19
  %v2244 = vpop.permute.xlu0 %2243
  %v2246 = vmul.f32 %v2229, %v2244
  %v2247 = vmul.f32 %v2233, %v2244
  %v2248 = vmul.f32 %v2237, %v2244
  %v2249 = vmul.f32 %v2241, %v2244
  %v2250 = vadd.f32 %v2206, %v2246
  %v2251 = vadd.f32 %v2207, %v2247
  %v2252 = vadd.f32 %v2208, %v2248
  %v2253 = vadd.f32 %v2209, %v2249
  %v2254 = vlaneseq
  %v2255 = vshrl.u32 %v2254, 7
  %v2256 = vsub.s32 1, %v2255
  %v2257 = vrot.slane %v2222, %v2256
  %v2258 = vlaneseq
  %v2259 = vshrl.u32 %v2258, 7
  %v2260 = vsub.s32 1, %v2259
  %v2261 = vrot.slane %v2223, %v2260
  %v2262 = vlaneseq
  %v2263 = vshrl.u32 %v2262, 7
  %v2264 = vsub.s32 1, %v2263
  %v2265 = vrot.slane %v2224, %v2264
  %v2266 = vlaneseq
  %v2267 = vshrl.u32 %v2266, 7
  %v2268 = vsub.s32 1, %v2267
  %v2269 = vrot.slane %v2225, %v2268
  %2270 = vset.pattern.permute.xlu0 74
  %2271 = vperm.xlu0 %2270, %v19
  %v2272 = vpop.permute.xlu0 %2271
  %v2274 = vmul.f32 %v2257, %v2272
  %v2275 = vmul.f32 %v2261, %v2272
  %v2276 = vmul.f32 %v2265, %v2272
  %v2277 = vmul.f32 %v2269, %v2272
  %v2278 = vadd.f32 %v2250, %v2274
  %v2279 = vadd.f32 %v2251, %v2275
  %v2280 = vadd.f32 %v2252, %v2276
  %v2281 = vadd.f32 %v2253, %v2277
  %2282 = vrot.lane.b32.xlu0 %v1706, 111
  %v2283 = vpop.permute.xlu0 %2282
  %2284 = vrot.lane.b32.xlu0 %v1707, 111
  %v2285 = vpop.permute.xlu0 %2284
  %2286 = vrot.lane.b32.xlu0 %v1708, 111
  %v2287 = vpop.permute.xlu0 %2286
  %2288 = vrot.lane.b32.xlu0 %v1709, 111
  %v2289 = vpop.permute.xlu0 %2288
  %v2290 = vsel %vm1289, %v2287, %v2289
  %v2291 = vsel %vm1289, %v2285, %v2287
  %v2292 = vsel %vm1289, %v2283, %v2285
  %v2293 = vsel %vm1289, %v2289, %v2283
  %v2294 = vmul.f32 %v2292, %v1300
  %v2295 = vmul.f32 %v2291, %v1304
  %v2296 = vmul.f32 %v2290, %v1308
  %v2297 = vmul.f32 %v2293, %v1312
  %v2298 = vlaneseq
  %v2299 = vshrl.u32 %v2298, 7
  %v2300 = vsub.s32 0, %v2299
  %v2301 = vrot.slane %v2294, %v2300
  %v2302 = vlaneseq
  %v2303 = vshrl.u32 %v2302, 7
  %v2304 = vsub.s32 0, %v2303
  %v2305 = vrot.slane %v2295, %v2304
  %v2306 = vlaneseq
  %v2307 = vshrl.u32 %v2306, 7
  %v2308 = vsub.s32 0, %v2307
  %v2309 = vrot.slane %v2296, %v2308
  %v2310 = vlaneseq
  %v2311 = vshrl.u32 %v2310, 7
  %v2312 = vsub.s32 0, %v2311
  %v2313 = vrot.slane %v2297, %v2312
  %2314 = vset.pattern.permute.xlu0 77
  %2315 = vperm.xlu0 %2314, %v19
  %v2316 = vpop.permute.xlu0 %2315
  %v2318 = vmul.f32 %v2301, %v2316
  %v2319 = vmul.f32 %v2305, %v2316
  %v2320 = vmul.f32 %v2309, %v2316
  %v2321 = vmul.f32 %v2313, %v2316
  %v2322 = vadd.f32 %v2278, %v2318
  %v2323 = vadd.f32 %v2279, %v2319
  %v2324 = vadd.f32 %v2280, %v2320
  %v2325 = vadd.f32 %v2281, %v2321
  %v2326 = vlaneseq
  %v2327 = vshrl.u32 %v2326, 7
  %v2328 = vsub.s32 1, %v2327
  %v2329 = vrot.slane %v2294, %v2328
  %v2330 = vlaneseq
  %v2331 = vshrl.u32 %v2330, 7
  %v2332 = vsub.s32 1, %v2331
  %v2333 = vrot.slane %v2295, %v2332
  %v2334 = vlaneseq
  %v2335 = vshrl.u32 %v2334, 7
  %v2336 = vsub.s32 1, %v2335
  %v2337 = vrot.slane %v2296, %v2336
  %v2338 = vlaneseq
  %v2339 = vshrl.u32 %v2338, 7
  %v2340 = vsub.s32 1, %v2339
  %v2341 = vrot.slane %v2297, %v2340
  %2342 = vset.pattern.permute.xlu0 78
  %2343 = vperm.xlu0 %2342, %v19
  %v2344 = vpop.permute.xlu0 %2343
  %v2346 = vmul.f32 %v2329, %v2344
  %v2347 = vmul.f32 %v2333, %v2344
  %v2348 = vmul.f32 %v2337, %v2344
  %v2349 = vmul.f32 %v2341, %v2344
  %v2350 = vadd.f32 %v2322, %v2346
  %v2351 = vadd.f32 %v2323, %v2347
  %v2352 = vadd.f32 %v2324, %v2348
  %v2353 = vadd.f32 %v2325, %v2349
  %2354 = vrot.lane.b32.xlu0 %v1722, 17
  %v2355 = vpop.permute.xlu0 %2354
  %2356 = vrot.lane.b32.xlu0 %v1723, 17
  %v2357 = vpop.permute.xlu0 %2356
  %2358 = vrot.lane.b32.xlu0 %v1724, 17
  %v2359 = vpop.permute.xlu0 %2358
  %2360 = vrot.lane.b32.xlu0 %v1725, 17
  %v2361 = vpop.permute.xlu0 %2360
  %v2362 = vsel %vm37, %v2359, %v2361
  %v2363 = vsel %vm37, %v2357, %v2359
  %v2364 = vsel %vm37, %v2355, %v2357
  %v2365 = vsel %vm37, %v2361, %v2355
  %v2366 = vmul.f32 %v2365, %v47
  %v2367 = vmul.f32 %v2364, %v51
  %v2368 = vmul.f32 %v2363, %v55
  %v2369 = vmul.f32 %v2362, %v59
  %v2370 = vlaneseq
  %v2371 = vshrl.u32 %v2370, 7
  %v2372 = vsub.s32 0, %v2371
  %v2373 = vrot.slane %v2366, %v2372
  %v2374 = vlaneseq
  %v2375 = vshrl.u32 %v2374, 7
  %v2376 = vsub.s32 0, %v2375
  %v2377 = vrot.slane %v2367, %v2376
  %v2378 = vlaneseq
  %v2379 = vshrl.u32 %v2378, 7
  %v2380 = vsub.s32 0, %v2379
  %v2381 = vrot.slane %v2368, %v2380
  %v2382 = vlaneseq
  %v2383 = vshrl.u32 %v2382, 7
  %v2384 = vsub.s32 0, %v2383
  %v2385 = vrot.slane %v2369, %v2384
  %2386 = vset.pattern.permute.xlu0 47
  %2387 = vperm.xlu0 %2386, %v19
  %v2388 = vpop.permute.xlu0 %2387
  %v2390 = vmul.f32 %v2373, %v2388
  %v2391 = vmul.f32 %v2377, %v2388
  %v2392 = vmul.f32 %v2381, %v2388
  %v2393 = vmul.f32 %v2385, %v2388
  %v2394 = vadd.f32 %v2350, %v2390
  %v2395 = vadd.f32 %v2351, %v2391
  %v2396 = vadd.f32 %v2352, %v2392
  %v2397 = vadd.f32 %v2353, %v2393
  %v2398 = vlaneseq
  %v2399 = vshrl.u32 %v2398, 7
  %v2400 = vsub.s32 1, %v2399
  %v2401 = vrot.slane %v2366, %v2400
  %v2402 = vlaneseq
  %v2403 = vshrl.u32 %v2402, 7
  %v2404 = vsub.s32 1, %v2403
  %v2405 = vrot.slane %v2367, %v2404
  %v2406 = vlaneseq
  %v2407 = vshrl.u32 %v2406, 7
  %v2408 = vsub.s32 1, %v2407
  %v2409 = vrot.slane %v2368, %v2408
  %v2410 = vlaneseq
  %v2411 = vshrl.u32 %v2410, 7
  %v2412 = vsub.s32 1, %v2411
  %v2413 = vrot.slane %v2369, %v2412
  %2414 = vset.pattern.permute.xlu0 48
  %2415 = vperm.xlu0 %2414, %v19
  %v2416 = vpop.permute.xlu0 %2415
  %v2418 = vmul.f32 %v2401, %v2416
  %v2419 = vmul.f32 %v2405, %v2416
  %v2420 = vmul.f32 %v2409, %v2416
  %v2421 = vmul.f32 %v2413, %v2416
  %v2422 = vadd.f32 %v2394, %v2418
  %v2423 = vadd.f32 %v2395, %v2419
  %v2424 = vadd.f32 %v2396, %v2420
  %v2425 = vadd.f32 %v2397, %v2421
  %2426 = vrot.lane.b32.xlu0 %v1722, 16
  %v2427 = vpop.permute.xlu0 %2426
  %2428 = vrot.lane.b32.xlu0 %v1723, 16
  %v2429 = vpop.permute.xlu0 %2428
  %2430 = vrot.lane.b32.xlu0 %v1724, 16
  %v2431 = vpop.permute.xlu0 %2430
  %2432 = vrot.lane.b32.xlu0 %v1725, 16
  %v2433 = vpop.permute.xlu0 %2432
  %v2434 = vsel %vm185, %v2431, %v2433
  %v2435 = vsel %vm185, %v2429, %v2431
  %v2436 = vsel %vm185, %v2427, %v2429
  %v2437 = vsel %vm185, %v2433, %v2427
  %v2438 = vmul.f32 %v2437, %v196
  %v2439 = vmul.f32 %v2436, %v200
  %v2440 = vmul.f32 %v2435, %v204
  %v2441 = vmul.f32 %v2434, %v208
  %v2442 = vlaneseq
  %v2443 = vshrl.u32 %v2442, 7
  %v2444 = vsub.s32 0, %v2443
  %v2445 = vrot.slane %v2438, %v2444
  %v2446 = vlaneseq
  %v2447 = vshrl.u32 %v2446, 7
  %v2448 = vsub.s32 0, %v2447
  %v2449 = vrot.slane %v2439, %v2448
  %v2450 = vlaneseq
  %v2451 = vshrl.u32 %v2450, 7
  %v2452 = vsub.s32 0, %v2451
  %v2453 = vrot.slane %v2440, %v2452
  %v2454 = vlaneseq
  %v2455 = vshrl.u32 %v2454, 7
  %v2456 = vsub.s32 0, %v2455
  %v2457 = vrot.slane %v2441, %v2456
  %2458 = vset.pattern.permute.xlu0 51
  %2459 = vperm.xlu0 %2458, %v19
  %v2460 = vpop.permute.xlu0 %2459
  %v2462 = vmul.f32 %v2445, %v2460
  %v2463 = vmul.f32 %v2449, %v2460
  %v2464 = vmul.f32 %v2453, %v2460
  %v2465 = vmul.f32 %v2457, %v2460
  %v2466 = vadd.f32 %v2422, %v2462
  %v2467 = vadd.f32 %v2423, %v2463
  %v2468 = vadd.f32 %v2424, %v2464
  %v2469 = vadd.f32 %v2425, %v2465
  %v2470 = vlaneseq
  %v2471 = vshrl.u32 %v2470, 7
  %v2472 = vsub.s32 1, %v2471
  %v2473 = vrot.slane %v2438, %v2472
  %v2474 = vlaneseq
  %v2475 = vshrl.u32 %v2474, 7
  %v2476 = vsub.s32 1, %v2475
  %v2477 = vrot.slane %v2439, %v2476
  %v2478 = vlaneseq
  %v2479 = vshrl.u32 %v2478, 7
  %v2480 = vsub.s32 1, %v2479
  %v2481 = vrot.slane %v2440, %v2480
  %v2482 = vlaneseq
  %v2483 = vshrl.u32 %v2482, 7
  %v2484 = vsub.s32 1, %v2483
  %v2485 = vrot.slane %v2441, %v2484
  %2486 = vset.pattern.permute.xlu0 52
  %2487 = vperm.xlu0 %2486, %v19
  %v2488 = vpop.permute.xlu0 %2487
  %v2490 = vmul.f32 %v2473, %v2488
  %v2491 = vmul.f32 %v2477, %v2488
  %v2492 = vmul.f32 %v2481, %v2488
  %v2493 = vmul.f32 %v2485, %v2488
  %v2494 = vadd.f32 %v2466, %v2490
  %v2495 = vadd.f32 %v2467, %v2491
  %v2496 = vadd.f32 %v2468, %v2492
  %v2497 = vadd.f32 %v2469, %v2493
  %2498 = vrot.lane.b32.xlu0 %v1722, 15
  %v2499 = vpop.permute.xlu0 %2498
  %2500 = vrot.lane.b32.xlu0 %v1723, 15
  %v2501 = vpop.permute.xlu0 %2500
  %2502 = vrot.lane.b32.xlu0 %v1724, 15
  %v2503 = vpop.permute.xlu0 %2502
  %2504 = vrot.lane.b32.xlu0 %v1725, 15
  %v2505 = vpop.permute.xlu0 %2504
  %v2506 = vsel %vm337, %v2503, %v2505
  %v2507 = vsel %vm337, %v2501, %v2503
  %v2508 = vsel %vm337, %v2499, %v2501
  %v2509 = vsel %vm337, %v2505, %v2499
  %v2510 = vmul.f32 %v2509, %v348
  %v2511 = vmul.f32 %v2508, %v352
  %v2512 = vmul.f32 %v2507, %v356
  %v2513 = vmul.f32 %v2506, %v360
  %v2514 = vlaneseq
  %v2515 = vshrl.u32 %v2514, 7
  %v2516 = vsub.s32 0, %v2515
  %v2517 = vrot.slane %v2510, %v2516
  %v2518 = vlaneseq
  %v2519 = vshrl.u32 %v2518, 7
  %v2520 = vsub.s32 0, %v2519
  %v2521 = vrot.slane %v2511, %v2520
  %v2522 = vlaneseq
  %v2523 = vshrl.u32 %v2522, 7
  %v2524 = vsub.s32 0, %v2523
  %v2525 = vrot.slane %v2512, %v2524
  %v2526 = vlaneseq
  %v2527 = vshrl.u32 %v2526, 7
  %v2528 = vsub.s32 0, %v2527
  %v2529 = vrot.slane %v2513, %v2528
  %2530 = vset.pattern.permute.xlu0 55
  %2531 = vperm.xlu0 %2530, %v19
  %v2532 = vpop.permute.xlu0 %2531
  %v2534 = vmul.f32 %v2517, %v2532
  %v2535 = vmul.f32 %v2521, %v2532
  %v2536 = vmul.f32 %v2525, %v2532
  %v2537 = vmul.f32 %v2529, %v2532
  %v2538 = vadd.f32 %v2494, %v2534
  %v2539 = vadd.f32 %v2495, %v2535
  %v2540 = vadd.f32 %v2496, %v2536
  %v2541 = vadd.f32 %v2497, %v2537
  %v2542 = vlaneseq
  %v2543 = vshrl.u32 %v2542, 7
  %v2544 = vsub.s32 1, %v2543
  %v2545 = vrot.slane %v2510, %v2544
  %v2546 = vlaneseq
  %v2547 = vshrl.u32 %v2546, 7
  %v2548 = vsub.s32 1, %v2547
  %v2549 = vrot.slane %v2511, %v2548
  %v2550 = vlaneseq
  %v2551 = vshrl.u32 %v2550, 7
  %v2552 = vsub.s32 1, %v2551
  %v2553 = vrot.slane %v2512, %v2552
  %v2554 = vlaneseq
  %v2555 = vshrl.u32 %v2554, 7
  %v2556 = vsub.s32 1, %v2555
  %v2557 = vrot.slane %v2513, %v2556
  %2558 = vset.pattern.permute.xlu0 56
  %2559 = vperm.xlu0 %2558, %v19
  %v2560 = vpop.permute.xlu0 %2559
  %v2562 = vmul.f32 %v2545, %v2560
  %v2563 = vmul.f32 %v2549, %v2560
  %v2564 = vmul.f32 %v2553, %v2560
  %v2565 = vmul.f32 %v2557, %v2560
  %v2566 = vadd.f32 %v2538, %v2562
  %v2567 = vadd.f32 %v2539, %v2563
  %v2568 = vadd.f32 %v2540, %v2564
  %v2569 = vadd.f32 %v2541, %v2565
  %2570 = vrot.lane.b32.xlu0 %v1722, 1
  %v2571 = vpop.permute.xlu0 %2570
  %2572 = vrot.lane.b32.xlu0 %v1723, 1
  %v2573 = vpop.permute.xlu0 %2572
  %2574 = vrot.lane.b32.xlu0 %v1724, 1
  %v2575 = vpop.permute.xlu0 %2574
  %2576 = vrot.lane.b32.xlu0 %v1725, 1
  %v2577 = vpop.permute.xlu0 %2576
  %v2578 = vsel %vm489, %v2575, %v2577
  %v2579 = vsel %vm489, %v2573, %v2575
  %v2580 = vsel %vm489, %v2571, %v2573
  %v2581 = vsel %vm489, %v2577, %v2571
  %v2582 = vmul.f32 %v2581, %v500
  %v2583 = vmul.f32 %v2580, %v504
  %v2584 = vmul.f32 %v2579, %v508
  %v2585 = vmul.f32 %v2578, %v512
  %v2586 = vlaneseq
  %v2587 = vshrl.u32 %v2586, 7
  %v2588 = vsub.s32 0, %v2587
  %v2589 = vrot.slane %v2582, %v2588
  %v2590 = vlaneseq
  %v2591 = vshrl.u32 %v2590, 7
  %v2592 = vsub.s32 0, %v2591
  %v2593 = vrot.slane %v2583, %v2592
  %v2594 = vlaneseq
  %v2595 = vshrl.u32 %v2594, 7
  %v2596 = vsub.s32 0, %v2595
  %v2597 = vrot.slane %v2584, %v2596
  %v2598 = vlaneseq
  %v2599 = vshrl.u32 %v2598, 7
  %v2600 = vsub.s32 0, %v2599
  %v2601 = vrot.slane %v2585, %v2600
  %2602 = vset.pattern.permute.xlu0 59
  %2603 = vperm.xlu0 %2602, %v19
  %v2604 = vpop.permute.xlu0 %2603
  %v2606 = vmul.f32 %v2589, %v2604
  %v2607 = vmul.f32 %v2593, %v2604
  %v2608 = vmul.f32 %v2597, %v2604
  %v2609 = vmul.f32 %v2601, %v2604
  %v2610 = vadd.f32 %v2566, %v2606
  %v2611 = vadd.f32 %v2567, %v2607
  %v2612 = vadd.f32 %v2568, %v2608
  %v2613 = vadd.f32 %v2569, %v2609
  %v2614 = vlaneseq
  %v2615 = vshrl.u32 %v2614, 7
  %v2616 = vsub.s32 1, %v2615
  %v2617 = vrot.slane %v2582, %v2616
  %v2618 = vlaneseq
  %v2619 = vshrl.u32 %v2618, 7
  %v2620 = vsub.s32 1, %v2619
  %v2621 = vrot.slane %v2583, %v2620
  %v2622 = vlaneseq
  %v2623 = vshrl.u32 %v2622, 7
  %v2624 = vsub.s32 1, %v2623
  %v2625 = vrot.slane %v2584, %v2624
  %v2626 = vlaneseq
  %v2627 = vshrl.u32 %v2626, 7
  %v2628 = vsub.s32 1, %v2627
  %v2629 = vrot.slane %v2585, %v2628
  %2630 = vset.pattern.permute.xlu0 60
  %2631 = vperm.xlu0 %2630, %v19
  %v2632 = vpop.permute.xlu0 %2631
  %v2634 = vmul.f32 %v2617, %v2632
  %v2635 = vmul.f32 %v2621, %v2632
  %v2636 = vmul.f32 %v2625, %v2632
  %v2637 = vmul.f32 %v2629, %v2632
  %v2638 = vadd.f32 %v2610, %v2634
  %v2639 = vadd.f32 %v2611, %v2635
  %v2640 = vadd.f32 %v2612, %v2636
  %v2641 = vadd.f32 %v2613, %v2637
  %v2642 = vlaneseq
  %v2643 = vshrl.u32 %v2642, 7
  %v2644 = vsub.s32 0, %v2643
  %v2645 = vrot.slane %v1722, %v2644
  %v2646 = vlaneseq
  %v2647 = vshrl.u32 %v2646, 7
  %v2648 = vsub.s32 0, %v2647
  %v2649 = vrot.slane %v1723, %v2648
  %v2650 = vlaneseq
  %v2651 = vshrl.u32 %v2650, 7
  %v2652 = vsub.s32 0, %v2651
  %v2653 = vrot.slane %v1724, %v2652
  %v2654 = vlaneseq
  %v2655 = vshrl.u32 %v2654, 7
  %v2656 = vsub.s32 0, %v2655
  %v2657 = vrot.slane %v1725, %v2656
  %2658 = vset.pattern.permute.xlu0 63
  %2659 = vperm.xlu0 %2658, %v19
  %v2660 = vpop.permute.xlu0 %2659
  %v2662 = vmul.f32 %v2645, %v2660
  %v2663 = vmul.f32 %v2649, %v2660
  %v2664 = vmul.f32 %v2653, %v2660
  %v2665 = vmul.f32 %v2657, %v2660
  %v2666 = vadd.f32 %v2638, %v2662
  %v2667 = vadd.f32 %v2639, %v2663
  %v2668 = vadd.f32 %v2640, %v2664
  %v2669 = vadd.f32 %v2641, %v2665
  %v2670 = vlaneseq
  %v2671 = vshrl.u32 %v2670, 7
  %v2672 = vsub.s32 1, %v2671
  %v2673 = vrot.slane %v1722, %v2672
  %v2674 = vlaneseq
  %v2675 = vshrl.u32 %v2674, 7
  %v2676 = vsub.s32 1, %v2675
  %v2677 = vrot.slane %v1723, %v2676
  %v2678 = vlaneseq
  %v2679 = vshrl.u32 %v2678, 7
  %v2680 = vsub.s32 1, %v2679
  %v2681 = vrot.slane %v1724, %v2680
  %v2682 = vlaneseq
  %v2683 = vshrl.u32 %v2682, 7
  %v2684 = vsub.s32 1, %v2683
  %v2685 = vrot.slane %v1725, %v2684
  %2686 = vset.pattern.permute.xlu0 64
  %2687 = vperm.xlu0 %2686, %v19
  %v2688 = vpop.permute.xlu0 %2687
  %v2690 = vmul.f32 %v2673, %v2688
  %v2691 = vmul.f32 %v2677, %v2688
  %v2692 = vmul.f32 %v2681, %v2688
  %v2693 = vmul.f32 %v2685, %v2688
  %v2694 = vadd.f32 %v2666, %v2690
  %v2695 = vadd.f32 %v2667, %v2691
  %v2696 = vadd.f32 %v2668, %v2692
  %v2697 = vadd.f32 %v2669, %v2693
  %2698 = vrot.lane.b32.xlu0 %v1722, 127
  %v2699 = vpop.permute.xlu0 %2698
  %2700 = vrot.lane.b32.xlu0 %v1723, 127
  %v2701 = vpop.permute.xlu0 %2700
  %2702 = vrot.lane.b32.xlu0 %v1724, 127
  %v2703 = vpop.permute.xlu0 %2702
  %2704 = vrot.lane.b32.xlu0 %v1725, 127
  %v2705 = vpop.permute.xlu0 %2704
  %v2706 = vsel %vm833, %v2703, %v2705
  %v2707 = vsel %vm833, %v2701, %v2703
  %v2708 = vsel %vm833, %v2699, %v2701
  %v2709 = vsel %vm833, %v2705, %v2699
  %v2710 = vmul.f32 %v2708, %v844
  %v2711 = vmul.f32 %v2707, %v848
  %v2712 = vmul.f32 %v2706, %v852
  %v2713 = vmul.f32 %v2709, %v856
  %v2714 = vlaneseq
  %v2715 = vshrl.u32 %v2714, 7
  %v2716 = vsub.s32 0, %v2715
  %v2717 = vrot.slane %v2710, %v2716
  %v2718 = vlaneseq
  %v2719 = vshrl.u32 %v2718, 7
  %v2720 = vsub.s32 0, %v2719
  %v2721 = vrot.slane %v2711, %v2720
  %v2722 = vlaneseq
  %v2723 = vshrl.u32 %v2722, 7
  %v2724 = vsub.s32 0, %v2723
  %v2725 = vrot.slane %v2712, %v2724
  %v2726 = vlaneseq
  %v2727 = vshrl.u32 %v2726, 7
  %v2728 = vsub.s32 0, %v2727
  %v2729 = vrot.slane %v2713, %v2728
  %2730 = vset.pattern.permute.xlu0 67
  %2731 = vperm.xlu0 %2730, %v19
  %v2732 = vpop.permute.xlu0 %2731
  %v2734 = vmul.f32 %v2717, %v2732
  %v2735 = vmul.f32 %v2721, %v2732
  %v2736 = vmul.f32 %v2725, %v2732
  %v2737 = vmul.f32 %v2729, %v2732
  %v2738 = vadd.f32 %v2694, %v2734
  %v2739 = vadd.f32 %v2695, %v2735
  %v2740 = vadd.f32 %v2696, %v2736
  %v2741 = vadd.f32 %v2697, %v2737
  %v2742 = vlaneseq
  %v2743 = vshrl.u32 %v2742, 7
  %v2744 = vsub.s32 1, %v2743
  %v2745 = vrot.slane %v2710, %v2744
  %v2746 = vlaneseq
  %v2747 = vshrl.u32 %v2746, 7
  %v2748 = vsub.s32 1, %v2747
  %v2749 = vrot.slane %v2711, %v2748
  %v2750 = vlaneseq
  %v2751 = vshrl.u32 %v2750, 7
  %v2752 = vsub.s32 1, %v2751
  %v2753 = vrot.slane %v2712, %v2752
  %v2754 = vlaneseq
  %v2755 = vshrl.u32 %v2754, 7
  %v2756 = vsub.s32 1, %v2755
  %v2757 = vrot.slane %v2713, %v2756
  %2758 = vset.pattern.permute.xlu0 68
  %2759 = vperm.xlu0 %2758, %v19
  %v2760 = vpop.permute.xlu0 %2759
  %v2762 = vmul.f32 %v2745, %v2760
  %v2763 = vmul.f32 %v2749, %v2760
  %v2764 = vmul.f32 %v2753, %v2760
  %v2765 = vmul.f32 %v2757, %v2760
  %v2766 = vadd.f32 %v2738, %v2762
  %v2767 = vadd.f32 %v2739, %v2763
  %v2768 = vadd.f32 %v2740, %v2764
  %v2769 = vadd.f32 %v2741, %v2765
  %2770 = vrot.lane.b32.xlu0 %v1722, 113
  %v2771 = vpop.permute.xlu0 %2770
  %2772 = vrot.lane.b32.xlu0 %v1723, 113
  %v2773 = vpop.permute.xlu0 %2772
  %2774 = vrot.lane.b32.xlu0 %v1724, 113
  %v2775 = vpop.permute.xlu0 %2774
  %2776 = vrot.lane.b32.xlu0 %v1725, 113
  %v2777 = vpop.permute.xlu0 %2776
  %v2778 = vsel %vm985, %v2775, %v2777
  %v2779 = vsel %vm985, %v2773, %v2775
  %v2780 = vsel %vm985, %v2771, %v2773
  %v2781 = vsel %vm985, %v2777, %v2771
  %v2782 = vmul.f32 %v2780, %v996
  %v2783 = vmul.f32 %v2779, %v1000
  %v2784 = vmul.f32 %v2778, %v1004
  %v2785 = vmul.f32 %v2781, %v1008
  %v2786 = vlaneseq
  %v2787 = vshrl.u32 %v2786, 7
  %v2788 = vsub.s32 0, %v2787
  %v2789 = vrot.slane %v2782, %v2788
  %v2790 = vlaneseq
  %v2791 = vshrl.u32 %v2790, 7
  %v2792 = vsub.s32 0, %v2791
  %v2793 = vrot.slane %v2783, %v2792
  %v2794 = vlaneseq
  %v2795 = vshrl.u32 %v2794, 7
  %v2796 = vsub.s32 0, %v2795
  %v2797 = vrot.slane %v2784, %v2796
  %v2798 = vlaneseq
  %v2799 = vshrl.u32 %v2798, 7
  %v2800 = vsub.s32 0, %v2799
  %v2801 = vrot.slane %v2785, %v2800
  %2802 = vset.pattern.permute.xlu0 71
  %2803 = vperm.xlu0 %2802, %v19
  %v2804 = vpop.permute.xlu0 %2803
  %v2806 = vmul.f32 %v2789, %v2804
  %v2807 = vmul.f32 %v2793, %v2804
  %v2808 = vmul.f32 %v2797, %v2804
  %v2809 = vmul.f32 %v2801, %v2804
  %v2810 = vadd.f32 %v2766, %v2806
  %v2811 = vadd.f32 %v2767, %v2807
  %v2812 = vadd.f32 %v2768, %v2808
  %v2813 = vadd.f32 %v2769, %v2809
  %v2814 = vlaneseq
  %v2815 = vshrl.u32 %v2814, 7
  %v2816 = vsub.s32 1, %v2815
  %v2817 = vrot.slane %v2782, %v2816
  %v2818 = vlaneseq
  %v2819 = vshrl.u32 %v2818, 7
  %v2820 = vsub.s32 1, %v2819
  %v2821 = vrot.slane %v2783, %v2820
  %v2822 = vlaneseq
  %v2823 = vshrl.u32 %v2822, 7
  %v2824 = vsub.s32 1, %v2823
  %v2825 = vrot.slane %v2784, %v2824
  %v2826 = vlaneseq
  %v2827 = vshrl.u32 %v2826, 7
  %v2828 = vsub.s32 1, %v2827
  %v2829 = vrot.slane %v2785, %v2828
  %2830 = vset.pattern.permute.xlu0 72
  %2831 = vperm.xlu0 %2830, %v19
  %v2832 = vpop.permute.xlu0 %2831
  %v2834 = vmul.f32 %v2817, %v2832
  %v2835 = vmul.f32 %v2821, %v2832
  %v2836 = vmul.f32 %v2825, %v2832
  %v2837 = vmul.f32 %v2829, %v2832
  %v2838 = vadd.f32 %v2810, %v2834
  %v2839 = vadd.f32 %v2811, %v2835
  %v2840 = vadd.f32 %v2812, %v2836
  %v2841 = vadd.f32 %v2813, %v2837
  %2842 = vrot.lane.b32.xlu0 %v1722, 112
  %v2843 = vpop.permute.xlu0 %2842
  %2844 = vrot.lane.b32.xlu0 %v1723, 112
  %v2845 = vpop.permute.xlu0 %2844
  %2846 = vrot.lane.b32.xlu0 %v1724, 112
  %v2847 = vpop.permute.xlu0 %2846
  %2848 = vrot.lane.b32.xlu0 %v1725, 112
  %v2849 = vpop.permute.xlu0 %2848
  %v2850 = vsel %vm1137, %v2847, %v2849
  %v2851 = vsel %vm1137, %v2845, %v2847
  %v2852 = vsel %vm1137, %v2843, %v2845
  %v2853 = vsel %vm1137, %v2849, %v2843
  %v2854 = vmul.f32 %v2852, %v1148
  %v2855 = vmul.f32 %v2851, %v1152
  %v2856 = vmul.f32 %v2850, %v1156
  %v2857 = vmul.f32 %v2853, %v1160
  %v2858 = vlaneseq
  %v2859 = vshrl.u32 %v2858, 7
  %v2860 = vsub.s32 0, %v2859
  %v2861 = vrot.slane %v2854, %v2860
  %v2862 = vlaneseq
  %v2863 = vshrl.u32 %v2862, 7
  %v2864 = vsub.s32 0, %v2863
  %v2865 = vrot.slane %v2855, %v2864
  %v2866 = vlaneseq
  %v2867 = vshrl.u32 %v2866, 7
  %v2868 = vsub.s32 0, %v2867
  %v2869 = vrot.slane %v2856, %v2868
  %v2870 = vlaneseq
  %v2871 = vshrl.u32 %v2870, 7
  %v2872 = vsub.s32 0, %v2871
  %v2873 = vrot.slane %v2857, %v2872
  %2874 = vset.pattern.permute.xlu0 75
  %2875 = vperm.xlu0 %2874, %v19
  %v2876 = vpop.permute.xlu0 %2875
  %v2878 = vmul.f32 %v2861, %v2876
  %v2879 = vmul.f32 %v2865, %v2876
  %v2880 = vmul.f32 %v2869, %v2876
  %v2881 = vmul.f32 %v2873, %v2876
  %v2882 = vadd.f32 %v2838, %v2878
  %v2883 = vadd.f32 %v2839, %v2879
  %v2884 = vadd.f32 %v2840, %v2880
  %v2885 = vadd.f32 %v2841, %v2881
  %v2886 = vlaneseq
  %v2887 = vshrl.u32 %v2886, 7
  %v2888 = vsub.s32 1, %v2887
  %v2889 = vrot.slane %v2854, %v2888
  %v2890 = vlaneseq
  %v2891 = vshrl.u32 %v2890, 7
  %v2892 = vsub.s32 1, %v2891
  %v2893 = vrot.slane %v2855, %v2892
  %v2894 = vlaneseq
  %v2895 = vshrl.u32 %v2894, 7
  %v2896 = vsub.s32 1, %v2895
  %v2897 = vrot.slane %v2856, %v2896
  %v2898 = vlaneseq
  %v2899 = vshrl.u32 %v2898, 7
  %v2900 = vsub.s32 1, %v2899
  %v2901 = vrot.slane %v2857, %v2900
  %2902 = vset.pattern.permute.xlu0 76
  %2903 = vperm.xlu0 %2902, %v19
  %v2904 = vpop.permute.xlu0 %2903
  %v2906 = vmul.f32 %v2889, %v2904
  %v2907 = vmul.f32 %v2893, %v2904
  %v2908 = vmul.f32 %v2897, %v2904
  %v2909 = vmul.f32 %v2901, %v2904
  %v2910 = vadd.f32 %v2882, %v2906
  %v2911 = vadd.f32 %v2883, %v2907
  %v2912 = vadd.f32 %v2884, %v2908
  %v2913 = vadd.f32 %v2885, %v2909
  %2914 = vrot.lane.b32.xlu0 %v1722, 111
  %v2915 = vpop.permute.xlu0 %2914
  %2916 = vrot.lane.b32.xlu0 %v1723, 111
  %v2917 = vpop.permute.xlu0 %2916
  %2918 = vrot.lane.b32.xlu0 %v1724, 111
  %v2919 = vpop.permute.xlu0 %2918
  %2920 = vrot.lane.b32.xlu0 %v1725, 111
  %v2921 = vpop.permute.xlu0 %2920
  %v2922 = vsel %vm1289, %v2919, %v2921
  %v2923 = vsel %vm1289, %v2917, %v2919
  %v2924 = vsel %vm1289, %v2915, %v2917
  %v2925 = vsel %vm1289, %v2921, %v2915
  %v2926 = vmul.f32 %v2924, %v1300
  %v2927 = vmul.f32 %v2923, %v1304
  %v2928 = vmul.f32 %v2922, %v1308
  %v2929 = vmul.f32 %v2925, %v1312
  %v2930 = vlaneseq
  %v2931 = vshrl.u32 %v2930, 7
  %v2932 = vsub.s32 0, %v2931
  %v2933 = vrot.slane %v2926, %v2932
  %v2934 = vlaneseq
  %v2935 = vshrl.u32 %v2934, 7
  %v2936 = vsub.s32 0, %v2935
  %v2937 = vrot.slane %v2927, %v2936
  %v2938 = vlaneseq
  %v2939 = vshrl.u32 %v2938, 7
  %v2940 = vsub.s32 0, %v2939
  %v2941 = vrot.slane %v2928, %v2940
  %v2942 = vlaneseq
  %v2943 = vshrl.u32 %v2942, 7
  %v2944 = vsub.s32 0, %v2943
  %v2945 = vrot.slane %v2929, %v2944
  %2946 = vset.pattern.permute.xlu0 79
  %2947 = vperm.xlu0 %2946, %v19
  %v2948 = vpop.permute.xlu0 %2947
  %v2950 = vmul.f32 %v2933, %v2948
  %v2951 = vmul.f32 %v2937, %v2948
  %v2952 = vmul.f32 %v2941, %v2948
  %v2953 = vmul.f32 %v2945, %v2948
  %v2954 = vadd.f32 %v2910, %v2950
  %v2955 = vadd.f32 %v2911, %v2951
  %v2956 = vadd.f32 %v2912, %v2952
  %v2957 = vadd.f32 %v2913, %v2953
  %v2958 = vlaneseq
  %v2959 = vshrl.u32 %v2958, 7
  %v2960 = vsub.s32 1, %v2959
  %v2961 = vrot.slane %v2926, %v2960
  %v2962 = vlaneseq
  %v2963 = vshrl.u32 %v2962, 7
  %v2964 = vsub.s32 1, %v2963
  %v2965 = vrot.slane %v2927, %v2964
  %v2966 = vlaneseq
  %v2967 = vshrl.u32 %v2966, 7
  %v2968 = vsub.s32 1, %v2967
  %v2969 = vrot.slane %v2928, %v2968
  %v2970 = vlaneseq
  %v2971 = vshrl.u32 %v2970, 7
  %v2972 = vsub.s32 1, %v2971
  %v2973 = vrot.slane %v2929, %v2972
  %2974 = vset.pattern.permute.xlu0 80
  %2975 = vperm.xlu0 %2974, %v19
  %v2976 = vpop.permute.xlu0 %2975
  %v2978 = vmul.f32 %v2961, %v2976
  %v2979 = vmul.f32 %v2965, %v2976
  %v2980 = vmul.f32 %v2969, %v2976
  %v2981 = vmul.f32 %v2973, %v2976
  %v2982 = vadd.f32 %v2954, %v2978
  %v2983 = vadd.f32 %v2955, %v2979
  %v2984 = vadd.f32 %v2956, %v2980
  %v2985 = vadd.f32 %v2957, %v2981
  %2986 = vset.pattern.permute.xlu0 2
  %2987 = vperm.xlu0 %2986, %v20
  %v2988 = vpop.permute.xlu0 %2987
  %v2990 = vadd.f32 %v2982, %v2988
  %v2991 = vadd.f32 %v2983, %v2988
  %v2992 = vadd.f32 %v2984, %v2988
  %v2993 = vadd.f32 %v2985, %v2988
  %v2994 = vmax.f32 %v2990, 0.0
  %v2995 = vmax.f32 %v2991, 0.0
  %v2996 = vmax.f32 %v2992, 0.0
  %v2997 = vmax.f32 %v2993, 0.0
  %2998 = vrot.lane.b32.xlu0 %v2994, 17
  %v2999 = vpop.permute.xlu0 %2998
  %3000 = vrot.lane.b32.xlu0 %v2995, 17
  %v3001 = vpop.permute.xlu0 %3000
  %3002 = vrot.lane.b32.xlu0 %v2996, 17
  %v3003 = vpop.permute.xlu0 %3002
  %3004 = vrot.lane.b32.xlu0 %v2997, 17
  %v3005 = vpop.permute.xlu0 %3004
  %v3006 = vsel %vm37, %v3003, %v3005
  %v3007 = vsel %vm37, %v3001, %v3003
  %v3008 = vsel %vm37, %v2999, %v3001
  %v3009 = vsel %vm37, %v3005, %v2999
  %v3010 = vmul.f32 %v3009, %v47
  %v3011 = vmul.f32 %v3008, %v51
  %v3012 = vmul.f32 %v3007, %v55
  %v3013 = vmul.f32 %v3006, %v59
  %3014 = vset.pattern.permute.xlu0 81
  %3015 = vperm.xlu0 %3014, %v19
  %v3016 = vpop.permute.xlu0 %3015
  %v3018 = vmul.f32 %v3010, %v3016
  %v3019 = vmul.f32 %v3011, %v3016
  %v3020 = vmul.f32 %v3012, %v3016
  %v3021 = vmul.f32 %v3013, %v3016
  %3022 = vrot.lane.b32.xlu0 %v2994, 16
  %v3023 = vpop.permute.xlu0 %3022
  %3024 = vrot.lane.b32.xlu0 %v2995, 16
  %v3025 = vpop.permute.xlu0 %3024
  %3026 = vrot.lane.b32.xlu0 %v2996, 16
  %v3027 = vpop.permute.xlu0 %3026
  %3028 = vrot.lane.b32.xlu0 %v2997, 16
  %v3029 = vpop.permute.xlu0 %3028
  %v3030 = vsel %vm185, %v3027, %v3029
  %v3031 = vsel %vm185, %v3025, %v3027
  %v3032 = vsel %vm185, %v3023, %v3025
  %v3033 = vsel %vm185, %v3029, %v3023
  %v3034 = vmul.f32 %v3033, %v196
  %v3035 = vmul.f32 %v3032, %v200
  %v3036 = vmul.f32 %v3031, %v204
  %v3037 = vmul.f32 %v3030, %v208
  %3038 = vset.pattern.permute.xlu0 82
  %3039 = vperm.xlu0 %3038, %v19
  %v3040 = vpop.permute.xlu0 %3039
  %v3042 = vmul.f32 %v3034, %v3040
  %v3043 = vmul.f32 %v3035, %v3040
  %v3044 = vmul.f32 %v3036, %v3040
  %v3045 = vmul.f32 %v3037, %v3040
  %v3046 = vadd.f32 %v3018, %v3042
  %v3047 = vadd.f32 %v3019, %v3043
  %v3048 = vadd.f32 %v3020, %v3044
  %v3049 = vadd.f32 %v3021, %v3045
  %3050 = vrot.lane.b32.xlu0 %v2994, 15
  %v3051 = vpop.permute.xlu0 %3050
  %3052 = vrot.lane.b32.xlu0 %v2995, 15
  %v3053 = vpop.permute.xlu0 %3052
  %3054 = vrot.lane.b32.xlu0 %v2996, 15
  %v3055 = vpop.permute.xlu0 %3054
  %3056 = vrot.lane.b32.xlu0 %v2997, 15
  %v3057 = vpop.permute.xlu0 %3056
  %v3058 = vsel %vm337, %v3055, %v3057
  %v3059 = vsel %vm337, %v3053, %v3055
  %v3060 = vsel %vm337, %v3051, %v3053
  %v3061 = vsel %vm337, %v3057, %v3051
  %v3062 = vmul.f32 %v3061, %v348
  %v3063 = vmul.f32 %v3060, %v352
  %v3064 = vmul.f32 %v3059, %v356
  %v3065 = vmul.f32 %v3058, %v360
  %3066 = vset.pattern.permute.xlu0 83
  %3067 = vperm.xlu0 %3066, %v19
  %v3068 = vpop.permute.xlu0 %3067
  %v3070 = vmul.f32 %v3062, %v3068
  %v3071 = vmul.f32 %v3063, %v3068
  %v3072 = vmul.f32 %v3064, %v3068
  %v3073 = vmul.f32 %v3065, %v3068
  %v3074 = vadd.f32 %v3046, %v3070
  %v3075 = vadd.f32 %v3047, %v3071
  %v3076 = vadd.f32 %v3048, %v3072
  %v3077 = vadd.f32 %v3049, %v3073
  %3078 = vrot.lane.b32.xlu0 %v2994, 1
  %v3079 = vpop.permute.xlu0 %3078
  %3080 = vrot.lane.b32.xlu0 %v2995, 1
  %v3081 = vpop.permute.xlu0 %3080
  %3082 = vrot.lane.b32.xlu0 %v2996, 1
  %v3083 = vpop.permute.xlu0 %3082
  %3084 = vrot.lane.b32.xlu0 %v2997, 1
  %v3085 = vpop.permute.xlu0 %3084
  %v3086 = vsel %vm489, %v3083, %v3085
  %v3087 = vsel %vm489, %v3081, %v3083
  %v3088 = vsel %vm489, %v3079, %v3081
  %v3089 = vsel %vm489, %v3085, %v3079
  %v3090 = vmul.f32 %v3089, %v500
  %v3091 = vmul.f32 %v3088, %v504
  %v3092 = vmul.f32 %v3087, %v508
  %v3093 = vmul.f32 %v3086, %v512
  %3094 = vset.pattern.permute.xlu0 84
  %3095 = vperm.xlu0 %3094, %v19
  %v3096 = vpop.permute.xlu0 %3095
  %v3098 = vmul.f32 %v3090, %v3096
  %v3099 = vmul.f32 %v3091, %v3096
  %v3100 = vmul.f32 %v3092, %v3096
  %v3101 = vmul.f32 %v3093, %v3096
  %v3102 = vadd.f32 %v3074, %v3098
  %v3103 = vadd.f32 %v3075, %v3099
  %v3104 = vadd.f32 %v3076, %v3100
  %v3105 = vadd.f32 %v3077, %v3101
  %3106 = vset.pattern.permute.xlu0 85
  %3107 = vperm.xlu0 %3106, %v19
  %v3108 = vpop.permute.xlu0 %3107
  %v3110 = vmul.f32 %v2994, %v3108
  %v3111 = vmul.f32 %v2995, %v3108
  %v3112 = vmul.f32 %v2996, %v3108
  %v3113 = vmul.f32 %v2997, %v3108
  %v3114 = vadd.f32 %v3102, %v3110
  %v3115 = vadd.f32 %v3103, %v3111
  %v3116 = vadd.f32 %v3104, %v3112
  %v3117 = vadd.f32 %v3105, %v3113
  %3118 = vrot.lane.b32.xlu0 %v2994, 127
  %v3119 = vpop.permute.xlu0 %3118
  %3120 = vrot.lane.b32.xlu0 %v2995, 127
  %v3121 = vpop.permute.xlu0 %3120
  %3122 = vrot.lane.b32.xlu0 %v2996, 127
  %v3123 = vpop.permute.xlu0 %3122
  %3124 = vrot.lane.b32.xlu0 %v2997, 127
  %v3125 = vpop.permute.xlu0 %3124
  %v3126 = vsel %vm833, %v3123, %v3125
  %v3127 = vsel %vm833, %v3121, %v3123
  %v3128 = vsel %vm833, %v3119, %v3121
  %v3129 = vsel %vm833, %v3125, %v3119
  %v3130 = vmul.f32 %v3128, %v844
  %v3131 = vmul.f32 %v3127, %v848
  %v3132 = vmul.f32 %v3126, %v852
  %v3133 = vmul.f32 %v3129, %v856
  %3134 = vset.pattern.permute.xlu0 86
  %3135 = vperm.xlu0 %3134, %v19
  %v3136 = vpop.permute.xlu0 %3135
  %v3138 = vmul.f32 %v3130, %v3136
  %v3139 = vmul.f32 %v3131, %v3136
  %v3140 = vmul.f32 %v3132, %v3136
  %v3141 = vmul.f32 %v3133, %v3136
  %v3142 = vadd.f32 %v3114, %v3138
  %v3143 = vadd.f32 %v3115, %v3139
  %v3144 = vadd.f32 %v3116, %v3140
  %v3145 = vadd.f32 %v3117, %v3141
  %3146 = vrot.lane.b32.xlu0 %v2994, 113
  %v3147 = vpop.permute.xlu0 %3146
  %3148 = vrot.lane.b32.xlu0 %v2995, 113
  %v3149 = vpop.permute.xlu0 %3148
  %3150 = vrot.lane.b32.xlu0 %v2996, 113
  %v3151 = vpop.permute.xlu0 %3150
  %3152 = vrot.lane.b32.xlu0 %v2997, 113
  %v3153 = vpop.permute.xlu0 %3152
  %v3154 = vsel %vm985, %v3151, %v3153
  %v3155 = vsel %vm985, %v3149, %v3151
  %v3156 = vsel %vm985, %v3147, %v3149
  %v3157 = vsel %vm985, %v3153, %v3147
  %v3158 = vmul.f32 %v3156, %v996
  %v3159 = vmul.f32 %v3155, %v1000
  %v3160 = vmul.f32 %v3154, %v1004
  %v3161 = vmul.f32 %v3157, %v1008
  %3162 = vset.pattern.permute.xlu0 87
  %3163 = vperm.xlu0 %3162, %v19
  %v3164 = vpop.permute.xlu0 %3163
  %v3166 = vmul.f32 %v3158, %v3164
  %v3167 = vmul.f32 %v3159, %v3164
  %v3168 = vmul.f32 %v3160, %v3164
  %v3169 = vmul.f32 %v3161, %v3164
  %v3170 = vadd.f32 %v3142, %v3166
  %v3171 = vadd.f32 %v3143, %v3167
  %v3172 = vadd.f32 %v3144, %v3168
  %v3173 = vadd.f32 %v3145, %v3169
  %3174 = vrot.lane.b32.xlu0 %v2994, 112
  %v3175 = vpop.permute.xlu0 %3174
  %3176 = vrot.lane.b32.xlu0 %v2995, 112
  %v3177 = vpop.permute.xlu0 %3176
  %3178 = vrot.lane.b32.xlu0 %v2996, 112
  %v3179 = vpop.permute.xlu0 %3178
  %3180 = vrot.lane.b32.xlu0 %v2997, 112
  %v3181 = vpop.permute.xlu0 %3180
  %v3182 = vsel %vm1137, %v3179, %v3181
  %v3183 = vsel %vm1137, %v3177, %v3179
  %v3184 = vsel %vm1137, %v3175, %v3177
  %v3185 = vsel %vm1137, %v3181, %v3175
  %v3186 = vmul.f32 %v3184, %v1148
  %v3187 = vmul.f32 %v3183, %v1152
  %v3188 = vmul.f32 %v3182, %v1156
  %v3189 = vmul.f32 %v3185, %v1160
  %3190 = vset.pattern.permute.xlu0 88
  %3191 = vperm.xlu0 %3190, %v19
  %v3192 = vpop.permute.xlu0 %3191
  %v3194 = vmul.f32 %v3186, %v3192
  %v3195 = vmul.f32 %v3187, %v3192
  %v3196 = vmul.f32 %v3188, %v3192
  %v3197 = vmul.f32 %v3189, %v3192
  %v3198 = vadd.f32 %v3170, %v3194
  %v3199 = vadd.f32 %v3171, %v3195
  %v3200 = vadd.f32 %v3172, %v3196
  %v3201 = vadd.f32 %v3173, %v3197
  %3202 = vrot.lane.b32.xlu0 %v2994, 111
  %v3203 = vpop.permute.xlu0 %3202
  %3204 = vrot.lane.b32.xlu0 %v2995, 111
  %v3205 = vpop.permute.xlu0 %3204
  %3206 = vrot.lane.b32.xlu0 %v2996, 111
  %v3207 = vpop.permute.xlu0 %3206
  %3208 = vrot.lane.b32.xlu0 %v2997, 111
  %v3209 = vpop.permute.xlu0 %3208
  %v3210 = vsel %vm1289, %v3207, %v3209
  %v3211 = vsel %vm1289, %v3205, %v3207
  %v3212 = vsel %vm1289, %v3203, %v3205
  %v3213 = vsel %vm1289, %v3209, %v3203
  %v3214 = vmul.f32 %v3212, %v1300
  %v3215 = vmul.f32 %v3211, %v1304
  %v3216 = vmul.f32 %v3210, %v1308
  %v3217 = vmul.f32 %v3213, %v1312
  %3218 = vset.pattern.permute.xlu0 89
  %3219 = vperm.xlu0 %3218, %v19
  %v3220 = vpop.permute.xlu0 %3219
  %v3222 = vmul.f32 %v3214, %v3220
  %v3223 = vmul.f32 %v3215, %v3220
  %v3224 = vmul.f32 %v3216, %v3220
  %v3225 = vmul.f32 %v3217, %v3220
  %v3226 = vadd.f32 %v3198, %v3222
  %v3227 = vadd.f32 %v3199, %v3223
  %v3228 = vadd.f32 %v3200, %v3224
  %v3229 = vadd.f32 %v3201, %v3225
  %3230 = vset.pattern.permute.xlu0 3
  %3231 = vperm.xlu0 %3230, %v20
  %v3232 = vpop.permute.xlu0 %3231
  %v3234 = vadd.f32 %v3226, %v3232
  %v3235 = vadd.f32 %v3227, %v3232
  %v3236 = vadd.f32 %v3228, %v3232
  %v3237 = vadd.f32 %v3229, %v3232
  %v3238 = vmax.f32 %v3234, 0.0
  %v3239 = vmax.f32 %v3235, 0.0
  %v3240 = vmax.f32 %v3236, 0.0
  %v3241 = vmax.f32 %v3237, 0.0
  %3242 = vset.pattern.permute.xlu0 6
  %3243 = vperm.xlu0 %3242, %v20
  %v3244 = vpop.permute.xlu0 %3243
  %v3246 = vmul.f32 %v2994, %v3244
  %v3247 = vmul.f32 %v2995, %v3244
  %v3248 = vmul.f32 %v2996, %v3244
  %v3249 = vmul.f32 %v2997, %v3244
  %3250 = vset.pattern.permute.xlu0 7
  %3251 = vperm.xlu0 %3250, %v20
  %v3252 = vpop.permute.xlu0 %3251
  %v3254 = vadd.f32 %v3246, %v3252
  %v3255 = vadd.f32 %v3247, %v3252
  %v3256 = vadd.f32 %v3248, %v3252
  %v3257 = vadd.f32 %v3249, %v3252
  %v3258 = vadd.f32 %v3254, %v17
  %v3259 = vadd.f32 %v3255, %v23
  %v3260 = vadd.f32 %v3256, %v18
  %v3261 = vadd.f32 %v3257, %v24
  %v3262 = vmax.f32 %v3258, 0.0
  %v3263 = vmax.f32 %v3259, 0.0
  %v3264 = vmax.f32 %v3260, 0.0
  %v3265 = vmax.f32 %v3261, 0.0
  %v3270 = vcombine.low %v3262, %v3263
  %v3271 = vcombine.low %v3264, %v3265
  %3274 = vst [vmem:[%s4] sm:$0x33] %v3270
  %3275 = vst [vmem:[%s4 + $0x8] sm:$0x33] %v3271
  %v3276 = vrot.slane %v3244, 2
  %v3278 = vmul.f32 %v3238, %v3276
  %v3279 = vmul.f32 %v3239, %v3276
  %v3280 = vmul.f32 %v3240, %v3276
  %v3281 = vmul.f32 %v3241, %v3276
  %v3282 = vrot.slane %v3252, 2
  %v3284 = vadd.f32 %v3278, %v3282
  %v3285 = vadd.f32 %v3279, %v3282
  %v3286 = vadd.f32 %v3280, %v3282
  %v3287 = vadd.f32 %v3281, %v3282
  %v3288 = vrot.slane %v17, 2
  %v3289 = vrot.slane %v23, 2
  %v3290 = vrot.slane %v18, 2
  %v3291 = vrot.slane %v24, 2
  %v3296 = vadd.f32 %v3284, %v3288
  %v3297 = vadd.f32 %v3285, %v3289
  %v3298 = vadd.f32 %v3286, %v3290
  %v3299 = vadd.f32 %v3287, %v3291
  %v3300 = vmax.f32 %v3296, 0.0
  %v3301 = vmax.f32 %v3297, 0.0
  %v3302 = vmax.f32 %v3298, 0.0
  %v3303 = vmax.f32 %v3299, 0.0
  %v3308 = vcombine.low %v3300, %v3301
  %v3309 = vcombine.low %v3302, %v3303
  %v3310 = vrot.slane %v3308, 6
  %v3311 = vrot.slane %v3309, 6
  %3314 = vst [vmem:[%s4] sm:$0xcc] %v3310
  %3315 = vst [vmem:[%s4 + $0x8] sm:$0xcc] %v3311
  // Predicated region
  $region18: #{_lambda_.1} parent=0 // pred_check
    _
  $region19: #{_lambda_.1} parent=0 // pred_check_branch
    %3317 = sbr.rel (0) target = $region21
  $region20: #{_lambda_.1} parent=0 // pred_region
    _
  $region21: #{_lambda_.1} parent=0 // pred_fallthru
    _
  // Predicated region
  $region22: #{_lambda_.1} parent=0 // pred_check
    _
  $region23: #{_lambda_.1} parent=0 // pred_check_branch
    %3319 = sbr.rel (0) target = $region25
  $region24: #{_lambda_.1} parent=0 // pred_region
    _
  $region25: #{_lambda_.1} parent=0 // pred_fallthru
    _

</llo_original>
